<compile_context>
chip_gen: v5e
topology: v5e:2x2
jax: 0.10.0
libtpu: 0.0.40
codegen_flags: <defaults>
</compile_context>

<pallas_src>
import functools
import math

import jax
import jax.numpy as jnp
import numpy as np
from jax.experimental import pallas as pl
from jax.experimental.pallas import tpu as pltpu


# ----------------------------------------------------------------------------------
# In-kernel helpers: head split / merge.
# For block_b == 1 this is a single XLU relayout per tensor; for block_b > 1 it is one
# relayout per (batch element, tensor) followed by a major-axis concat (cheap), while
# the matmuls / softmax stay fully batched over the fused block_b*H dim.
# ----------------------------------------------------------------------------------
def _split_heads(t2d, bt, rows, h, dk):
    """(bt*rows, h*dk) f32 -> (bt*h, rows, dk) bf16, head-major."""
    t3 = t2d.reshape(bt * rows, h, dk)
    if bt == 1:
        return pltpu.einshape("shd->hsd", t3).astype(jnp.bfloat16)
    parts = [pltpu.einshape("shd->hsd", t3[b * rows:(b + 1) * rows]) for b in range(bt)]
    return jnp.concatenate(parts, axis=0).astype(jnp.bfloat16)


def _merge_heads(t3, bt, rows, h, dk):
    """(bt*h, rows, dk) f32 -> (bt*rows, h*dk) f32."""
    if bt == 1:
        return pltpu.einshape("hsd->shd", t3).reshape(rows, h * dk)
    parts = [pltpu.einshape("hsd->shd", t3[b * h:(b + 1) * h]) for b in range(bt)]
    return jnp.concatenate(parts, axis=0).reshape(bt * rows, h * dk)


def _encoder_layer_kernel(mask_ref, x_ref,
                          wq_ref, bq_ref, wkv_ref, bkv_ref,
                          wo_ref, bo_ref,
                          g1_ref, be1_ref,
                          w1_ref, b1_ref, w2_ref, b2_ref,
                          g2_ref, be2_ref,
                          out_ref, attnw_ref,
                          k_sc, v_sc,
                          *, n_heads, d_k, block_b, q_tile, seq_len, d_model):
    H, dk, Bt, Tq, S, D = n_heads, d_k, block_b, q_tile, seq_len, d_model
    qi = pl.program_id(1)

    # --- K/V projection once per batch block (first query tile), kept in VMEM scratch.
    @pl.when(qi == 0)
    def _():
        x_all = x_ref[...].reshape(Bt * S, D).astype(jnp.bfloat16)
        kv = jnp.dot(x_all, wkv_ref[...],
                     preferred_element_type=jnp.float32) + bkv_ref[...]   # (Bt*S, 2D)
        k_sc[...] = _split_heads(kv[:, :D], Bt, S, H, dk)                 # (Bt*H, S, dk)
        v_sc[...] = _split_heads(kv[:, D:], Bt, S, H, dk)

    # --- Q projection for this query tile (1/sqrt(d_k) folded into WQ/bq on host). ---
    q_off = qi * Tq
    if Tq % 8 == 0:
        q_off = pl.multiple_of(q_off, 8)
    xq = x_ref[:, pl.ds(q_off, Tq), :]                                    # (Bt, Tq, D) f32
    xqf = xq.reshape(Bt * Tq, D)
    q = jnp.dot(xqf.astype(jnp.bfloat16), wq_ref[...],
                preferred_element_type=jnp.float32) + bq_ref[...]         # (Bt*Tq, D)
    qh = _split_heads(q, Bt, Tq, H, dk)                                   # (Bt*H, Tq, dk)

    # --- Scores, additive mask (after f32 accumulation), softmax over keys. ----------
    scores = jnp.einsum("bqd,bkd->bqk", qh, k_sc[...],
                        preferred_element_type=jnp.float32)               # (Bt*H, Tq, S)
    bias = mask_ref[...].astype(jnp.float32)                              # (Bt, Tq, S)
    scores = (scores.reshape(Bt, H, Tq, S) + bias[:, None, :, :]).reshape(Bt * H, Tq, S)

    m = jnp.max(scores, axis=-1, keepdims=True)
    e = jnp.exp(scores - m)
    denom = jnp.sum(e, axis=-1, keepdims=True)
    r = pl.reciprocal(denom, approx=True)
    r = r * (2.0 - denom * r)                  # one Newton step -> ~exact f32 reciprocal
    w = e * r                                  # (Bt*H, Tq, S)

    attnw_ref[...] = w.reshape(Bt, H, Tq, S).astype(attnw_ref.dtype)      # bf16 output

    ctx = jnp.einsum("bqk,bkd->bqd", w.astype(jnp.bfloat16), v_sc[...],
                     preferred_element_type=jnp.float32)                  # (Bt*H, Tq, dk)
    ctx = _merge_heads(ctx, Bt, Tq, H, dk)                                # (Bt*Tq, D)

    # --- MHA output projection + double residual (matches the PyTorch module). -------
    mha = jnp.dot(ctx.astype(jnp.bfloat16), wo_ref[...],
                  preferred_element_type=jnp.float32) + bo_ref[...]
    y = xqf + (mha + xqf)                      # == 2*x + ctx@WO + bo (intentional quirk)

    # --- LayerNorm1 (f32). ------------------------------------------------------------
    mu = jnp.mean(y, axis=-1, keepdims=True)
    var = jnp.mean((y - mu) ** 2, axis=-1, keepdims=True)
    y = (y - mu) * jax.lax.rsqrt(var + 1e-6) * g1_ref[...] + be1_ref[...]

    # --- Position-wise FFN (bf16 MXU, f32 accumulate, ReLU in f32). --------------------
    h1 = jnp.dot(y.astype(jnp.bfloat16), w1_ref[...],
                 preferred_element_type=jnp.float32) + b1_ref[...]
    h1 = jnp.maximum(h1, 0.0)
    ffn = jnp.dot(h1.astype(jnp.bfloat16), w2_ref[...],
                  preferred_element_type=jnp.float32) + b2_ref[...]

    # --- LayerNorm2 (f32). ------------------------------------------------------------
    z = y + ffn
    mu2 = jnp.mean(z, axis=-1, keepdims=True)
    var2 = jnp.mean((z - mu2) ** 2, axis=-1, keepdims=True)
    z = (z - mu2) * jax.lax.rsqrt(var2 + 1e-6) * g2_ref[...] + be2_ref[...]

    out_ref[...] = z.reshape(Bt, Tq, D).astype(out_ref.dtype)


# ----------------------------------------------------------------------------------
# Host-side helpers: generation detection, tiling choice, VMEM budget.
# ----------------------------------------------------------------------------------
def _tpu_defaults():
    kind = ""
    try:
        kind = jax.devices()[0].device_kind.lower()
    except Exception:
        pass
    mxu_rows = 128 if "v5" in kind else 256           # v5e MXU is 128x128; v6e/v7x 256-wide
    try:
        vmem_cap = int(pltpu.get_tpu_info().vmem_capacity_bytes)
    except Exception:
        vmem_cap = (64 << 20) if ("v7" in kind or "7x" in kind) else (128 << 20)
    return mxu_rows, vmem_cap


def _choose_q_tile(S, max_tq):
    if S <= max_tq:
        return S
    for t in range(max_tq - (max_tq % 8), 7, -8):     # largest multiple-of-8 divisor of S
        if S % t == 0:
            return t
    return S                                          # no clean divisor: keep full S


def _vmem_limit(block_b, tq, S, D, d_ff, H, dk, *, double_buffer_weights, cap_bytes):
    wbytes = (2 * (D * D + D * 2 * D + D * D + D * d_ff + d_ff * D)      # bf16 weights
              + 4 * (D + 2 * D + D + d_ff + D + 4 * D))                  # f32 biases + LN
    if double_buffer_weights:
        wbytes *= 2
    act = 2 * (block_b * tq * S * 2          # mask bias (bf16), double-buffered
               + block_b * S * D * 4         # x (f32)
               + block_b * tq * D * 4        # out (f32)
               + block_b * H * tq * S * 2)   # attention weights (bf16)
    scratch = 2 * block_b * H * S * dk * 2   # K/V scratch (bf16)
    interm = (block_b * S * 2 * D * 4        # kv f32 (first query tile)
              + 3 * block_b * H * tq * S * 4 # scores / exp / weights f32
              + block_b * tq * d_ff * 4      # FFN hidden
              + 6 * block_b * tq * D * 4)    # q / ctx / mha / y / z ...
    est = wbytes + act + scratch + interm + (8 << 20)
    cap = max(32 << 20, int(0.75 * cap_bytes))
    return int(min(max(est, 32 << 20), cap))


def encoder_layer(x, attn_mask, params, *, n_heads):
    B, S, D = x.shape
    d_k = D // n_heads
    d_ff = params["w1"].shape[1]

    mxu_rows, vmem_cap = _tpu_defaults()

    # Query tiling bounds resident intermediates to O(tq); batch blocking tops up the
    # MXU M dimension for short sequences while keeping >= 2 grid steps when possible
    # so both TensorCores (megacore / v7x) get work.
    tq = _choose_q_tile(S, max_tq=mxu_rows)
    nq = S // tq
    need_bb = max(1, -(-mxu_rows // tq))
    max_bb = B if B < 2 else max(1, B // 2)
    block_b = 1
    for d in range(1, B + 1):
        if B % d == 0 and d <= min(need_bb, max_bb):
            block_b = d
    grid = (B // block_b, nq)

    # Host-side constant transforms: fold 1/sqrt(d_k) into WQ/bq, fuse WK|WV, cast all
    # matmul weights to bf16 (halves weight DMA/VMEM; f32 accumulation in-kernel).
    scale = 1.0 / math.sqrt(d_k)
    wq = (params["wq"] * scale).astype(jnp.bfloat16)
    bq = (params["bq"] * scale).astype(jnp.float32)
    wkv = jnp.concatenate([params["wk"], params["wv"]], axis=1).astype(jnp.bfloat16)
    bkv = jnp.concatenate([params["bk"], params["bv"]], axis=1).astype(jnp.float32)
    wo = params["wo"].astype(jnp.bfloat16)
    w1 = params["w1"].astype(jnp.bfloat16)
    w2 = params["w2"].astype(jnp.bfloat16)

    # Precompute the additive mask bias in bf16 (one host op; quarters the mask DMA and
    # removes the per-tile select inside the kernel).
    mask_bias = jnp.where(attn_mask != 0, jnp.float32(-1e9), jnp.float32(0.0)
                          ).astype(jnp.bfloat16)

    kernel = functools.partial(
        _encoder_layer_kernel, n_heads=n_heads, d_k=d_k,
        block_b=block_b, q_tile=tq, seq_len=S, d_model=D)

    args = (mask_bias, x,
            wq, bq, wkv, bkv,
            wo, params["bo"],
            params["g1"], params["be1"],
            w1, params["b1"], w2, params["b2"],
            params["g2"], params["be2"])

    def run(single_buffer_weights):
        def wspec(shape):
            idx = lambda b, q, _n=len(shape): (0,) * _n
            if single_buffer_weights:
                # Weights are grid-invariant: single-buffer them to free VMEM.
                return pl.BlockSpec(shape, idx, pipeline_mode=pl.Buffered(1))
            return pl.BlockSpec(shape, idx)

        in_specs = [
            pl.BlockSpec((block_b, tq, S), lambda b, q: (b, q, 0)),   # additive mask bias
            pl.BlockSpec((block_b, S, D), lambda b, q: (b, 0, 0)),    # x (full sequence)
            wspec((D, D)), wspec((1, D)),                             # WQ (scaled), bq
            wspec((D, 2 * D)), wspec((1, 2 * D)),                     # WKV, bkv
            wspec((D, D)), wspec((1, D)),                             # WO, bo
            wspec((1, D)), wspec((1, D)),                             # ln1 gamma, beta
            wspec((D, d_ff)), wspec((1, d_ff)),                       # W1, b1
            wspec((d_ff, D)), wspec((1, D)),                          # W2, b2
            wspec((1, D)), wspec((1, D)),                             # ln2 gamma, beta
        ]
        out_specs = (
            pl.BlockSpec((block_b, tq, D), lambda b, q: (b, q, 0)),
            pl.BlockSpec((block_b, n_heads, tq, S), lambda b, q: (b, 0, q, 0)),
        )
        out_shape = (
            jax.ShapeDtypeStruct((B, S, D), jnp.float32),
            jax.ShapeDtypeStruct((B, n_heads, S, S), jnp.bfloat16),
        )
        vmem_limit = _vmem_limit(block_b, tq, S, D, d_ff, n_heads, d_k,
                                 double_buffer_weights=not single_buffer_weights,
                                 cap_bytes=vmem_cap)
        fn = pl.pallas_call(
            kernel,
            grid=grid,
            in_specs=in_specs,
            out_specs=out_specs,
            out_shape=out_shape,
            scratch_shapes=[
                pltpu.VMEM((block_b * n_heads, S, d_k), jnp.bfloat16),   # K (head-major)
                pltpu.VMEM((block_b * n_heads, S, d_k), jnp.bfloat16),   # V (head-major)
            ],
            compiler_params=pltpu.CompilerParams(
                dimension_semantics=("parallel", "arbitrary"),
                vmem_limit_bytes=vmem_limit),
        )
        return fn(*args)

    try:
        return run(single_buffer_weights=True)
    except Exception:
        # Fallback for toolchains where pipeline_mode=pl.Buffered(1) is not accepted.
        return run(single_buffer_weights=False)


def _reference(x, attn_mask, params, *, n_heads):
    """Pure-JAX f32 reference mirroring the PyTorch forward (eval mode)."""
    B, S, D = x.shape
    d_k = D // n_heads
    q = x @ params["wq"] + params["bq"]
    k = x @ params["wk"] + params["bk"]
    v = x @ params["wv"] + params["bv"]

    def split(t):  # (B, S, D) -> (B, H, S, d_k)
        return t.reshape(B, S, n_heads, d_k).transpose(0, 2, 1, 3)

    qh, kh, vh = split(q), split(k), split(v)
    scores = jnp.einsum("bhqd,bhkd->bhqk", qh, kh) / np.sqrt(d_k)
    scores = jnp.where(attn_mask[:, None, :, :] != 0, -1e9, scores)
    w = jax.nn.softmax(scores, axis=-1)
    ctx = jnp.einsum("bhqk,bhkd->bhqd", w, vh).transpose(0, 2, 1, 3).reshape(B, S, D)
    mha = ctx @ params["wo"] + params["bo"] + x      # MHA adds its own residual

    def ln(t, g, b):
        mu = jnp.mean(t, axis=-1, keepdims=True)
        var = jnp.mean((t - mu) ** 2, axis=-1, keepdims=True)
        return (t - mu) * jax.lax.rsqrt(var + 1e-6) * g + b

    y = ln(x + mha, params["g1"], params["be1"])
    ffn = jnp.maximum(y @ params["w1"] + params["b1"], 0.0) @ params["w2"] + params["b2"]
    z = ln(y + ffn, params["g2"], params["be2"])
    return z, w


if __name__ == "__main__":
    # Small shapes consistent with the module (exercises block_b > 1 and a 2-step grid).
    B, S, D, H, FF = 4, 8, 32, 4, 64

    key = jax.random.PRNGKey(0)
    keys = jax.random.split(key, 16)

    def init(k, shape, scale=0.1):
        return (scale * jax.random.normal(k, shape)).astype(jnp.float32)

    params = {
        "wq": init(keys[0], (D, D)), "bq": init(keys[1], (1, D)),
        "wk": init(keys[2], (D, D)), "bk": init(keys[3], (1, D)),
        "wv": init(keys[4], (D, D)), "bv": init(keys[5], (1, D)),
        "wo": init(keys[6], (D, D)), "bo": init(keys[7], (1, D)),
        "g1": jnp.ones((1, D), jnp.float32), "be1": jnp.zeros((1, D), jnp.float32),
        "w1": init(keys[8], (D, FF)), "b1": init(keys[9], (1, FF)),
        "w2": init(keys[10], (FF, D)), "b2": init(keys[11], (1, D)),
        "g2": jnp.ones((1, D), jnp.float32), "be2": jnp.zeros((1, D), jnp.float32),
    }

    x = init(keys[12], (B, S, D), scale=1.0)
    # Padding-style mask: per-batch valid lengths; masked key positions set to 1.
    lens = jnp.array([8, 6, 7, 5], dtype=jnp.int32)
    key_idx = jnp.arange(S, dtype=jnp.int32)
    attn_mask = (key_idx[None, None, :] >= lens[:, None, None]).astype(jnp.int32)
    attn_mask = jnp.broadcast_to(attn_mask, (B, S, S))

    out, attn_w = encoder_layer(x, attn_mask, params, n_heads=H)
    jax.block_until_ready(out)
    jax.block_until_ready(attn_w)

    ref_out, ref_w = _reference(x, attn_mask, params, n_heads=H)
    # bf16 MXU operands (f32 accumulation) and bf16 attention-weight storage -> loosened
    # tolerances accordingly.
    np.testing.assert_allclose(np.asarray(out), np.asarray(ref_out), atol=3e-2, rtol=3e-2)
    np.testing.assert_allclose(np.asarray(attn_w.astype(jnp.float32)), np.asarray(ref_w),
                               atol=2e-2, rtol=2e-2)

    print("KERNEL_OK")
</pallas_src>

<mosaic_0001>
module attributes {stable_mosaic.version = 11 : i64} {
  func.func @_encoder_layer_kernel(%arg0: i32, %arg1: i32, %arg2: memref<2x8x8xbf16, #tpu.memory_space<vmem>>, %arg3: memref<2x8x32xf32, #tpu.memory_space<vmem>>, %arg4: memref<32x32xbf16, #tpu.memory_space<vmem>>, %arg5: memref<1x32xf32, #tpu.memory_space<vmem>>, %arg6: memref<32x64xbf16, #tpu.memory_space<vmem>>, %arg7: memref<1x64xf32, #tpu.memory_space<vmem>>, %arg8: memref<32x32xbf16, #tpu.memory_space<vmem>>, %arg9: memref<1x32xf32, #tpu.memory_space<vmem>>, %arg10: memref<1x32xf32, #tpu.memory_space<vmem>>, %arg11: memref<1x32xf32, #tpu.memory_space<vmem>>, %arg12: memref<32x64xbf16, #tpu.memory_space<vmem>>, %arg13: memref<1x64xf32, #tpu.memory_space<vmem>>, %arg14: memref<64x32xbf16, #tpu.memory_space<vmem>>, %arg15: memref<1x32xf32, #tpu.memory_space<vmem>>, %arg16: memref<1x32xf32, #tpu.memory_space<vmem>>, %arg17: memref<1x32xf32, #tpu.memory_space<vmem>>, %arg18: memref<2x8x32xf32, #tpu.memory_space<vmem>>, %arg19: memref<2x4x8x8xbf16, #tpu.memory_space<vmem>>, %arg20: memref<8x8x8xbf16, #tpu.memory_space<vmem>>, %arg21: memref<8x8x8xbf16, #tpu.memory_space<vmem>>) attributes {dimension_semantics = [#tpu.dimension_semantics<parallel>, #tpu.dimension_semantics<arbitrary>], iteration_bounds = array<i64: 2, 1>, scalar_prefetch = 0 : i64, scratch_operands = 2 : i64, tpu.core_type = #tpu.core_type<tc>, window_params = [{transform_indices = @transform_0, window_bounds = array<i64: 2, 8, 8>}, {transform_indices = @transform_1, window_bounds = array<i64: 2, 8, 32>}, {pipeline_mode = #tpu.pipeline_mode<synchronous>, transform_indices = @transform_2, window_bounds = array<i64: 32, 32>}, {pipeline_mode = #tpu.pipeline_mode<synchronous>, transform_indices = @transform_3, window_bounds = array<i64: 1, 32>}, {pipeline_mode = #tpu.pipeline_mode<synchronous>, transform_indices = @transform_4, window_bounds = array<i64: 32, 64>}, {pipeline_mode = #tpu.pipeline_mode<synchronous>, transform_indices = @transform_5, window_bounds = array<i64: 1, 64>}, {pipeline_mode = #tpu.pipeline_mode<synchronous>, transform_indices = @transform_6, window_bounds = array<i64: 32, 32>}, {pipeline_mode = #tpu.pipeline_mode<synchronous>, transform_indices = @transform_7, window_bounds = array<i64: 1, 32>}, {pipeline_mode = #tpu.pipeline_mode<synchronous>, transform_indices = @transform_8, window_bounds = array<i64: 1, 32>}, {pipeline_mode = #tpu.pipeline_mode<synchronous>, transform_indices = @transform_9, window_bounds = array<i64: 1, 32>}, {pipeline_mode = #tpu.pipeline_mode<synchronous>, transform_indices = @transform_10, window_bounds = array<i64: 32, 64>}, {pipeline_mode = #tpu.pipeline_mode<synchronous>, transform_indices = @transform_11, window_bounds = array<i64: 1, 64>}, {pipeline_mode = #tpu.pipeline_mode<synchronous>, transform_indices = @transform_12, window_bounds = array<i64: 64, 32>}, {pipeline_mode = #tpu.pipeline_mode<synchronous>, transform_indices = @transform_13, window_bounds = array<i64: 1, 32>}, {pipeline_mode = #tpu.pipeline_mode<synchronous>, transform_indices = @transform_14, window_bounds = array<i64: 1, 32>}, {pipeline_mode = #tpu.pipeline_mode<synchronous>, transform_indices = @transform_15, window_bounds = array<i64: 1, 32>}, {transform_indices = @transform_16, window_bounds = array<i64: 2, 8, 32>}, {transform_indices = @transform_17, window_bounds = array<i64: 2, 4, 8, 8>}]} {
    %c0_i32 = arith.constant 0 : i32
    %0 = arith.cmpi eq, %arg1, %c0_i32 : i32
    %1 = arith.extui %0 : i1 to i32
    %c0_i32_0 = arith.constant 0 : i32
    %2 = arith.cmpi ne, %1, %c0_i32_0 : i32
    scf.if %2 {
      %c0_61 = arith.constant 0 : index
      %c0_62 = arith.constant 0 : index
      %c0_63 = arith.constant 0 : index
      %129 = vector.load %arg3[%c0_61, %c0_62, %c0_63] : memref<2x8x32xf32, #tpu.memory_space<vmem>>, vector<2x8x32xf32>
      %130 = vector.shape_cast %129 : vector<2x8x32xf32> to vector<16x32xf32>
      %131 = arith.truncf %130 : vector<16x32xf32> to vector<16x32xbf16>
      %c0_64 = arith.constant 0 : index
      %c0_65 = arith.constant 0 : index
      %132 = vector.load %arg6[%c0_64, %c0_65] : memref<32x64xbf16, #tpu.memory_space<vmem>>, vector<32x64xbf16>
      %cst_66 = arith.constant dense<0.000000e+00> : vector<16x64xf32>
      %133 = tpu.matmul %131, %132, %cst_66 {dimension_numbers = #tpu.dot_dimension_numbers<[1], [0], [0], [1], [0, 0, 1, 1], [], []>} : vector<16x32xbf16>, vector<32x64xbf16>, vector<16x64xf32> -> vector<16x64xf32>
      %c0_67 = arith.constant 0 : index
      %c0_68 = arith.constant 0 : index
      %134 = vector.load %arg7[%c0_67, %c0_68] : memref<1x64xf32, #tpu.memory_space<vmem>>, vector<1x64xf32>
      %135 = vector.broadcast %134 : vector<1x64xf32> to vector<16x64xf32>
      %136 = arith.addf %133, %135 : vector<16x64xf32>
      %137 = vector.extract_strided_slice %136 {offsets = [0, 0], sizes = [16, 32], strides = [1, 1]} : vector<16x64xf32> to vector<16x32xf32>
      %138 = vector.shape_cast %137 : vector<16x32xf32> to vector<16x4x8xf32>
      %139 = vector.extract_strided_slice %138 {offsets = [0, 0, 0], sizes = [8, 4, 8], strides = [1, 1, 1]} : vector<16x4x8xf32> to vector<8x4x8xf32>
      %140 = tpu.transpose %139, [1, 0, 2] : vector<8x4x8xf32> -> vector<4x8x8xf32>
      %141 = vector.extract_strided_slice %138 {offsets = [8, 0, 0], sizes = [8, 4, 8], strides = [1, 1, 1]} : vector<16x4x8xf32> to vector<8x4x8xf32>
      %142 = tpu.transpose %141, [1, 0, 2] : vector<8x4x8xf32> -> vector<4x8x8xf32>
      %143 = tpu.concatenate %140, %142 in 0 : vector<4x8x8xf32>, vector<4x8x8xf32> -> vector<8x8x8xf32>
      %144 = arith.truncf %143 : vector<8x8x8xf32> to vector<8x8x8xbf16>
      %c0_69 = arith.constant 0 : index
      %c0_70 = arith.constant 0 : index
      %c0_71 = arith.constant 0 : index
      %145 = vector.load %arg20[%c0_69, %c0_70, %c0_71] : memref<8x8x8xbf16, #tpu.memory_space<vmem>>, vector<8x8x8xbf16>
      tpu.vector_store %arg20[%c0_69, %c0_70, %c0_71], %144 {strides = array<i32>} : memref<8x8x8xbf16, #tpu.memory_space<vmem>>, vector<8x8x8xbf16>,
      %146 = vector.extract_strided_slice %136 {offsets = [0, 32], sizes = [16, 32], strides = [1, 1]} : vector<16x64xf32> to vector<16x32xf32>
      %147 = vector.shape_cast %146 : vector<16x32xf32> to vector<16x4x8xf32>
      %148 = vector.extract_strided_slice %147 {offsets = [0, 0, 0], sizes = [8, 4, 8], strides = [1, 1, 1]} : vector<16x4x8xf32> to vector<8x4x8xf32>
      %149 = tpu.transpose %148, [1, 0, 2] : vector<8x4x8xf32> -> vector<4x8x8xf32>
      %150 = vector.extract_strided_slice %147 {offsets = [8, 0, 0], sizes = [8, 4, 8], strides = [1, 1, 1]} : vector<16x4x8xf32> to vector<8x4x8xf32>
      %151 = tpu.transpose %150, [1, 0, 2] : vector<8x4x8xf32> -> vector<4x8x8xf32>
      %152 = tpu.concatenate %149, %151 in 0 : vector<4x8x8xf32>, vector<4x8x8xf32> -> vector<8x8x8xf32>
      %153 = arith.truncf %152 : vector<8x8x8xf32> to vector<8x8x8xbf16>
      %c0_72 = arith.constant 0 : index
      %c0_73 = arith.constant 0 : index
      %c0_74 = arith.constant 0 : index
      %154 = vector.load %arg21[%c0_72, %c0_73, %c0_74] : memref<8x8x8xbf16, #tpu.memory_space<vmem>>, vector<8x8x8xbf16>
      tpu.vector_store %arg21[%c0_72, %c0_73, %c0_74], %153 {strides = array<i32>} : memref<8x8x8xbf16, #tpu.memory_space<vmem>>, vector<8x8x8xbf16>,
    } else {
    }
    %c8_i32 = arith.constant 8 : i32
    %3 = arith.muli %arg1, %c8_i32 : i32
    %4 = tpu.assume_multiple %3, 8 : i32
    %c0 = arith.constant 0 : index
    %5 = arith.index_cast %4 : i32 to index
    %c0_1 = arith.constant 0 : index
    %6 = vector.load %arg3[%c0, %5, %c0_1] : memref<2x8x32xf32, #tpu.memory_space<vmem>>, vector<2x8x32xf32>
    %7 = vector.shape_cast %6 : vector<2x8x32xf32> to vector<16x32xf32>
    %8 = arith.truncf %7 : vector<16x32xf32> to vector<16x32xbf16>
    %c0_2 = arith.constant 0 : index
    %c0_3 = arith.constant 0 : index
    %9 = vector.load %arg4[%c0_2, %c0_3] : memref<32x32xbf16, #tpu.memory_space<vmem>>, vector<32x32xbf16>
    %cst = arith.constant dense<0.000000e+00> : vector<16x32xf32>
    %10 = tpu.matmul %8, %9, %cst {dimension_numbers = #tpu.dot_dimension_numbers<[1], [0], [0], [1], [0, 0, 1, 1], [], []>} : vector<16x32xbf16>, vector<32x32xbf16>, vector<16x32xf32> -> vector<16x32xf32>
    %c0_4 = arith.constant 0 : index
    %c0_5 = arith.constant 0 : index
    %11 = vector.load %arg5[%c0_4, %c0_5] : memref<1x32xf32, #tpu.memory_space<vmem>>, vector<1x32xf32>
    %12 = vector.broadcast %11 : vector<1x32xf32> to vector<16x32xf32>
    %13 = arith.addf %10, %12 : vector<16x32xf32>
    %14 = vector.shape_cast %13 : vector<16x32xf32> to vector<16x4x8xf32>
    %15 = vector.extract_strided_slice %14 {offsets = [0, 0, 0], sizes = [8, 4, 8], strides = [1, 1, 1]} : vector<16x4x8xf32> to vector<8x4x8xf32>
    %16 = tpu.transpose %15, [1, 0, 2] : vector<8x4x8xf32> -> vector<4x8x8xf32>
    %17 = vector.extract_strided_slice %14 {offsets = [8, 0, 0], sizes = [8, 4, 8], strides = [1, 1, 1]} : vector<16x4x8xf32> to vector<8x4x8xf32>
    %18 = tpu.transpose %17, [1, 0, 2] : vector<8x4x8xf32> -> vector<4x8x8xf32>
    %19 = tpu.concatenate %16, %18 in 0 : vector<4x8x8xf32>, vector<4x8x8xf32> -> vector<8x8x8xf32>
    %20 = arith.truncf %19 : vector<8x8x8xf32> to vector<8x8x8xbf16>
    %c0_6 = arith.constant 0 : index
    %c0_7 = arith.constant 0 : index
    %c0_8 = arith.constant 0 : index
    %21 = vector.load %arg20[%c0_6, %c0_7, %c0_8] : memref<8x8x8xbf16, #tpu.memory_space<vmem>>, vector<8x8x8xbf16>
    "tpu.trace_start"() <{level = 10 : i32, message = "bqd,bkd->bqk"}> : () -> ()
    %cst_9 = arith.constant dense<0.000000e+00> : vector<8x8x8xf32>
    %22 = tpu.matmul %20, %21, %cst_9 {dimension_numbers = #tpu.dot_dimension_numbers<[2], [2], [1], [1], [0, 0, 0, 1, 1, 1], [0], [0]>} : vector<8x8x8xbf16>, vector<8x8x8xbf16>, vector<8x8x8xf32> -> vector<8x8x8xf32>
    "tpu.trace_stop"() : () -> ()
    %c0_10 = arith.constant 0 : index
    %c0_11 = arith.constant 0 : index
    %c0_12 = arith.constant 0 : index
    %23 = vector.load %arg2[%c0_10, %c0_11, %c0_12] : memref<2x8x8xbf16, #tpu.memory_space<vmem>>, vector<2x8x8xbf16>
    %24 = arith.extf %23 : vector<2x8x8xbf16> to vector<2x8x8xf32>
    %25 = vector.shape_cast %22 : vector<8x8x8xf32> to vector<2x4x8x8xf32>
    %26 = vector.shape_cast %24 : vector<2x8x8xf32> to vector<2x1x8x8xf32>
    %27 = vector.broadcast %26 : vector<2x1x8x8xf32> to vector<2x4x8x8xf32>
    %28 = arith.addf %25, %27 : vector<2x4x8x8xf32>
    %29 = vector.shape_cast %28 : vector<2x4x8x8xf32> to vector<8x8x8xf32>
    %cst_13 = arith.constant dense<0xFF800000> : vector<8x8xf32>
    %30 = vector.multi_reduction <maximumf>, %29, %cst_13 [2] : vector<8x8x8xf32> to vector<8x8xf32>
    %31 = vector.shape_cast %30 : vector<8x8xf32> to vector<8x8x1xf32>
    %32 = vector.broadcast %31 : vector<8x8x1xf32> to vector<8x8x8xf32>
    %33 = arith.subf %29, %32 : vector<8x8x8xf32>
    %34 = math.exp %33 : vector<8x8x8xf32>
    %cst_14 = arith.constant dense<0.000000e+00> : vector<8x8xf32>
    %35 = vector.multi_reduction <add>, %34, %cst_14 [2] : vector<8x8x8xf32> to vector<8x8xf32>
    %36 = vector.shape_cast %35 : vector<8x8xf32> to vector<8x8x1xf32>
    %37 = tpu.reciprocal %36 {approx = true} : vector<8x8x1xf32> -> vector<8x8x1xf32>
    %38 = arith.mulf %36, %37 : vector<8x8x1xf32>
    %cst_15 = arith.constant 2.000000e+00 : f32
    %39 = vector.broadcast %cst_15 : f32 to vector<8x8x1xf32>
    %40 = arith.subf %39, %38 : vector<8x8x1xf32>
    %41 = arith.mulf %37, %40 : vector<8x8x1xf32>
    %42 = vector.broadcast %41 : vector<8x8x1xf32> to vector<8x8x8xf32>
    %43 = arith.mulf %34, %42 : vector<8x8x8xf32>
    %44 = vector.shape_cast %43 : vector<8x8x8xf32> to vector<2x4x8x8xf32>
    %45 = arith.truncf %44 : vector<2x4x8x8xf32> to vector<2x4x8x8xbf16>
    %c0_16 = arith.constant 0 : index
    %c0_17 = arith.constant 0 : index
    %c0_18 = arith.constant 0 : index
    %c0_19 = arith.constant 0 : index
    %46 = vector.load %arg19[%c0_16, %c0_17, %c0_18, %c0_19] : memref<2x4x8x8xbf16, #tpu.memory_space<vmem>>, vector<2x4x8x8xbf16>
    tpu.vector_store %arg19[%c0_16, %c0_17, %c0_18, %c0_19], %45 {strides = array<i32>} : memref<2x4x8x8xbf16, #tpu.memory_space<vmem>>, vector<2x4x8x8xbf16>,
    %47 = arith.truncf %43 : vector<8x8x8xf32> to vector<8x8x8xbf16>
    %c0_20 = arith.constant 0 : index
    %c0_21 = arith.constant 0 : index
    %c0_22 = arith.constant 0 : index
    %48 = vector.load %arg21[%c0_20, %c0_21, %c0_22] : memref<8x8x8xbf16, #tpu.memory_space<vmem>>, vector<8x8x8xbf16>
    "tpu.trace_start"() <{level = 10 : i32, message = "bqk,bkd->bqd"}> : () -> ()
    %cst_23 = arith.constant dense<0.000000e+00> : vector<8x8x8xf32>
    %49 = tpu.matmul %47, %48, %cst_23 {dimension_numbers = #tpu.dot_dimension_numbers<[2], [1], [1], [2], [0, 0, 0, 1, 1, 2], [0], [0]>} : vector<8x8x8xbf16>, vector<8x8x8xbf16>, vector<8x8x8xf32> -> vector<8x8x8xf32>
    "tpu.trace_stop"() : () -> ()
    %50 = vector.extract_strided_slice %49 {offsets = [0, 0, 0], sizes = [4, 8, 8], strides = [1, 1, 1]} : vector<8x8x8xf32> to vector<4x8x8xf32>
    %51 = tpu.transpose %50, [1, 0, 2] : vector<4x8x8xf32> -> vector<8x4x8xf32>
    %52 = vector.extract_strided_slice %49 {offsets = [4, 0, 0], sizes = [4, 8, 8], strides = [1, 1, 1]} : vector<8x8x8xf32> to vector<4x8x8xf32>
    %53 = tpu.transpose %52, [1, 0, 2] : vector<4x8x8xf32> -> vector<8x4x8xf32>
    %54 = tpu.concatenate %51, %53 in 0 : vector<8x4x8xf32>, vector<8x4x8xf32> -> vector<16x4x8xf32>
    %55 = vector.shape_cast %54 : vector<16x4x8xf32> to vector<16x32xf32>
    %56 = arith.truncf %55 : vector<16x32xf32> to vector<16x32xbf16>
    %c0_24 = arith.constant 0 : index
    %c0_25 = arith.constant 0 : index
    %57 = vector.load %arg8[%c0_24, %c0_25] : memref<32x32xbf16, #tpu.memory_space<vmem>>, vector<32x32xbf16>
    %cst_26 = arith.constant dense<0.000000e+00> : vector<16x32xf32>
    %58 = tpu.matmul %56, %57, %cst_26 {dimension_numbers = #tpu.dot_dimension_numbers<[1], [0], [0], [1], [0, 0, 1, 1], [], []>} : vector<16x32xbf16>, vector<32x32xbf16>, vector<16x32xf32> -> vector<16x32xf32>
    %c0_27 = arith.constant 0 : index
    %c0_28 = arith.constant 0 : index
    %59 = vector.load %arg9[%c0_27, %c0_28] : memref<1x32xf32, #tpu.memory_space<vmem>>, vector<1x32xf32>
    %60 = vector.broadcast %59 : vector<1x32xf32> to vector<16x32xf32>
    %61 = arith.addf %58, %60 : vector<16x32xf32>
    %62 = arith.addf %61, %7 : vector<16x32xf32>
    %63 = arith.addf %7, %62 : vector<16x32xf32>
    %cst_29 = arith.constant dense<0.000000e+00> : vector<16xf32>
    %64 = vector.multi_reduction <add>, %63, %cst_29 [1] : vector<16x32xf32> to vector<16xf32>
    %65 = vector.shape_cast %64 : vector<16xf32> to vector<16x1xf32>
    %cst_30 = arith.constant 3.200000e+01 : f32
    %66 = vector.broadcast %cst_30 : f32 to vector<16x1xf32>
    %67 = arith.divf %65, %66 : vector<16x1xf32>
    %68 = vector.broadcast %67 : vector<16x1xf32> to vector<16x32xf32>
    %69 = arith.subf %63, %68 : vector<16x32xf32>
    %70 = arith.mulf %69, %69 : vector<16x32xf32>
    %cst_31 = arith.constant dense<0.000000e+00> : vector<16xf32>
    %71 = vector.multi_reduction <add>, %70, %cst_31 [1] : vector<16x32xf32> to vector<16xf32>
    %72 = vector.shape_cast %71 : vector<16xf32> to vector<16x1xf32>
    %cst_32 = arith.constant 3.200000e+01 : f32
    %73 = vector.broadcast %cst_32 : f32 to vector<16x1xf32>
    %74 = arith.divf %72, %73 : vector<16x1xf32>
    %75 = vector.broadcast %67 : vector<16x1xf32> to vector<16x32xf32>
    %76 = arith.subf %63, %75 : vector<16x32xf32>
    %cst_33 = arith.constant 9.99999997E-7 : f32
    %77 = vector.broadcast %cst_33 : f32 to vector<16x1xf32>
    %78 = arith.addf %74, %77 : vector<16x1xf32>
    %79 = math.rsqrt %78 : vector<16x1xf32>
    %80 = vector.broadcast %79 : vector<16x1xf32> to vector<16x32xf32>
    %81 = arith.mulf %76, %80 : vector<16x32xf32>
    %c0_34 = arith.constant 0 : index
    %c0_35 = arith.constant 0 : index
    %82 = vector.load %arg10[%c0_34, %c0_35] : memref<1x32xf32, #tpu.memory_space<vmem>>, vector<1x32xf32>
    %83 = vector.broadcast %82 : vector<1x32xf32> to vector<16x32xf32>
    %84 = arith.mulf %81, %83 : vector<16x32xf32>
    %c0_36 = arith.constant 0 : index
    %c0_37 = arith.constant 0 : index
    %85 = vector.load %arg11[%c0_36, %c0_37] : memref<1x32xf32, #tpu.memory_space<vmem>>, vector<1x32xf32>
    %86 = vector.broadcast %85 : vector<1x32xf32> to vector<16x32xf32>
    %87 = arith.addf %84, %86 : vector<16x32xf32>
    %88 = arith.truncf %87 : vector<16x32xf32> to vector<16x32xbf16>
    %c0_38 = arith.constant 0 : index
    %c0_39 = arith.constant 0 : index
    %89 = vector.load %arg12[%c0_38, %c0_39] : memref<32x64xbf16, #tpu.memory_space<vmem>>, vector<32x64xbf16>
    %cst_40 = arith.constant dense<0.000000e+00> : vector<16x64xf32>
    %90 = tpu.matmul %88, %89, %cst_40 {dimension_numbers = #tpu.dot_dimension_numbers<[1], [0], [0], [1], [0, 0, 1, 1], [], []>} : vector<16x32xbf16>, vector<32x64xbf16>, vector<16x64xf32> -> vector<16x64xf32>
    %c0_41 = arith.constant 0 : index
    %c0_42 = arith.constant 0 : index
    %91 = vector.load %arg13[%c0_41, %c0_42] : memref<1x64xf32, #tpu.memory_space<vmem>>, vector<1x64xf32>
    %92 = vector.broadcast %91 : vector<1x64xf32> to vector<16x64xf32>
    %93 = arith.addf %90, %92 : vector<16x64xf32>
    %cst_43 = arith.constant 0.000000e+00 : f32
    %94 = vector.broadcast %cst_43 : f32 to vector<16x64xf32>
    %95 = arith.maximumf %93, %94 : vector<16x64xf32>
    %96 = arith.truncf %95 : vector<16x64xf32> to vector<16x64xbf16>
    %c0_44 = arith.constant 0 : index
    %c0_45 = arith.constant 0 : index
    %97 = vector.load %arg14[%c0_44, %c0_45] : memref<64x32xbf16, #tpu.memory_space<vmem>>, vector<64x32xbf16>
    %cst_46 = arith.constant dense<0.000000e+00> : vector<16x32xf32>
    %98 = tpu.matmul %96, %97, %cst_46 {dimension_numbers = #tpu.dot_dimension_numbers<[1], [0], [0], [1], [0, 0, 1, 1], [], []>} : vector<16x64xbf16>, vector<64x32xbf16>, vector<16x32xf32> -> vector<16x32xf32>
    %c0_47 = arith.constant 0 : index
    %c0_48 = arith.constant 0 : index
    %99 = vector.load %arg15[%c0_47, %c0_48] : memref<1x32xf32, #tpu.memory_space<vmem>>, vector<1x32xf32>
    %100 = vector.broadcast %99 : vector<1x32xf32> to vector<16x32xf32>
    %101 = arith.addf %98, %100 : vector<16x32xf32>
    %102 = arith.addf %87, %101 : vector<16x32xf32>
    %cst_49 = arith.constant dense<0.000000e+00> : vector<16xf32>
    %103 = vector.multi_reduction <add>, %102, %cst_49 [1] : vector<16x32xf32> to vector<16xf32>
    %104 = vector.shape_cast %103 : vector<16xf32> to vector<16x1xf32>
    %cst_50 = arith.constant 3.200000e+01 : f32
    %105 = vector.broadcast %cst_50 : f32 to vector<16x1xf32>
    %106 = arith.divf %104, %105 : vector<16x1xf32>
    %107 = vector.broadcast %106 : vector<16x1xf32> to vector<16x32xf32>
    %108 = arith.subf %102, %107 : vector<16x32xf32>
    %109 = arith.mulf %108, %108 : vector<16x32xf32>
    %cst_51 = arith.constant dense<0.000000e+00> : vector<16xf32>
    %110 = vector.multi_reduction <add>, %109, %cst_51 [1] : vector<16x32xf32> to vector<16xf32>
    %111 = vector.shape_cast %110 : vector<16xf32> to vector<16x1xf32>
    %cst_52 = arith.constant 3.200000e+01 : f32
    %112 = vector.broadcast %cst_52 : f32 to vector<16x1xf32>
    %113 = arith.divf %111, %112 : vector<16x1xf32>
    %114 = vector.broadcast %106 : vector<16x1xf32> to vector<16x32xf32>
    %115 = arith.subf %102, %114 : vector<16x32xf32>
    %cst_53 = arith.constant 9.99999997E-7 : f32
    %116 = vector.broadcast %cst_53 : f32 to vector<16x1xf32>
    %117 = arith.addf %113, %116 : vector<16x1xf32>
    %118 = math.rsqrt %117 : vector<16x1xf32>
    %119 = vector.broadcast %118 : vector<16x1xf32> to vector<16x32xf32>
    %120 = arith.mulf %115, %119 : vector<16x32xf32>
    %c0_54 = arith.constant 0 : index
    %c0_55 = arith.constant 0 : index
    %121 = vector.load %arg16[%c0_54, %c0_55] : memref<1x32xf32, #tpu.memory_space<vmem>>, vector<1x32xf32>
    %122 = vector.broadcast %121 : vector<1x32xf32> to vector<16x32xf32>
    %123 = arith.mulf %120, %122 : vector<16x32xf32>
    %c0_56 = arith.constant 0 : index
    %c0_57 = arith.constant 0 : index
    %124 = vector.load %arg17[%c0_56, %c0_57] : memref<1x32xf32, #tpu.memory_space<vmem>>, vector<1x32xf32>
    %125 = vector.broadcast %124 : vector<1x32xf32> to vector<16x32xf32>
    %126 = arith.addf %123, %125 : vector<16x32xf32>
    %127 = vector.shape_cast %126 : vector<16x32xf32> to vector<2x8x32xf32>
    %c0_58 = arith.constant 0 : index
    %c0_59 = arith.constant 0 : index
    %c0_60 = arith.constant 0 : index
    %128 = vector.load %arg18[%c0_58, %c0_59, %c0_60] : memref<2x8x32xf32, #tpu.memory_space<vmem>>, vector<2x8x32xf32>
    tpu.vector_store %arg18[%c0_58, %c0_59, %c0_60], %127 {strides = array<i32>} : memref<2x8x32xf32, #tpu.memory_space<vmem>>, vector<2x8x32xf32>,
    return
  }
  func.func @transform_0(%arg0: i32, %arg1: i32) -> (i32, i32, i32) {
    %c0_i32 = arith.constant 0 : i32
    %c0_i32_0 = arith.constant 0 : i32
    return %arg0, %arg1, %c0_i32 : i32, i32, i32
  }
  func.func @transform_1(%arg0: i32, %arg1: i32) -> (i32, i32, i32) {
    %c0_i32 = arith.constant 0 : i32
    %c0_i32_0 = arith.constant 0 : i32
    %c0_i32_1 = arith.constant 0 : i32
    return %arg0, %c0_i32, %c0_i32_0 : i32, i32, i32
  }
  func.func @transform_2(%arg0: i32, %arg1: i32) -> (i32, i32) {
    %c0_i32 = arith.constant 0 : i32
    %c0_i32_0 = arith.constant 0 : i32
    %c0_i32_1 = arith.constant 0 : i32
    return %c0_i32, %c0_i32_0 : i32, i32
  }
  func.func @transform_3(%arg0: i32, %arg1: i32) -> (i32, i32) {
    %c0_i32 = arith.constant 0 : i32
    %c0_i32_0 = arith.constant 0 : i32
    %c0_i32_1 = arith.constant 0 : i32
    return %c0_i32, %c0_i32_0 : i32, i32
  }
  func.func @transform_4(%arg0: i32, %arg1: i32) -> (i32, i32) {
    %c0_i32 = arith.constant 0 : i32
    %c0_i32_0 = arith.constant 0 : i32
    %c0_i32_1 = arith.constant 0 : i32
    return %c0_i32, %c0_i32_0 : i32, i32
  }
  func.func @transform_5(%arg0: i32, %arg1: i32) -> (i32, i32) {
    %c0_i32 = arith.constant 0 : i32
    %c0_i32_0 = arith.constant 0 : i32
    %c0_i32_1 = arith.constant 0 : i32
    return %c0_i32, %c0_i32_0 : i32, i32
  }
  func.func @transform_6(%arg0: i32, %arg1: i32) -> (i32, i32) {
    %c0_i32 = arith.constant 0 : i32
    %c0_i32_0 = arith.constant 0 : i32
    %c0_i32_1 = arith.constant 0 : i32
    return %c0_i32, %c0_i32_0 : i32, i32
  }
  func.func @transform_7(%arg0: i32, %arg1: i32) -> (i32, i32) {
    %c0_i32 = arith.constant 0 : i32
    %c0_i32_0 = arith.constant 0 : i32
    %c0_i32_1 = arith.constant 0 : i32
    return %c0_i32, %c0_i32_0 : i32, i32
  }
  func.func @transform_8(%arg0: i32, %arg1: i32) -> (i32, i32) {
    %c0_i32 = arith.constant 0 : i32
    %c0_i32_0 = arith.constant 0 : i32
    %c0_i32_1 = arith.constant 0 : i32
    return %c0_i32, %c0_i32_0 : i32, i32
  }
  func.func @transform_9(%arg0: i32, %arg1: i32) -> (i32, i32) {
    %c0_i32 = arith.constant 0 : i32
    %c0_i32_0 = arith.constant 0 : i32
    %c0_i32_1 = arith.constant 0 : i32
    return %c0_i32, %c0_i32_0 : i32, i32
  }
  func.func @transform_10(%arg0: i32, %arg1: i32) -> (i32, i32) {
    %c0_i32 = arith.constant 0 : i32
    %c0_i32_0 = arith.constant 0 : i32
    %c0_i32_1 = arith.constant 0 : i32
    return %c0_i32, %c0_i32_0 : i32, i32
  }
  func.func @transform_11(%arg0: i32, %arg1: i32) -> (i32, i32) {
    %c0_i32 = arith.constant 0 : i32
    %c0_i32_0 = arith.constant 0 : i32
    %c0_i32_1 = arith.constant 0 : i32
    return %c0_i32, %c0_i32_0 : i32, i32
  }
  func.func @transform_12(%arg0: i32, %arg1: i32) -> (i32, i32) {
    %c0_i32 = arith.constant 0 : i32
    %c0_i32_0 = arith.constant 0 : i32
    %c0_i32_1 = arith.constant 0 : i32
    return %c0_i32, %c0_i32_0 : i32, i32
  }
  func.func @transform_13(%arg0: i32, %arg1: i32) -> (i32, i32) {
    %c0_i32 = arith.constant 0 : i32
    %c0_i32_0 = arith.constant 0 : i32
    %c0_i32_1 = arith.constant 0 : i32
    return %c0_i32, %c0_i32_0 : i32, i32
  }
  func.func @transform_14(%arg0: i32, %arg1: i32) -> (i32, i32) {
    %c0_i32 = arith.constant 0 : i32
    %c0_i32_0 = arith.constant 0 : i32
    %c0_i32_1 = arith.constant 0 : i32
    return %c0_i32, %c0_i32_0 : i32, i32
  }
  func.func @transform_15(%arg0: i32, %arg1: i32) -> (i32, i32) {
    %c0_i32 = arith.constant 0 : i32
    %c0_i32_0 = arith.constant 0 : i32
    %c0_i32_1 = arith.constant 0 : i32
    return %c0_i32, %c0_i32_0 : i32, i32
  }
  func.func @transform_16(%arg0: i32, %arg1: i32) -> (i32, i32, i32) {
    %c0_i32 = arith.constant 0 : i32
    %c0_i32_0 = arith.constant 0 : i32
    return %arg0, %arg1, %c0_i32 : i32, i32, i32
  }
  func.func @transform_17(%arg0: i32, %arg1: i32) -> (i32, i32, i32, i32) {
    %c0_i32 = arith.constant 0 : i32
    %c0_i32_0 = arith.constant 0 : i32
    %c0_i32_1 = arith.constant 0 : i32
    return %arg0, %c0_i32, %arg1, %c0_i32_0 : i32, i32, i32, i32
  }
}

module attributes {stable_mosaic.version = 11 : i64} {
  func.func @_encoder_layer_kernel(%arg0: i32, %arg1: i32, %arg2: memref<2x8x8xbf16, #tpu.memory_space<vmem>>, %arg3: memref<2x8x32xf32, #tpu.memory_space<vmem>>, %arg4: memref<32x32xbf16, #tpu.memory_space<vmem>>, %arg5: memref<1x32xf32, #tpu.memory_space<vmem>>, %arg6: memref<32x64xbf16, #tpu.memory_space<vmem>>, %arg7: memref<1x64xf32, #tpu.memory_space<vmem>>, %arg8: memref<32x32xbf16, #tpu.memory_space<vmem>>, %arg9: memref<1x32xf32, #tpu.memory_space<vmem>>, %arg10: memref<1x32xf32, #tpu.memory_space<vmem>>, %arg11: memref<1x32xf32, #tpu.memory_space<vmem>>, %arg12: memref<32x64xbf16, #tpu.memory_space<vmem>>, %arg13: memref<1x64xf32, #tpu.memory_space<vmem>>, %arg14: memref<64x32xbf16, #tpu.memory_space<vmem>>, %arg15: memref<1x32xf32, #tpu.memory_space<vmem>>, %arg16: memref<1x32xf32, #tpu.memory_space<vmem>>, %arg17: memref<1x32xf32, #tpu.memory_space<vmem>>, %arg18: memref<2x8x32xf32, #tpu.memory_space<vmem>>, %arg19: memref<2x4x8x8xbf16, #tpu.memory_space<vmem>>, %arg20: memref<8x8x8xbf16, #tpu.memory_space<vmem>>, %arg21: memref<8x8x8xbf16, #tpu.memory_space<vmem>>) attributes {dimension_semantics = [#tpu.dimension_semantics<parallel>, #tpu.dimension_semantics<arbitrary>], iteration_bounds = array<i64: 2, 1>, scalar_prefetch = 0 : i64, scratch_operands = 2 : i64, tpu.core_type = #tpu.core_type<tc>, window_params = [{transform_indices = @transform_0, window_bounds = array<i64: 2, 8, 8>}, {transform_indices = @transform_1, window_bounds = array<i64: 2, 8, 32>}, {pipeline_mode = #tpu.pipeline_mode<synchronous>, transform_indices = @transform_2, window_bounds = array<i64: 32, 32>}, {pipeline_mode = #tpu.pipeline_mode<synchronous>, transform_indices = @transform_3, window_bounds = array<i64: 1, 32>}, {pipeline_mode = #tpu.pipeline_mode<synchronous>, transform_indices = @transform_4, window_bounds = array<i64: 32, 64>}, {pipeline_mode = #tpu.pipeline_mode<synchronous>, transform_indices = @transform_5, window_bounds = array<i64: 1, 64>}, {pipeline_mode = #tpu.pipeline_mode<synchronous>, transform_indices = @transform_6, window_bounds = array<i64: 32, 32>}, {pipeline_mode = #tpu.pipeline_mode<synchronous>, transform_indices = @transform_7, window_bounds = array<i64: 1, 32>}, {pipeline_mode = #tpu.pipeline_mode<synchronous>, transform_indices = @transform_8, window_bounds = array<i64: 1, 32>}, {pipeline_mode = #tpu.pipeline_mode<synchronous>, transform_indices = @transform_9, window_bounds = array<i64: 1, 32>}, {pipeline_mode = #tpu.pipeline_mode<synchronous>, transform_indices = @transform_10, window_bounds = array<i64: 32, 64>}, {pipeline_mode = #tpu.pipeline_mode<synchronous>, transform_indices = @transform_11, window_bounds = array<i64: 1, 64>}, {pipeline_mode = #tpu.pipeline_mode<synchronous>, transform_indices = @transform_12, window_bounds = array<i64: 64, 32>}, {pipeline_mode = #tpu.pipeline_mode<synchronous>, transform_indices = @transform_13, window_bounds = array<i64: 1, 32>}, {pipeline_mode = #tpu.pipeline_mode<synchronous>, transform_indices = @transform_14, window_bounds = array<i64: 1, 32>}, {pipeline_mode = #tpu.pipeline_mode<synchronous>, transform_indices = @transform_15, window_bounds = array<i64: 1, 32>}, {transform_indices = @transform_16, window_bounds = array<i64: 2, 8, 32>}, {transform_indices = @transform_17, window_bounds = array<i64: 2, 4, 8, 8>}]} {
    %c0_i32 = arith.constant 0 : i32
    %0 = arith.cmpi eq, %arg1, %c0_i32 : i32
    %1 = arith.extui %0 : i1 to i32
    %c0_i32_0 = arith.constant 0 : i32
    %2 = arith.cmpi ne, %1, %c0_i32_0 : i32
    scf.if %2 {
      %c0_61 = arith.constant 0 : index
      %c0_62 = arith.constant 0 : index
      %c0_63 = arith.constant 0 : index
      %129 = vector.load %arg3[%c0_61, %c0_62, %c0_63] : memref<2x8x32xf32, #tpu.memory_space<vmem>>, vector<2x8x32xf32>
      %130 = vector.shape_cast %129 : vector<2x8x32xf32> to vector<16x32xf32>
      %131 = arith.truncf %130 : vector<16x32xf32> to vector<16x32xbf16>
      %c0_64 = arith.constant 0 : index
      %c0_65 = arith.constant 0 : index
      %132 = vector.load %arg6[%c0_64, %c0_65] : memref<32x64xbf16, #tpu.memory_space<vmem>>, vector<32x64xbf16>
      %cst_66 = arith.constant dense<0.000000e+00> : vector<16x64xf32>
      %133 = tpu.matmul %131, %132, %cst_66 {dimension_numbers = #tpu.dot_dimension_numbers<[1], [0], [0], [1], [0, 0, 1, 1], [], []>} : vector<16x32xbf16>, vector<32x64xbf16>, vector<16x64xf32> -> vector<16x64xf32>
      %c0_67 = arith.constant 0 : index
      %c0_68 = arith.constant 0 : index
      %134 = vector.load %arg7[%c0_67, %c0_68] : memref<1x64xf32, #tpu.memory_space<vmem>>, vector<1x64xf32>
      %135 = vector.broadcast %134 : vector<1x64xf32> to vector<16x64xf32>
      %136 = arith.addf %133, %135 : vector<16x64xf32>
      %137 = vector.extract_strided_slice %136 {offsets = [0, 0], sizes = [16, 32], strides = [1, 1]} : vector<16x64xf32> to vector<16x32xf32>
      %138 = vector.shape_cast %137 : vector<16x32xf32> to vector<16x4x8xf32>
      %139 = vector.extract_strided_slice %138 {offsets = [0, 0, 0], sizes = [8, 4, 8], strides = [1, 1, 1]} : vector<16x4x8xf32> to vector<8x4x8xf32>
      %140 = tpu.transpose %139, [1, 0, 2] : vector<8x4x8xf32> -> vector<4x8x8xf32>
      %141 = vector.extract_strided_slice %138 {offsets = [8, 0, 0], sizes = [8, 4, 8], strides = [1, 1, 1]} : vector<16x4x8xf32> to vector<8x4x8xf32>
      %142 = tpu.transpose %141, [1, 0, 2] : vector<8x4x8xf32> -> vector<4x8x8xf32>
      %143 = tpu.concatenate %140, %142 in 0 : vector<4x8x8xf32>, vector<4x8x8xf32> -> vector<8x8x8xf32>
      %144 = arith.truncf %143 : vector<8x8x8xf32> to vector<8x8x8xbf16>
      %c0_69 = arith.constant 0 : index
      %c0_70 = arith.constant 0 : index
      %c0_71 = arith.constant 0 : index
      %145 = vector.load %arg20[%c0_69, %c0_70, %c0_71] : memref<8x8x8xbf16, #tpu.memory_space<vmem>>, vector<8x8x8xbf16>
      tpu.vector_store %arg20[%c0_69, %c0_70, %c0_71], %144 {strides = array<i32>} : memref<8x8x8xbf16, #tpu.memory_space<vmem>>, vector<8x8x8xbf16>,
      %146 = vector.extract_strided_slice %136 {offsets = [0, 32], sizes = [16, 32], strides = [1, 1]} : vector<16x64xf32> to vector<16x32xf32>
      %147 = vector.shape_cast %146 : vector<16x32xf32> to vector<16x4x8xf32>
      %148 = vector.extract_strided_slice %147 {offsets = [0, 0, 0], sizes = [8, 4, 8], strides = [1, 1, 1]} : vector<16x4x8xf32> to vector<8x4x8xf32>
      %149 = tpu.transpose %148, [1, 0, 2] : vector<8x4x8xf32> -> vector<4x8x8xf32>
      %150 = vector.extract_strided_slice %147 {offsets = [8, 0, 0], sizes = [8, 4, 8], strides = [1, 1, 1]} : vector<16x4x8xf32> to vector<8x4x8xf32>
      %151 = tpu.transpose %150, [1, 0, 2] : vector<8x4x8xf32> -> vector<4x8x8xf32>
      %152 = tpu.concatenate %149, %151 in 0 : vector<4x8x8xf32>, vector<4x8x8xf32> -> vector<8x8x8xf32>
      %153 = arith.truncf %152 : vector<8x8x8xf32> to vector<8x8x8xbf16>
      %c0_72 = arith.constant 0 : index
      %c0_73 = arith.constant 0 : index
      %c0_74 = arith.constant 0 : index
      %154 = vector.load %arg21[%c0_72, %c0_73, %c0_74] : memref<8x8x8xbf16, #tpu.memory_space<vmem>>, vector<8x8x8xbf16>
      tpu.vector_store %arg21[%c0_72, %c0_73, %c0_74], %153 {strides = array<i32>} : memref<8x8x8xbf16, #tpu.memory_space<vmem>>, vector<8x8x8xbf16>,
    } else {
    }
    %c8_i32 = arith.constant 8 : i32
    %3 = arith.muli %arg1, %c8_i32 : i32
    %4 = tpu.assume_multiple %3, 8 : i32
    %c0 = arith.constant 0 : index
    %5 = arith.index_cast %4 : i32 to index
    %c0_1 = arith.constant 0 : index
    %6 = vector.load %arg3[%c0, %5, %c0_1] : memref<2x8x32xf32, #tpu.memory_space<vmem>>, vector<2x8x32xf32>
    %7 = vector.shape_cast %6 : vector<2x8x32xf32> to vector<16x32xf32>
    %8 = arith.truncf %7 : vector<16x32xf32> to vector<16x32xbf16>
    %c0_2 = arith.constant 0 : index
    %c0_3 = arith.constant 0 : index
    %9 = vector.load %arg4[%c0_2, %c0_3] : memref<32x32xbf16, #tpu.memory_space<vmem>>, vector<32x32xbf16>
    %cst = arith.constant dense<0.000000e+00> : vector<16x32xf32>
    %10 = tpu.matmul %8, %9, %cst {dimension_numbers = #tpu.dot_dimension_numbers<[1], [0], [0], [1], [0, 0, 1, 1], [], []>} : vector<16x32xbf16>, vector<32x32xbf16>, vector<16x32xf32> -> vector<16x32xf32>
    %c0_4 = arith.constant 0 : index
    %c0_5 = arith.constant 0 : index
    %11 = vector.load %arg5[%c0_4, %c0_5] : memref<1x32xf32, #tpu.memory_space<vmem>>, vector<1x32xf32>
    %12 = vector.broadcast %11 : vector<1x32xf32> to vector<16x32xf32>
    %13 = arith.addf %10, %12 : vector<16x32xf32>
    %14 = vector.shape_cast %13 : vector<16x32xf32> to vector<16x4x8xf32>
    %15 = vector.extract_strided_slice %14 {offsets = [0, 0, 0], sizes = [8, 4, 8], strides = [1, 1, 1]} : vector<16x4x8xf32> to vector<8x4x8xf32>
    %16 = tpu.transpose %15, [1, 0, 2] : vector<8x4x8xf32> -> vector<4x8x8xf32>
    %17 = vector.extract_strided_slice %14 {offsets = [8, 0, 0], sizes = [8, 4, 8], strides = [1, 1, 1]} : vector<16x4x8xf32> to vector<8x4x8xf32>
    %18 = tpu.transpose %17, [1, 0, 2] : vector<8x4x8xf32> -> vector<4x8x8xf32>
    %19 = tpu.concatenate %16, %18 in 0 : vector<4x8x8xf32>, vector<4x8x8xf32> -> vector<8x8x8xf32>
    %20 = arith.truncf %19 : vector<8x8x8xf32> to vector<8x8x8xbf16>
    %c0_6 = arith.constant 0 : index
    %c0_7 = arith.constant 0 : index
    %c0_8 = arith.constant 0 : index
    %21 = vector.load %arg20[%c0_6, %c0_7, %c0_8] : memref<8x8x8xbf16, #tpu.memory_space<vmem>>, vector<8x8x8xbf16>
    "tpu.trace_start"() <{level = 10 : i32, message = "bqd,bkd->bqk"}> : () -> ()
    %cst_9 = arith.constant dense<0.000000e+00> : vector<8x8x8xf32>
    %22 = tpu.matmul %20, %21, %cst_9 {dimension_numbers = #tpu.dot_dimension_numbers<[2], [2], [1], [1], [0, 0, 0, 1, 1, 1], [0], [0]>} : vector<8x8x8xbf16>, vector<8x8x8xbf16>, vector<8x8x8xf32> -> vector<8x8x8xf32>
    "tpu.trace_stop"() : () -> ()
    %c0_10 = arith.constant 0 : index
    %c0_11 = arith.constant 0 : index
    %c0_12 = arith.constant 0 : index
    %23 = vector.load %arg2[%c0_10, %c0_11, %c0_12] : memref<2x8x8xbf16, #tpu.memory_space<vmem>>, vector<2x8x8xbf16>
    %24 = arith.extf %23 : vector<2x8x8xbf16> to vector<2x8x8xf32>
    %25 = vector.shape_cast %22 : vector<8x8x8xf32> to vector<2x4x8x8xf32>
    %26 = vector.shape_cast %24 : vector<2x8x8xf32> to vector<2x1x8x8xf32>
    %27 = vector.broadcast %26 : vector<2x1x8x8xf32> to vector<2x4x8x8xf32>
    %28 = arith.addf %25, %27 : vector<2x4x8x8xf32>
    %29 = vector.shape_cast %28 : vector<2x4x8x8xf32> to vector<8x8x8xf32>
    %cst_13 = arith.constant dense<0xFF800000> : vector<8x8xf32>
    %30 = vector.multi_reduction <maximumf>, %29, %cst_13 [2] : vector<8x8x8xf32> to vector<8x8xf32>
    %31 = vector.shape_cast %30 : vector<8x8xf32> to vector<8x8x1xf32>
    %32 = vector.broadcast %31 : vector<8x8x1xf32> to vector<8x8x8xf32>
    %33 = arith.subf %29, %32 : vector<8x8x8xf32>
    %34 = math.exp %33 : vector<8x8x8xf32>
    %cst_14 = arith.constant dense<0.000000e+00> : vector<8x8xf32>
    %35 = vector.multi_reduction <add>, %34, %cst_14 [2] : vector<8x8x8xf32> to vector<8x8xf32>
    %36 = vector.shape_cast %35 : vector<8x8xf32> to vector<8x8x1xf32>
    %37 = tpu.reciprocal %36 {approx = true} : vector<8x8x1xf32> -> vector<8x8x1xf32>
    %38 = arith.mulf %36, %37 : vector<8x8x1xf32>
    %cst_15 = arith.constant 2.000000e+00 : f32
    %39 = vector.broadcast %cst_15 : f32 to vector<8x8x1xf32>
    %40 = arith.subf %39, %38 : vector<8x8x1xf32>
    %41 = arith.mulf %37, %40 : vector<8x8x1xf32>
    %42 = vector.broadcast %41 : vector<8x8x1xf32> to vector<8x8x8xf32>
    %43 = arith.mulf %34, %42 : vector<8x8x8xf32>
    %44 = vector.shape_cast %43 : vector<8x8x8xf32> to vector<2x4x8x8xf32>
    %45 = arith.truncf %44 : vector<2x4x8x8xf32> to vector<2x4x8x8xbf16>
    %c0_16 = arith.constant 0 : index
    %c0_17 = arith.constant 0 : index
    %c0_18 = arith.constant 0 : index
    %c0_19 = arith.constant 0 : index
    %46 = vector.load %arg19[%c0_16, %c0_17, %c0_18, %c0_19] : memref<2x4x8x8xbf16, #tpu.memory_space<vmem>>, vector<2x4x8x8xbf16>
    tpu.vector_store %arg19[%c0_16, %c0_17, %c0_18, %c0_19], %45 {strides = array<i32>} : memref<2x4x8x8xbf16, #tpu.memory_space<vmem>>, vector<2x4x8x8xbf16>,
    %47 = arith.truncf %43 : vector<8x8x8xf32> to vector<8x8x8xbf16>
    %c0_20 = arith.constant 0 : index
    %c0_21 = arith.constant 0 : index
    %c0_22 = arith.constant 0 : index
    %48 = vector.load %arg21[%c0_20, %c0_21, %c0_22] : memref<8x8x8xbf16, #tpu.memory_space<vmem>>, vector<8x8x8xbf16>
    "tpu.trace_start"() <{level = 10 : i32, message = "bqk,bkd->bqd"}> : () -> ()
    %cst_23 = arith.constant dense<0.000000e+00> : vector<8x8x8xf32>
    %49 = tpu.matmul %47, %48, %cst_23 {dimension_numbers = #tpu.dot_dimension_numbers<[2], [1], [1], [2], [0, 0, 0, 1, 1, 2], [0], [0]>} : vector<8x8x8xbf16>, vector<8x8x8xbf16>, vector<8x8x8xf32> -> vector<8x8x8xf32>
    "tpu.trace_stop"() : () -> ()
    %50 = vector.extract_strided_slice %49 {offsets = [0, 0, 0], sizes = [4, 8, 8], strides = [1, 1, 1]} : vector<8x8x8xf32> to vector<4x8x8xf32>
    %51 = tpu.transpose %50, [1, 0, 2] : vector<4x8x8xf32> -> vector<8x4x8xf32>
    %52 = vector.extract_strided_slice %49 {offsets = [4, 0, 0], sizes = [4, 8, 8], strides = [1, 1, 1]} : vector<8x8x8xf32> to vector<4x8x8xf32>
    %53 = tpu.transpose %52, [1, 0, 2] : vector<4x8x8xf32> -> vector<8x4x8xf32>
    %54 = tpu.concatenate %51, %53 in 0 : vector<8x4x8xf32>, vector<8x4x8xf32> -> vector<16x4x8xf32>
    %55 = vector.shape_cast %54 : vector<16x4x8xf32> to vector<16x32xf32>
    %56 = arith.truncf %55 : vector<16x32xf32> to vector<16x32xbf16>
    %c0_24 = arith.constant 0 : index
    %c0_25 = arith.constant 0 : index
    %57 = vector.load %arg8[%c0_24, %c0_25] : memref<32x32xbf16, #tpu.memory_space<vmem>>, vector<32x32xbf16>
    %cst_26 = arith.constant dense<0.000000e+00> : vector<16x32xf32>
    %58 = tpu.matmul %56, %57, %cst_26 {dimension_numbers = #tpu.dot_dimension_numbers<[1], [0], [0], [1], [0, 0, 1, 1], [], []>} : vector<16x32xbf16>, vector<32x32xbf16>, vector<16x32xf32> -> vector<16x32xf32>
    %c0_27 = arith.constant 0 : index
    %c0_28 = arith.constant 0 : index
    %59 = vector.load %arg9[%c0_27, %c0_28] : memref<1x32xf32, #tpu.memory_space<vmem>>, vector<1x32xf32>
    %60 = vector.broadcast %59 : vector<1x32xf32> to vector<16x32xf32>
    %61 = arith.addf %58, %60 : vector<16x32xf32>
    %62 = arith.addf %61, %7 : vector<16x32xf32>
    %63 = arith.addf %7, %62 : vector<16x32xf32>
    %cst_29 = arith.constant dense<0.000000e+00> : vector<16xf32>
    %64 = vector.multi_reduction <add>, %63, %cst_29 [1] : vector<16x32xf32> to vector<16xf32>
    %65 = vector.shape_cast %64 : vector<16xf32> to vector<16x1xf32>
    %cst_30 = arith.constant 3.200000e+01 : f32
    %66 = vector.broadcast %cst_30 : f32 to vector<16x1xf32>
    %67 = arith.divf %65, %66 : vector<16x1xf32>
    %68 = vector.broadcast %67 : vector<16x1xf32> to vector<16x32xf32>
    %69 = arith.subf %63, %68 : vector<16x32xf32>
    %70 = arith.mulf %69, %69 : vector<16x32xf32>
    %cst_31 = arith.constant dense<0.000000e+00> : vector<16xf32>
    %71 = vector.multi_reduction <add>, %70, %cst_31 [1] : vector<16x32xf32> to vector<16xf32>
    %72 = vector.shape_cast %71 : vector<16xf32> to vector<16x1xf32>
    %cst_32 = arith.constant 3.200000e+01 : f32
    %73 = vector.broadcast %cst_32 : f32 to vector<16x1xf32>
    %74 = arith.divf %72, %73 : vector<16x1xf32>
    %75 = vector.broadcast %67 : vector<16x1xf32> to vector<16x32xf32>
    %76 = arith.subf %63, %75 : vector<16x32xf32>
    %cst_33 = arith.constant 9.99999997E-7 : f32
    %77 = vector.broadcast %cst_33 : f32 to vector<16x1xf32>
    %78 = arith.addf %74, %77 : vector<16x1xf32>
    %79 = math.rsqrt %78 : vector<16x1xf32>
    %80 = vector.broadcast %79 : vector<16x1xf32> to vector<16x32xf32>
    %81 = arith.mulf %76, %80 : vector<16x32xf32>
    %c0_34 = arith.constant 0 : index
    %c0_35 = arith.constant 0 : index
    %82 = vector.load %arg10[%c0_34, %c0_35] : memref<1x32xf32, #tpu.memory_space<vmem>>, vector<1x32xf32>
    %83 = vector.broadcast %82 : vector<1x32xf32> to vector<16x32xf32>
    %84 = arith.mulf %81, %83 : vector<16x32xf32>
    %c0_36 = arith.constant 0 : index
    %c0_37 = arith.constant 0 : index
    %85 = vector.load %arg11[%c0_36, %c0_37] : memref<1x32xf32, #tpu.memory_space<vmem>>, vector<1x32xf32>
    %86 = vector.broadcast %85 : vector<1x32xf32> to vector<16x32xf32>
    %87 = arith.addf %84, %86 : vector<16x32xf32>
    %88 = arith.truncf %87 : vector<16x32xf32> to vector<16x32xbf16>
    %c0_38 = arith.constant 0 : index
    %c0_39 = arith.constant 0 : index
    %89 = vector.load %arg12[%c0_38, %c0_39] : memref<32x64xbf16, #tpu.memory_space<vmem>>, vector<32x64xbf16>
    %cst_40 = arith.constant dense<0.000000e+00> : vector<16x64xf32>
    %90 = tpu.matmul %88, %89, %cst_40 {dimension_numbers = #tpu.dot_dimension_numbers<[1], [0], [0], [1], [0, 0, 1, 1], [], []>} : vector<16x32xbf16>, vector<32x64xbf16>, vector<16x64xf32> -> vector<16x64xf32>
    %c0_41 = arith.constant 0 : index
    %c0_42 = arith.constant 0 : index
    %91 = vector.load %arg13[%c0_41, %c0_42] : memref<1x64xf32, #tpu.memory_space<vmem>>, vector<1x64xf32>
    %92 = vector.broadcast %91 : vector<1x64xf32> to vector<16x64xf32>
    %93 = arith.addf %90, %92 : vector<16x64xf32>
    %cst_43 = arith.constant 0.000000e+00 : f32
    %94 = vector.broadcast %cst_43 : f32 to vector<16x64xf32>
    %95 = arith.maximumf %93, %94 : vector<16x64xf32>
    %96 = arith.truncf %95 : vector<16x64xf32> to vector<16x64xbf16>
    %c0_44 = arith.constant 0 : index
    %c0_45 = arith.constant 0 : index
    %97 = vector.load %arg14[%c0_44, %c0_45] : memref<64x32xbf16, #tpu.memory_space<vmem>>, vector<64x32xbf16>
    %cst_46 = arith.constant dense<0.000000e+00> : vector<16x32xf32>
    %98 = tpu.matmul %96, %97, %cst_46 {dimension_numbers = #tpu.dot_dimension_numbers<[1], [0], [0], [1], [0, 0, 1, 1], [], []>} : vector<16x64xbf16>, vector<64x32xbf16>, vector<16x32xf32> -> vector<16x32xf32>
    %c0_47 = arith.constant 0 : index
    %c0_48 = arith.constant 0 : index
    %99 = vector.load %arg15[%c0_47, %c0_48] : memref<1x32xf32, #tpu.memory_space<vmem>>, vector<1x32xf32>
    %100 = vector.broadcast %99 : vector<1x32xf32> to vector<16x32xf32>
    %101 = arith.addf %98, %100 : vector<16x32xf32>
    %102 = arith.addf %87, %101 : vector<16x32xf32>
    %cst_49 = arith.constant dense<0.000000e+00> : vector<16xf32>
    %103 = vector.multi_reduction <add>, %102, %cst_49 [1] : vector<16x32xf32> to vector<16xf32>
    %104 = vector.shape_cast %103 : vector<16xf32> to vector<16x1xf32>
    %cst_50 = arith.constant 3.200000e+01 : f32
    %105 = vector.broadcast %cst_50 : f32 to vector<16x1xf32>
    %106 = arith.divf %104, %105 : vector<16x1xf32>
    %107 = vector.broadcast %106 : vector<16x1xf32> to vector<16x32xf32>
    %108 = arith.subf %102, %107 : vector<16x32xf32>
    %109 = arith.mulf %108, %108 : vector<16x32xf32>
    %cst_51 = arith.constant dense<0.000000e+00> : vector<16xf32>
    %110 = vector.multi_reduction <add>, %109, %cst_51 [1] : vector<16x32xf32> to vector<16xf32>
    %111 = vector.shape_cast %110 : vector<16xf32> to vector<16x1xf32>
    %cst_52 = arith.constant 3.200000e+01 : f32
    %112 = vector.broadcast %cst_52 : f32 to vector<16x1xf32>
    %113 = arith.divf %111, %112 : vector<16x1xf32>
    %114 = vector.broadcast %106 : vector<16x1xf32> to vector<16x32xf32>
    %115 = arith.subf %102, %114 : vector<16x32xf32>
    %cst_53 = arith.constant 9.99999997E-7 : f32
    %116 = vector.broadcast %cst_53 : f32 to vector<16x1xf32>
    %117 = arith.addf %113, %116 : vector<16x1xf32>
    %118 = math.rsqrt %117 : vector<16x1xf32>
    %119 = vector.broadcast %118 : vector<16x1xf32> to vector<16x32xf32>
    %120 = arith.mulf %115, %119 : vector<16x32xf32>
    %c0_54 = arith.constant 0 : index
    %c0_55 = arith.constant 0 : index
    %121 = vector.load %arg16[%c0_54, %c0_55] : memref<1x32xf32, #tpu.memory_space<vmem>>, vector<1x32xf32>
    %122 = vector.broadcast %121 : vector<1x32xf32> to vector<16x32xf32>
    %123 = arith.mulf %120, %122 : vector<16x32xf32>
    %c0_56 = arith.constant 0 : index
    %c0_57 = arith.constant 0 : index
    %124 = vector.load %arg17[%c0_56, %c0_57] : memref<1x32xf32, #tpu.memory_space<vmem>>, vector<1x32xf32>
    %125 = vector.broadcast %124 : vector<1x32xf32> to vector<16x32xf32>
    %126 = arith.addf %123, %125 : vector<16x32xf32>
    %127 = vector.shape_cast %126 : vector<16x32xf32> to vector<2x8x32xf32>
    %c0_58 = arith.constant 0 : index
    %c0_59 = arith.constant 0 : index
    %c0_60 = arith.constant 0 : index
    %128 = vector.load %arg18[%c0_58, %c0_59, %c0_60] : memref<2x8x32xf32, #tpu.memory_space<vmem>>, vector<2x8x32xf32>
    tpu.vector_store %arg18[%c0_58, %c0_59, %c0_60], %127 {strides = array<i32>} : memref<2x8x32xf32, #tpu.memory_space<vmem>>, vector<2x8x32xf32>,
    return
  }
  func.func @transform_0(%arg0: i32, %arg1: i32) -> (i32, i32, i32) {
    %c0_i32 = arith.constant 0 : i32
    %c0_i32_0 = arith.constant 0 : i32
    return %arg0, %arg1, %c0_i32 : i32, i32, i32
  }
  func.func @transform_1(%arg0: i32, %arg1: i32) -> (i32, i32, i32) {
    %c0_i32 = arith.constant 0 : i32
    %c0_i32_0 = arith.constant 0 : i32
    %c0_i32_1 = arith.constant 0 : i32
    return %arg0, %c0_i32, %c0_i32_0 : i32, i32, i32
  }
  func.func @transform_2(%arg0: i32, %arg1: i32) -> (i32, i32) {
    %c0_i32 = arith.constant 0 : i32
    %c0_i32_0 = arith.constant 0 : i32
    %c0_i32_1 = arith.constant 0 : i32
    return %c0_i32, %c0_i32_0 : i32, i32
  }
  func.func @transform_3(%arg0: i32, %arg1: i32) -> (i32, i32) {
    %c0_i32 = arith.constant 0 : i32
    %c0_i32_0 = arith.constant 0 : i32
    %c0_i32_1 = arith.constant 0 : i32
    return %c0_i32, %c0_i32_0 : i32, i32
  }
  func.func @transform_4(%arg0: i32, %arg1: i32) -> (i32, i32) {
    %c0_i32 = arith.constant 0 : i32
    %c0_i32_0 = arith.constant 0 : i32
    %c0_i32_1 = arith.constant 0 : i32
    return %c0_i32, %c0_i32_0 : i32, i32
  }
  func.func @transform_5(%arg0: i32, %arg1: i32) -> (i32, i32) {
    %c0_i32 = arith.constant 0 : i32
    %c0_i32_0 = arith.constant 0 : i32
    %c0_i32_1 = arith.constant 0 : i32
    return %c0_i32, %c0_i32_0 : i32, i32
  }
  func.func @transform_6(%arg0: i32, %arg1: i32) -> (i32, i32) {
    %c0_i32 = arith.constant 0 : i32
    %c0_i32_0 = arith.constant 0 : i32
    %c0_i32_1 = arith.constant 0 : i32
    return %c0_i32, %c0_i32_0 : i32, i32
  }
  func.func @transform_7(%arg0: i32, %arg1: i32) -> (i32, i32) {
    %c0_i32 = arith.constant 0 : i32
    %c0_i32_0 = arith.constant 0 : i32
    %c0_i32_1 = arith.constant 0 : i32
    return %c0_i32, %c0_i32_0 : i32, i32
  }
  func.func @transform_8(%arg0: i32, %arg1: i32) -> (i32, i32) {
    %c0_i32 = arith.constant 0 : i32
    %c0_i32_0 = arith.constant 0 : i32
    %c0_i32_1 = arith.constant 0 : i32
    return %c0_i32, %c0_i32_0 : i32, i32
  }
  func.func @transform_9(%arg0: i32, %arg1: i32) -> (i32, i32) {
    %c0_i32 = arith.constant 0 : i32
    %c0_i32_0 = arith.constant 0 : i32
    %c0_i32_1 = arith.constant 0 : i32
    return %c0_i32, %c0_i32_0 : i32, i32
  }
  func.func @transform_10(%arg0: i32, %arg1: i32) -> (i32, i32) {
    %c0_i32 = arith.constant 0 : i32
    %c0_i32_0 = arith.constant 0 : i32
    %c0_i32_1 = arith.constant 0 : i32
    return %c0_i32, %c0_i32_0 : i32, i32
  }
  func.func @transform_11(%arg0: i32, %arg1: i32) -> (i32, i32) {
    %c0_i32 = arith.constant 0 : i32
    %c0_i32_0 = arith.constant 0 : i32
    %c0_i32_1 = arith.constant 0 : i32
    return %c0_i32, %c0_i32_0 : i32, i32
  }
  func.func @transform_12(%arg0: i32, %arg1: i32) -> (i32, i32) {
    %c0_i32 = arith.constant 0 : i32
    %c0_i32_0 = arith.constant 0 : i32
    %c0_i32_1 = arith.constant 0 : i32
    return %c0_i32, %c0_i32_0 : i32, i32
  }
  func.func @transform_13(%arg0: i32, %arg1: i32) -> (i32, i32) {
    %c0_i32 = arith.constant 0 : i32
    %c0_i32_0 = arith.constant 0 : i32
    %c0_i32_1 = arith.constant 0 : i32
    return %c0_i32, %c0_i32_0 : i32, i32
  }
  func.func @transform_14(%arg0: i32, %arg1: i32) -> (i32, i32) {
    %c0_i32 = arith.constant 0 : i32
    %c0_i32_0 = arith.constant 0 : i32
    %c0_i32_1 = arith.constant 0 : i32
    return %c0_i32, %c0_i32_0 : i32, i32
  }
  func.func @transform_15(%arg0: i32, %arg1: i32) -> (i32, i32) {
    %c0_i32 = arith.constant 0 : i32
    %c0_i32_0 = arith.constant 0 : i32
    %c0_i32_1 = arith.constant 0 : i32
    return %c0_i32, %c0_i32_0 : i32, i32
  }
  func.func @transform_16(%arg0: i32, %arg1: i32) -> (i32, i32, i32) {
    %c0_i32 = arith.constant 0 : i32
    %c0_i32_0 = arith.constant 0 : i32
    return %arg0, %arg1, %c0_i32 : i32, i32, i32
  }
  func.func @transform_17(%arg0: i32, %arg1: i32) -> (i32, i32, i32, i32) {
    %c0_i32 = arith.constant 0 : i32
    %c0_i32_0 = arith.constant 0 : i32
    %c0_i32_1 = arith.constant 0 : i32
    return %arg0, %c0_i32, %arg1, %c0_i32_0 : i32, i32, i32, i32
  }
}

</mosaic_0001>

<llo_original>
// kernel: tpu_custom_call.1
$region0: #{tpu_custom_call.1}
  #allocation0 [shape = 'u32[]', space=smem, size = 0x4, offset = 0x4, fixed_abs, tag = 'smem constant byte address 0x4 - core index']
  #allocation1 [shape = 'u32[72,128]{1,0:T(1,128)}', space=vmem, size = 0x9000, scoped, tag = 'internal scratch']
  #allocation2 [shape = 'bf16[8,8,8]{2,1,0:T(8,128)(2,1)}', space=vmem, size = 0x4000, scoped, tag = 'scratch operand']
  #allocation3 [shape = 'bf16[8,8,8]{2,1,0:T(8,128)(2,1)}', space=vmem, size = 0x4000, scoped, tag = 'scratch operand']
  %s0 = inlined_call_operand.vmem [shape: bf16[4,8,8], index: 0, kind: input, shape index: {}]
  %s1 = inlined_call_operand.vmem [shape: f32[4,8,32], index: 1, kind: input, shape index: {}]
  %s2 = inlined_call_operand.hbm [shape: bf16[32,32], index: 2, kind: input, shape index: {}]
  %s3 = inlined_call_operand.vmem [shape: f32[1,32], index: 3, kind: input, shape index: {}]
  %s4 = inlined_call_operand.hbm [shape: bf16[32,64], index: 4, kind: input, shape index: {}]
  %s5 = inlined_call_operand.vmem [shape: f32[1,64], index: 5, kind: input, shape index: {}]
  %s6 = inlined_call_operand.hbm [shape: bf16[32,32], index: 6, kind: input, shape index: {}]
  %s7 = inlined_call_operand.vmem [shape: f32[1,32], index: 7, kind: input, shape index: {}]
  %s8 = inlined_call_operand.vmem [shape: f32[1,32], index: 8, kind: input, shape index: {}]
  %s9 = inlined_call_operand.vmem [shape: f32[1,32], index: 9, kind: input, shape index: {}]
  %s10 = inlined_call_operand.hbm [shape: bf16[32,64], index: 10, kind: input, shape index: {}]
  %s11 = inlined_call_operand.vmem [shape: f32[1,64], index: 11, kind: input, shape index: {}]
  %s12 = inlined_call_operand.vmem [shape: bf16[64,32], index: 12, kind: input, shape index: {}]
  %s13 = inlined_call_operand.vmem [shape: f32[1,32], index: 13, kind: input, shape index: {}]
  %s14 = inlined_call_operand.vmem [shape: f32[1,32], index: 14, kind: input, shape index: {}]
  %s15 = inlined_call_operand.vmem [shape: f32[1,32], index: 15, kind: input, shape index: {}]
  %s16 = inlined_call_operand.hbm [shape: f32[4,8,32], index: 16, kind: output, shape index: {0}]
  %s17 = inlined_call_operand.hbm [shape: bf16[4,4,8,8], index: 17, kind: output, shape index: {1}]
  %18 = xla_tuple %s16, %s17
  %s19 = sld [smem:[#allocation0]]
  $region125: #{tpu_custom_call.1} parent=0
    _
  %s21 = ssub.s32 1, %s19
  %s22 = scalar_select 0, %s21, %s19
  $region1: #{tpu_custom_call.1} parent=0
    #allocation4 [shape = 'u8[8192]{0}', space=vmem, size = 0x2000, scoped, tag = 'input window, operand 2, single buffered']
    #allocation5 [shape = 's32[2]{0}', space=sflag, size = 0x8, scoped, tag = 'scoped memory for tpu_custom_call.1']
    #allocation6 [shape = 's32[2]{0}', space=sflag, size = 0x8, scoped, tag = 'scoped memory for tpu_custom_call.1']
    #allocation7 [shape = 'u8[8192]{0}', space=vmem, size = 0x2000, scoped, tag = 'input window, operand 4, single buffered']
    #allocation8 [shape = 's32[1]{0}', space=sflag, size = 0x4, scoped, tag = 'scoped memory for tpu_custom_call.1']
    #allocation9 [shape = 'u8[8192]{0}', space=vmem, size = 0x2000, scoped, tag = 'input window, operand 6, single buffered']
    #allocation10 [shape = 'u8[8192]{0}', space=vmem, size = 0x2000, scoped, tag = 'input window, operand 10, single buffered']
    #allocation11 [shape = 's32[1]{0}', space=sflag, size = 0x4, scoped, tag = 'scoped memory for tpu_custom_call.1']
    #allocation12 [shape = 'u8[16384]{0}', space=vmem, size = 0x4000, scoped, tag = 'output window, operand 0']
    #allocation13 [shape = 'u8[32768]{0}', space=vmem, size = 0x8000, scoped, tag = 'output window, operand 1']
    #allocation14 [shape = 's32[2]{0}', space=sflag, size = 0x8, scoped, tag = 'scoped memory for tpu_custom_call.1']
    %23 = vsyncpa [#allocation5], 0
    %24 = vsyncpa [#allocation8], 0
    %25 = vsyncpa [#allocation11], 0
    %26 = vsyncpa [#allocation6], 0
    %s27 = scalar_lea.sflag [#allocation6], 1
    %28 = vsyncpa %s27, 0
    %29 = vsyncpa [#allocation14], 0
    %s30 = scalar_lea.sflag [#allocation14], 1
    %31 = vsyncpa %s30, 0
    loop: start=0, step=1, limit=4
    $region2: #{tpu_custom_call.1} parent=1 // loop_pre_header
      _
    $region3: #{tpu_custom_call.1} parent=1 // loop_header
      %s33 = sphi 0, %s37
      %p34 = scmp.ge.s32.totalorder %s33, 4
      %s40 = sphi 0, %s52
      %s41 = sphi 0, %s48
      %s42 = sphi 0, %s40
      %s43 = sphi 0, %s41
      %s44 = sphi 0, %s42
      %s45 = sphi 0, %s43
      %s57 = sphi 0, %s59
      %s60 = sphi 0, %s57
      %s61 = sphi 0, %s60
      %s77 = sphi 0, %s61
      %s83 = sphi 0, %s85
      %s86 = sphi 0, %s83
      %s87 = sphi 0, %s86
      %s103 = sphi 0, %s87
      %s107 = sphi 0, %s107
      %s109 = sphi 0, %s107
      %s110 = sphi 0, %s109
      %s124 = sphi 0, %s110
      %s128 = sphi 0, %s128
      %s130 = sphi 0, %s128
      %s131 = sphi 0, %s130
      %s145 = sphi 0, %s131
      %s149 = sphi 0, %s149
      %s151 = sphi 0, %s149
      %s152 = sphi 0, %s151
      %s166 = sphi 0, %s152
      %s170 = sphi 0, %s170
      %s172 = sphi 0, %s170
      %s173 = sphi 0, %s172
      %s187 = sphi 0, %s173
      %s191 = sphi 0, %s191
      %s193 = sphi 0, %s191
      %s194 = sphi 0, %s193
      %s208 = sphi 0, %s194
      %s212 = sphi 0, %s212
      %s214 = sphi 0, %s212
      %s215 = sphi 0, %s214
      %s229 = sphi 0, %s215
      %s233 = sphi 0, %s233
      %s235 = sphi 0, %s233
      %s236 = sphi 0, %s235
      %s250 = sphi 0, %s236
      %s254 = sphi 0, %s254
      %s256 = sphi 0, %s254
      %s257 = sphi 0, %s256
      %s271 = sphi 0, %s257
      %s275 = sphi 0, %s275
      %s277 = sphi 0, %s275
      %s278 = sphi 0, %s277
      %s292 = sphi 0, %s278
      %s296 = sphi 0, %s296
      %s298 = sphi 0, %s296
      %s299 = sphi 0, %s298
      %s313 = sphi 0, %s299
      %s317 = sphi 0, %s317
      %s319 = sphi 0, %s317
      %s320 = sphi 0, %s319
      %s334 = sphi 0, %s320
      %s338 = sphi 0, %s338
      %s340 = sphi 0, %s338
      %s341 = sphi 0, %s340
      %s355 = sphi 0, %s341
      %s359 = sphi 0, %s359
      %s361 = sphi 0, %s359
      %s362 = sphi 0, %s361
      %s376 = sphi 0, %s362
      %s380 = sphi 0, %s380
      %s382 = sphi 0, %s380
      %s383 = sphi 0, %s382
      %s397 = sphi 0, %s383
      %s405 = sphi 0, %s407
      %s408 = sphi 0, %s405
      %s409 = sphi 0, %s408
      %s425 = sphi 0, %s409
      %s433 = sphi 0, %s435
      %s436 = sphi 0, %s433
      %s437 = sphi 0, %s436
      %s453 = sphi 0, %s437
    $region4: #{tpu_custom_call.1} parent=1 // loop_header_branch
      %36 = sbr.rel (%p34) target = $region8
    $region5: #{tpu_custom_call.1} parent=1 // loop_body
      %s38 = ssub.s32 %s33, 1
      %s39 = ssub.s32 %s33, 2
      %s46 = sadd.s32 1, %s41
      %p47 = scmp.ge.s32.totalorder %s46, 1
      %s48 = scalar_select %p47, 0, %s46
      %s49 = sadd.s32 1, %s40
      %s50 = scalar_select %p47, %s49, %s40
      %p51 = scmp.ge.s32.totalorder %s50, 2
      %s52 = scalar_select %p51, 0, %s50
      %s53 = ssub.s32 %s40, %s52
      %s54 = ssub.s32 %s41, %s48
      %s55 = sor.u32 %s53, %s54
      %p56 = scmp.eq.s32.totalorder %s55, 0
      %s58 = sadd.s32 %s57, 1
      %s59 = scalar_select %p56, %s57, %s58
      %p62 = pneg %p56
      %p63 = scmp.eq.s32.totalorder %s33, 1
      %p64 = por %p62, %p63
      %p65 = scmp.ne.s32.totalorder %s57, %s60
      %p66 = scmp.eq.s32.totalorder %s33, 0
      %p67 = por %p65, %p66
      %p68 = scmp.ne.s32.totalorder %s57, %s60
      %p69 = scmp.eq.s32.totalorder %s38, 1
      %p70 = por %p68, %p69
      %p71 = scmp.ne.s32.totalorder %s60, %s61
      %p72 = scmp.eq.s32.totalorder %s38, 0
      %p73 = por %p71, %p72
      %p74 = scmp.ne.s32.totalorder %s60, %s61
      %p75 = scmp.eq.s32.totalorder %s39, 1
      %p76 = por %p74, %p75
      %p78 = scmp.ne.s32.totalorder %s61, %s77
      %p79 = scmp.eq.s32.totalorder %s39, 0
      %p80 = por %p78, %p79
      %s81 = ssub.s32 %s40, %s52
      %p82 = scmp.eq.s32.totalorder %s81, 0
      %s84 = sadd.s32 %s83, 1
      %s85 = scalar_select %p82, %s83, %s84
      %p88 = pneg %p82
      %p89 = scmp.eq.s32.totalorder %s33, 1
      %p90 = por %p88, %p89
      %p91 = scmp.ne.s32.totalorder %s83, %s86
      %p92 = scmp.eq.s32.totalorder %s33, 0
      %p93 = por %p91, %p92
      %p94 = scmp.ne.s32.totalorder %s83, %s86
      %p95 = scmp.eq.s32.totalorder %s38, 1
      %p96 = por %p94, %p95
      %p97 = scmp.ne.s32.totalorder %s86, %s87
      %p98 = scmp.eq.s32.totalorder %s38, 0
      %p99 = por %p97, %p98
      %p100 = scmp.ne.s32.totalorder %s86, %s87
      %p101 = scmp.eq.s32.totalorder %s39, 1
      %p102 = por %p100, %p101
      %p104 = scmp.ne.s32.totalorder %s87, %s103
      %p105 = scmp.eq.s32.totalorder %s39, 0
      %p106 = por %p104, %p105
      %s108 = sadd.s32 %s107, 1
      %p111 = scmp.eq.s32.totalorder %s33, 1
      %p112 = scmp.ne.s32.totalorder %s107, %s109
      %p113 = scmp.eq.s32.totalorder %s33, 0
      %p114 = por %p112, %p113
      %p115 = scmp.ne.s32.totalorder %s107, %s109
      %p116 = scmp.eq.s32.totalorder %s38, 1
      %p117 = por %p115, %p116
      %p118 = scmp.ne.s32.totalorder %s109, %s110
      %p119 = scmp.eq.s32.totalorder %s38, 0
      %p120 = por %p118, %p119
      %p121 = scmp.ne.s32.totalorder %s109, %s110
      %p122 = scmp.eq.s32.totalorder %s39, 1
      %p123 = por %p121, %p122
      %p125 = scmp.ne.s32.totalorder %s110, %s124
      %p126 = scmp.eq.s32.totalorder %s39, 0
      %p127 = por %p125, %p126
      %s129 = sadd.s32 %s128, 1
      %p132 = scmp.eq.s32.totalorder %s33, 1
      %p133 = scmp.ne.s32.totalorder %s128, %s130
      %p134 = scmp.eq.s32.totalorder %s33, 0
      %p135 = por %p133, %p134
      %p136 = scmp.ne.s32.totalorder %s128, %s130
      %p137 = scmp.eq.s32.totalorder %s38, 1
      %p138 = por %p136, %p137
      %p139 = scmp.ne.s32.totalorder %s130, %s131
      %p140 = scmp.eq.s32.totalorder %s38, 0
      %p141 = por %p139, %p140
      %p142 = scmp.ne.s32.totalorder %s130, %s131
      %p143 = scmp.eq.s32.totalorder %s39, 1
      %p144 = por %p142, %p143
      %p146 = scmp.ne.s32.totalorder %s131, %s145
      %p147 = scmp.eq.s32.totalorder %s39, 0
      %p148 = por %p146, %p147
      %s150 = sadd.s32 %s149, 1
      %p153 = scmp.eq.s32.totalorder %s33, 1
      %p154 = scmp.ne.s32.totalorder %s149, %s151
      %p155 = scmp.eq.s32.totalorder %s33, 0
      %p156 = por %p154, %p155
      %p157 = scmp.ne.s32.totalorder %s149, %s151
      %p158 = scmp.eq.s32.totalorder %s38, 1
      %p159 = por %p157, %p158
      %p160 = scmp.ne.s32.totalorder %s151, %s152
      %p161 = scmp.eq.s32.totalorder %s38, 0
      %p162 = por %p160, %p161
      %p163 = scmp.ne.s32.totalorder %s151, %s152
      %p164 = scmp.eq.s32.totalorder %s39, 1
      %p165 = por %p163, %p164
      %p167 = scmp.ne.s32.totalorder %s152, %s166
      %p168 = scmp.eq.s32.totalorder %s39, 0
      %p169 = por %p167, %p168
      %s171 = sadd.s32 %s170, 1
      %p174 = scmp.eq.s32.totalorder %s33, 1
      %p175 = scmp.ne.s32.totalorder %s170, %s172
      %p176 = scmp.eq.s32.totalorder %s33, 0
      %p177 = por %p175, %p176
      %p178 = scmp.ne.s32.totalorder %s170, %s172
      %p179 = scmp.eq.s32.totalorder %s38, 1
      %p180 = por %p178, %p179
      %p181 = scmp.ne.s32.totalorder %s172, %s173
      %p182 = scmp.eq.s32.totalorder %s38, 0
      %p183 = por %p181, %p182
      %p184 = scmp.ne.s32.totalorder %s172, %s173
      %p185 = scmp.eq.s32.totalorder %s39, 1
      %p186 = por %p184, %p185
      %p188 = scmp.ne.s32.totalorder %s173, %s187
      %p189 = scmp.eq.s32.totalorder %s39, 0
      %p190 = por %p188, %p189
      %s192 = sadd.s32 %s191, 1
      %p195 = scmp.eq.s32.totalorder %s33, 1
      %p196 = scmp.ne.s32.totalorder %s191, %s193
      %p197 = scmp.eq.s32.totalorder %s33, 0
      %p198 = por %p196, %p197
      %p199 = scmp.ne.s32.totalorder %s191, %s193
      %p200 = scmp.eq.s32.totalorder %s38, 1
      %p201 = por %p199, %p200
      %p202 = scmp.ne.s32.totalorder %s193, %s194
      %p203 = scmp.eq.s32.totalorder %s38, 0
      %p204 = por %p202, %p203
      %p205 = scmp.ne.s32.totalorder %s193, %s194
      %p206 = scmp.eq.s32.totalorder %s39, 1
      %p207 = por %p205, %p206
      %p209 = scmp.ne.s32.totalorder %s194, %s208
      %p210 = scmp.eq.s32.totalorder %s39, 0
      %p211 = por %p209, %p210
      %s213 = sadd.s32 %s212, 1
      %p216 = scmp.eq.s32.totalorder %s33, 1
      %p217 = scmp.ne.s32.totalorder %s212, %s214
      %p218 = scmp.eq.s32.totalorder %s33, 0
      %p219 = por %p217, %p218
      %p220 = scmp.ne.s32.totalorder %s212, %s214
      %p221 = scmp.eq.s32.totalorder %s38, 1
      %p222 = por %p220, %p221
      %p223 = scmp.ne.s32.totalorder %s214, %s215
      %p224 = scmp.eq.s32.totalorder %s38, 0
      %p225 = por %p223, %p224
      %p226 = scmp.ne.s32.totalorder %s214, %s215
      %p227 = scmp.eq.s32.totalorder %s39, 1
      %p228 = por %p226, %p227
      %p230 = scmp.ne.s32.totalorder %s215, %s229
      %p231 = scmp.eq.s32.totalorder %s39, 0
      %p232 = por %p230, %p231
      %s234 = sadd.s32 %s233, 1
      %p237 = scmp.eq.s32.totalorder %s33, 1
      %p238 = scmp.ne.s32.totalorder %s233, %s235
      %p239 = scmp.eq.s32.totalorder %s33, 0
      %p240 = por %p238, %p239
      %p241 = scmp.ne.s32.totalorder %s233, %s235
      %p242 = scmp.eq.s32.totalorder %s38, 1
      %p243 = por %p241, %p242
      %p244 = scmp.ne.s32.totalorder %s235, %s236
      %p245 = scmp.eq.s32.totalorder %s38, 0
      %p246 = por %p244, %p245
      %p247 = scmp.ne.s32.totalorder %s235, %s236
      %p248 = scmp.eq.s32.totalorder %s39, 1
      %p249 = por %p247, %p248
      %p251 = scmp.ne.s32.totalorder %s236, %s250
      %p252 = scmp.eq.s32.totalorder %s39, 0
      %p253 = por %p251, %p252
      %s255 = sadd.s32 %s254, 1
      %p258 = scmp.eq.s32.totalorder %s33, 1
      %p259 = scmp.ne.s32.totalorder %s254, %s256
      %p260 = scmp.eq.s32.totalorder %s33, 0
      %p261 = por %p259, %p260
      %p262 = scmp.ne.s32.totalorder %s254, %s256
      %p263 = scmp.eq.s32.totalorder %s38, 1
      %p264 = por %p262, %p263
      %p265 = scmp.ne.s32.totalorder %s256, %s257
      %p266 = scmp.eq.s32.totalorder %s38, 0
      %p267 = por %p265, %p266
      %p268 = scmp.ne.s32.totalorder %s256, %s257
      %p269 = scmp.eq.s32.totalorder %s39, 1
      %p270 = por %p268, %p269
      %p272 = scmp.ne.s32.totalorder %s257, %s271
      %p273 = scmp.eq.s32.totalorder %s39, 0
      %p274 = por %p272, %p273
      %s276 = sadd.s32 %s275, 1
      %p279 = scmp.eq.s32.totalorder %s33, 1
      %p280 = scmp.ne.s32.totalorder %s275, %s277
      %p281 = scmp.eq.s32.totalorder %s33, 0
      %p282 = por %p280, %p281
      %p283 = scmp.ne.s32.totalorder %s275, %s277
      %p284 = scmp.eq.s32.totalorder %s38, 1
      %p285 = por %p283, %p284
      %p286 = scmp.ne.s32.totalorder %s277, %s278
      %p287 = scmp.eq.s32.totalorder %s38, 0
      %p288 = por %p286, %p287
      %p289 = scmp.ne.s32.totalorder %s277, %s278
      %p290 = scmp.eq.s32.totalorder %s39, 1
      %p291 = por %p289, %p290
      %p293 = scmp.ne.s32.totalorder %s278, %s292
      %p294 = scmp.eq.s32.totalorder %s39, 0
      %p295 = por %p293, %p294
      %s297 = sadd.s32 %s296, 1
      %p300 = scmp.eq.s32.totalorder %s33, 1
      %p301 = scmp.ne.s32.totalorder %s296, %s298
      %p302 = scmp.eq.s32.totalorder %s33, 0
      %p303 = por %p301, %p302
      %p304 = scmp.ne.s32.totalorder %s296, %s298
      %p305 = scmp.eq.s32.totalorder %s38, 1
      %p306 = por %p304, %p305
      %p307 = scmp.ne.s32.totalorder %s298, %s299
      %p308 = scmp.eq.s32.totalorder %s38, 0
      %p309 = por %p307, %p308
      %p310 = scmp.ne.s32.totalorder %s298, %s299
      %p311 = scmp.eq.s32.totalorder %s39, 1
      %p312 = por %p310, %p311
      %p314 = scmp.ne.s32.totalorder %s299, %s313
      %p315 = scmp.eq.s32.totalorder %s39, 0
      %p316 = por %p314, %p315
      %s318 = sadd.s32 %s317, 1
      %p321 = scmp.eq.s32.totalorder %s33, 1
      %p322 = scmp.ne.s32.totalorder %s317, %s319
      %p323 = scmp.eq.s32.totalorder %s33, 0
      %p324 = por %p322, %p323
      %p325 = scmp.ne.s32.totalorder %s317, %s319
      %p326 = scmp.eq.s32.totalorder %s38, 1
      %p327 = por %p325, %p326
      %p328 = scmp.ne.s32.totalorder %s319, %s320
      %p329 = scmp.eq.s32.totalorder %s38, 0
      %p330 = por %p328, %p329
      %p331 = scmp.ne.s32.totalorder %s319, %s320
      %p332 = scmp.eq.s32.totalorder %s39, 1
      %p333 = por %p331, %p332
      %p335 = scmp.ne.s32.totalorder %s320, %s334
      %p336 = scmp.eq.s32.totalorder %s39, 0
      %p337 = por %p335, %p336
      %s339 = sadd.s32 %s338, 1
      %p342 = scmp.eq.s32.totalorder %s33, 1
      %p343 = scmp.ne.s32.totalorder %s338, %s340
      %p344 = scmp.eq.s32.totalorder %s33, 0
      %p345 = por %p343, %p344
      %p346 = scmp.ne.s32.totalorder %s338, %s340
      %p347 = scmp.eq.s32.totalorder %s38, 1
      %p348 = por %p346, %p347
      %p349 = scmp.ne.s32.totalorder %s340, %s341
      %p350 = scmp.eq.s32.totalorder %s38, 0
      %p351 = por %p349, %p350
      %p352 = scmp.ne.s32.totalorder %s340, %s341
      %p353 = scmp.eq.s32.totalorder %s39, 1
      %p354 = por %p352, %p353
      %p356 = scmp.ne.s32.totalorder %s341, %s355
      %p357 = scmp.eq.s32.totalorder %s39, 0
      %p358 = por %p356, %p357
      %s360 = sadd.s32 %s359, 1
      %p363 = scmp.eq.s32.totalorder %s33, 1
      %p364 = scmp.ne.s32.totalorder %s359, %s361
      %p365 = scmp.eq.s32.totalorder %s33, 0
      %p366 = por %p364, %p365
      %p367 = scmp.ne.s32.totalorder %s359, %s361
      %p368 = scmp.eq.s32.totalorder %s38, 1
      %p369 = por %p367, %p368
      %p370 = scmp.ne.s32.totalorder %s361, %s362
      %p371 = scmp.eq.s32.totalorder %s38, 0
      %p372 = por %p370, %p371
      %p373 = scmp.ne.s32.totalorder %s361, %s362
      %p374 = scmp.eq.s32.totalorder %s39, 1
      %p375 = por %p373, %p374
      %p377 = scmp.ne.s32.totalorder %s362, %s376
      %p378 = scmp.eq.s32.totalorder %s39, 0
      %p379 = por %p377, %p378
      %s381 = sadd.s32 %s380, 1
      %p384 = scmp.eq.s32.totalorder %s33, 1
      %p385 = scmp.ne.s32.totalorder %s380, %s382
      %p386 = scmp.eq.s32.totalorder %s33, 0
      %p387 = por %p385, %p386
      %p388 = scmp.ne.s32.totalorder %s380, %s382
      %p389 = scmp.eq.s32.totalorder %s38, 1
      %p390 = por %p388, %p389
      %p391 = scmp.ne.s32.totalorder %s382, %s383
      %p392 = scmp.eq.s32.totalorder %s38, 0
      %p393 = por %p391, %p392
      %p394 = scmp.ne.s32.totalorder %s382, %s383
      %p395 = scmp.eq.s32.totalorder %s39, 1
      %p396 = por %p394, %p395
      %p398 = scmp.ne.s32.totalorder %s383, %s397
      %p399 = scmp.eq.s32.totalorder %s39, 0
      %p400 = por %p398, %p399
      %s401 = ssub.s32 %s40, %s52
      %s402 = ssub.s32 %s41, %s48
      %s403 = sor.u32 %s401, %s402
      %p404 = scmp.eq.s32.totalorder %s403, 0
      %s406 = sadd.s32 %s405, 1
      %s407 = scalar_select %p404, %s405, %s406
      %p410 = pneg %p404
      %p411 = scmp.eq.s32.totalorder %s33, 1
      %p412 = por %p410, %p411
      %p413 = scmp.ne.s32.totalorder %s405, %s408
      %p414 = scmp.eq.s32.totalorder %s33, 0
      %p415 = por %p413, %p414
      %p416 = scmp.ne.s32.totalorder %s405, %s408
      %p417 = scmp.eq.s32.totalorder %s38, 1
      %p418 = por %p416, %p417
      %p419 = scmp.ne.s32.totalorder %s408, %s409
      %p420 = scmp.eq.s32.totalorder %s38, 0
      %p421 = por %p419, %p420
      %p422 = scmp.ne.s32.totalorder %s408, %s409
      %p423 = scmp.eq.s32.totalorder %s39, 1
      %p424 = por %p422, %p423
      %p426 = scmp.ne.s32.totalorder %s409, %s425
      %p427 = scmp.eq.s32.totalorder %s39, 0
      %p428 = por %p426, %p427
      %s429 = ssub.s32 %s40, %s52
      %s430 = ssub.s32 %s41, %s48
      %s431 = sor.u32 %s429, %s430
      %p432 = scmp.eq.s32.totalorder %s431, 0
      %s434 = sadd.s32 %s433, 1
      %s435 = scalar_select %p432, %s433, %s434
      %p438 = pneg %p432
      %p439 = scmp.eq.s32.totalorder %s33, 1
      %p440 = por %p438, %p439
      %p441 = scmp.ne.s32.totalorder %s433, %s436
      %p442 = scmp.eq.s32.totalorder %s33, 0
      %p443 = por %p441, %p442
      %p444 = scmp.ne.s32.totalorder %s433, %s436
      %p445 = scmp.eq.s32.totalorder %s38, 1
      %p446 = por %p444, %p445
      %p447 = scmp.ne.s32.totalorder %s436, %s437
      %p448 = scmp.eq.s32.totalorder %s38, 0
      %p449 = por %p447, %p448
      %p450 = scmp.ne.s32.totalorder %s436, %s437
      %p451 = scmp.eq.s32.totalorder %s39, 1
      %p452 = por %p450, %p451
      %p454 = scmp.ne.s32.totalorder %s437, %s453
      %p455 = scmp.eq.s32.totalorder %s39, 0
      %p456 = por %p454, %p455
      %p457 = scmp.le.s32.totalorder 1, %s33
      %p458 = scmp.lt.s32.totalorder %s33, 3
      %p459 = pnand %p457, %p458
      %p460 = pneg %p459
      // Predicated region
      $region9: #{tpu_custom_call.1} parent=5 // pred_check
        _
      $region10: #{tpu_custom_call.1} parent=5 // pred_check_branch
        %462 = sbr.rel (%p459) target = $region12
      $region11: #{tpu_custom_call.1} parent=5 // pred_region
        %s463 = ssub.s32 %s33, 1
        // Predicated region
        $region13: #{tpu_custom_call.1} parent=11 // pred_check
          %p464 = pneg %p120
        $region14: #{tpu_custom_call.1} parent=11 // pred_check_branch
          %466 = sbr.rel (%p464) target = $region16
        $region15: #{tpu_custom_call.1} parent=11 // pred_region
          %468 = vsyncadd [#allocation5], 0
          %s469 = sshll.u32 %s2, 4
          %s470 = int_to_ptr.hbm [resolvable:$true] %s469
          %s471 = sshll.u32 [#allocation4], 4
          %s472 = int_to_ptr.vmem [resolvable:$true] %s471
          %477 = dma.hbm_to_vmem [thread:$0]  %s470, 256, %s472, [#allocation5], 64, 64, 4
        $region16: #{tpu_custom_call.1} parent=11 // pred_fallthru
          _
        // Predicated region
        $region17: #{tpu_custom_call.1} parent=11 // pred_check
          %p478 = pneg %p141
        $region18: #{tpu_custom_call.1} parent=11 // pred_check_branch
          %480 = sbr.rel (%p478) target = $region20
        $region19: #{tpu_custom_call.1} parent=11 // pred_region
          _
        $region20: #{tpu_custom_call.1} parent=11 // pred_fallthru
          _
        // Predicated region
        $region21: #{tpu_custom_call.1} parent=11 // pred_check
          %p481 = pneg %p162
        $region22: #{tpu_custom_call.1} parent=11 // pred_check_branch
          %483 = sbr.rel (%p481) target = $region24
        $region23: #{tpu_custom_call.1} parent=11 // pred_region
          %485 = vsyncadd [#allocation8], 0
          %s486 = sshll.u32 %s4, 4
          %s487 = int_to_ptr.hbm [resolvable:$true] %s486
          %s488 = sshll.u32 [#allocation7], 4
          %s489 = int_to_ptr.vmem [resolvable:$true] %s488
          %494 = dma.hbm_to_vmem [thread:$0]  %s487, 256, %s489, [#allocation8], 64, 64, 4
        $region24: #{tpu_custom_call.1} parent=11 // pred_fallthru
          _
        // Predicated region
        $region25: #{tpu_custom_call.1} parent=11 // pred_check
          %p495 = pneg %p183
        $region26: #{tpu_custom_call.1} parent=11 // pred_check_branch
          %497 = sbr.rel (%p495) target = $region28
        $region27: #{tpu_custom_call.1} parent=11 // pred_region
          _
        $region28: #{tpu_custom_call.1} parent=11 // pred_fallthru
          _
        // Predicated region
        $region29: #{tpu_custom_call.1} parent=11 // pred_check
          %p498 = pneg %p204
        $region30: #{tpu_custom_call.1} parent=11 // pred_check_branch
          %500 = sbr.rel (%p498) target = $region32
        $region31: #{tpu_custom_call.1} parent=11 // pred_region
          %502 = vsyncadd [#allocation8], 0
          %s503 = sshll.u32 %s6, 4
          %s504 = int_to_ptr.hbm [resolvable:$true] %s503
          %s505 = sshll.u32 [#allocation9], 4
          %s506 = int_to_ptr.vmem [resolvable:$true] %s505
          %511 = dma.hbm_to_vmem [thread:$0]  %s504, 256, %s506, [#allocation8], 64, 64, 4
        $region32: #{tpu_custom_call.1} parent=11 // pred_fallthru
          _
        // Predicated region
        $region33: #{tpu_custom_call.1} parent=11 // pred_check
          %p512 = pneg %p225
        $region34: #{tpu_custom_call.1} parent=11 // pred_check_branch
          %514 = sbr.rel (%p512) target = $region36
        $region35: #{tpu_custom_call.1} parent=11 // pred_region
          _
        $region36: #{tpu_custom_call.1} parent=11 // pred_fallthru
          _
        // Predicated region
        $region37: #{tpu_custom_call.1} parent=11 // pred_check
          %p515 = pneg %p246
        $region38: #{tpu_custom_call.1} parent=11 // pred_check_branch
          %517 = sbr.rel (%p515) target = $region40
        $region39: #{tpu_custom_call.1} parent=11 // pred_region
          _
        $region40: #{tpu_custom_call.1} parent=11 // pred_fallthru
          _
        // Predicated region
        $region41: #{tpu_custom_call.1} parent=11 // pred_check
          %p518 = pneg %p267
        $region42: #{tpu_custom_call.1} parent=11 // pred_check_branch
          %520 = sbr.rel (%p518) target = $region44
        $region43: #{tpu_custom_call.1} parent=11 // pred_region
          _
        $region44: #{tpu_custom_call.1} parent=11 // pred_fallthru
          _
        // Predicated region
        $region45: #{tpu_custom_call.1} parent=11 // pred_check
          %p521 = pneg %p288
        $region46: #{tpu_custom_call.1} parent=11 // pred_check_branch
          %523 = sbr.rel (%p521) target = $region48
        $region47: #{tpu_custom_call.1} parent=11 // pred_region
          %525 = vsyncadd [#allocation11], 0
          %s526 = sshll.u32 %s10, 4
          %s527 = int_to_ptr.hbm [resolvable:$true] %s526
          %s528 = sshll.u32 [#allocation10], 4
          %s529 = int_to_ptr.vmem [resolvable:$true] %s528
          %534 = dma.hbm_to_vmem [thread:$0]  %s527, 256, %s529, [#allocation11], 64, 64, 4
        $region48: #{tpu_custom_call.1} parent=11 // pred_fallthru
          _
        // Predicated region
        $region49: #{tpu_custom_call.1} parent=11 // pred_check
          %p535 = pneg %p309
        $region50: #{tpu_custom_call.1} parent=11 // pred_check_branch
          %537 = sbr.rel (%p535) target = $region52
        $region51: #{tpu_custom_call.1} parent=11 // pred_region
          _
        $region52: #{tpu_custom_call.1} parent=11 // pred_fallthru
          _
        // Predicated region
        $region53: #{tpu_custom_call.1} parent=11 // pred_check
          %p538 = pneg %p330
        $region54: #{tpu_custom_call.1} parent=11 // pred_check_branch
          %540 = sbr.rel (%p538) target = $region56
        $region55: #{tpu_custom_call.1} parent=11 // pred_region
          _
        $region56: #{tpu_custom_call.1} parent=11 // pred_fallthru
          _
        // Predicated region
        $region57: #{tpu_custom_call.1} parent=11 // pred_check
          %p541 = pneg %p351
        $region58: #{tpu_custom_call.1} parent=11 // pred_check_branch
          %543 = sbr.rel (%p541) target = $region60
        $region59: #{tpu_custom_call.1} parent=11 // pred_region
          _
        $region60: #{tpu_custom_call.1} parent=11 // pred_fallthru
          _
        // Predicated region
        $region61: #{tpu_custom_call.1} parent=11 // pred_check
          %p544 = pneg %p372
        $region62: #{tpu_custom_call.1} parent=11 // pred_check_branch
          %546 = sbr.rel (%p544) target = $region64
        $region63: #{tpu_custom_call.1} parent=11 // pred_region
          _
        $region64: #{tpu_custom_call.1} parent=11 // pred_fallthru
          _
        // Predicated region
        $region65: #{tpu_custom_call.1} parent=11 // pred_check
          %p547 = pneg %p393
        $region66: #{tpu_custom_call.1} parent=11 // pred_check_branch
          %549 = sbr.rel (%p547) target = $region68
        $region67: #{tpu_custom_call.1} parent=11 // pred_region
          _
        $region68: #{tpu_custom_call.1} parent=11 // pred_fallthru
          _
      $region12: #{tpu_custom_call.1} parent=5 // pred_fallthru
        _
      %p550 = scmp.lt.s32.totalorder %s33, 2
      // Predicated region
      $region69: #{tpu_custom_call.1} parent=5 // pred_check
        %p551 = pneg %p550
      $region70: #{tpu_custom_call.1} parent=5 // pred_check_branch
        %553 = sbr.rel (%p551) target = $region72
      $region71: #{tpu_custom_call.1} parent=5 // pred_region
        // Predicated region
        $region73: #{tpu_custom_call.1} parent=71 // pred_check
          %p554 = pneg %p67
        $region74: #{tpu_custom_call.1} parent=71 // pred_check_branch
          %556 = sbr.rel (%p554) target = $region76
        $region75: #{tpu_custom_call.1} parent=71 // pred_region
          %s557 = smul.u32 2, %s40
          %p558 = scmp.lt.s32.totalorder %s557, 3
          %s559 = scalar_select %p558, %s557, 3
          %p560 = scmp.lt.s32.totalorder %s41, 0
          %s561 = scalar_select %p560, %s41, 0
          %s562 = sadd.s32 %s561, %s559
          %s563 = smul.addr %s562, 4
          %s564 = scalar_lea.vmem %s0, %s563
          %s565 = smul.u32 2, %s40
        $region76: #{tpu_custom_call.1} parent=71 // pred_fallthru
          _
        // Predicated region
        $region77: #{tpu_custom_call.1} parent=71 // pred_check
          %p566 = pneg %p93
        $region78: #{tpu_custom_call.1} parent=71 // pred_check_branch
          %568 = sbr.rel (%p566) target = $region80
        $region79: #{tpu_custom_call.1} parent=71 // pred_region
          %s569 = smul.u32 2, %s40
          %p570 = scmp.lt.s32.totalorder %s569, 3
          %s571 = scalar_select %p570, %s569, 3
          %s572 = smul.addr %s571, 8
          %s573 = scalar_lea.vmem %s1, %s572
          %s574 = smul.u32 2, %s40
        $region80: #{tpu_custom_call.1} parent=71 // pred_fallthru
          _
      $region72: #{tpu_custom_call.1} parent=5 // pred_fallthru
        _
      %p575 = scmp.le.s32.totalorder 1, %s33
      %p576 = scmp.lt.s32.totalorder %s33, 3
      %p577 = pnand %p575, %p576
      %p578 = pneg %p577
      // Predicated region
      $region81: #{tpu_custom_call.1} parent=5 // pred_check
        _
      $region82: #{tpu_custom_call.1} parent=5 // pred_check_branch
        %580 = sbr.rel (%p577) target = $region84
      $region83: #{tpu_custom_call.1} parent=5 // pred_region
        %s581 = ssub.s32 %s33, 1
        // Predicated region
        $region85: #{tpu_custom_call.1} parent=83 // pred_check
          %p582 = pneg %p120
        $region86: #{tpu_custom_call.1} parent=83 // pred_check_branch
          %584 = sbr.rel (%p582) target = $region88
        $region87: #{tpu_custom_call.1} parent=83 // pred_region
          %586 = dma.done [#allocation5], 256
        $region88: #{tpu_custom_call.1} parent=83 // pred_fallthru
          _
        // Predicated region
        $region89: #{tpu_custom_call.1} parent=83 // pred_check
          %p587 = pneg %p162
        $region90: #{tpu_custom_call.1} parent=83 // pred_check_branch
          %589 = sbr.rel (%p587) target = $region92
        $region91: #{tpu_custom_call.1} parent=83 // pred_region
          %591 = dma.done [#allocation8], 256
        $region92: #{tpu_custom_call.1} parent=83 // pred_fallthru
          _
        // Predicated region
        $region93: #{tpu_custom_call.1} parent=83 // pred_check
          %p592 = pneg %p204
        $region94: #{tpu_custom_call.1} parent=83 // pred_check_branch
          %594 = sbr.rel (%p592) target = $region96
        $region95: #{tpu_custom_call.1} parent=83 // pred_region
          %596 = dma.done [#allocation8], 256
        $region96: #{tpu_custom_call.1} parent=83 // pred_fallthru
          _
        // Predicated region
        $region97: #{tpu_custom_call.1} parent=83 // pred_check
          %p597 = pneg %p288
        $region98: #{tpu_custom_call.1} parent=83 // pred_check_branch
          %599 = sbr.rel (%p597) target = $region100
        $region99: #{tpu_custom_call.1} parent=83 // pred_region
          %601 = dma.done [#allocation11], 256
        $region100: #{tpu_custom_call.1} parent=83 // pred_fallthru
          _
        %s602 = smul.u32 2, %s42
        %p603 = scmp.lt.s32.totalorder %s602, 3
        %s604 = scalar_select %p603, %s602, 3
        %p605 = scmp.lt.s32.totalorder %s43, 0
        %s606 = scalar_select %p605, %s43, 0
        %s607 = sadd.s32 %s606, %s604
        %s608 = smul.addr %s607, 4
        %s609 = scalar_lea.vmem %s0, %s608
        %p610 = pneg %p73
        %p611 = pneg %p70
        %s612 = smul.u32 2, %s42
        %p613 = scmp.lt.s32.totalorder %s612, 3
        %s614 = scalar_select %p613, %s612, 3
        %s615 = smul.addr %s614, 8
        %s616 = scalar_lea.vmem %s1, %s615
        %p617 = pneg %p99
        %p618 = pneg %p96
        %p619 = pneg %p120
        %p620 = pneg %p117
        %p621 = pneg %p141
        %p622 = pneg %p138
        %p623 = pneg %p162
        %p624 = pneg %p159
        %p625 = pneg %p183
        %p626 = pneg %p180
        %p627 = pneg %p204
        %p628 = pneg %p201
        %p629 = pneg %p225
        %p630 = pneg %p222
        %p631 = pneg %p246
        %p632 = pneg %p243
        %p633 = pneg %p267
        %p634 = pneg %p264
        %p635 = pneg %p288
        %p636 = pneg %p285
        %p637 = pneg %p309
        %p638 = pneg %p306
        %p639 = pneg %p330
        %p640 = pneg %p327
        %p641 = pneg %p351
        %p642 = pneg %p348
        %p643 = pneg %p372
        %p644 = pneg %p369
        %p645 = pneg %p393
        %p646 = pneg %p390
        %p647 = pneg %p421
        %p648 = pneg %p418
        %s649 = sand.u32 %s408, 1
        %s650 = scalar_lea.sflag [#allocation6], %s649
        %s651 = sand.u32 %s408, 1
        %s652 = smul.addr %s651, 16
        %s653 = scalar_lea.vmem [#allocation12], %s652
        %p654 = pneg %p449
        %p655 = pneg %p446
        %s656 = sand.u32 %s436, 1
        %s657 = scalar_lea.sflag [#allocation14], %s656
        %s658 = sand.u32 %s436, 1
        %s659 = smul.addr %s658, 32
        %s660 = scalar_lea.vmem [#allocation13], %s659
        %s661 = smul.u32 2, %s42
        %p662 = scmp.lt.s32.totalorder %s661, 3
        %s663 = scalar_select %p662, %s661, 3
        %p664 = scmp.lt.s32.totalorder %s43, 0
        %s665 = scalar_select %p664, %s43, 0
        %s666 = sadd.s32 %s665, %s663
        %s667 = smul.addr %s666, 4
        %s668 = scalar_lea.vmem %s0, %s667
        %s669 = smul.u32 2, %s42
        %s670 = smul.u32 2, %s42
        %p671 = scmp.lt.s32.totalorder %s670, 3
        %s672 = scalar_select %p671, %s670, 3
        %s673 = smul.addr %s672, 8
        %s674 = scalar_lea.vmem %s1, %s673
        %s675 = smul.u32 2, %s42
        %s676 = smul.u32 2, %s42
        %s677 = smul.u32 2, %s42
        %p679 = scmp.eq.s32.totalorder %s43, 0
        // Predicated region
        $region101: #{tpu_custom_call.1} parent=83 // pred_check
          %p680 = pneg %p679
        $region102: #{tpu_custom_call.1} parent=83 // pred_check_branch
          %682 = sbr.rel (%p680) target = $region104
        $region103: #{tpu_custom_call.1} parent=83 // pred_region
          %v683 = vld [vmem:[%s674] sm:$0xff]
          %v684 = vld [vmem:[%s674 + $0x8] sm:$0xff]
          %v685 = vpack.c.bf16 %v684, %v683
          %v686 = vld [vmem:[#allocation7] sm:$0xf]
          %v687 = vld [vmem:[#allocation7 + $0x4] sm:$0xf]
          %v688 = vld [vmem:[#allocation7 + $0x8] sm:$0xf]
          %v689 = vld [vmem:[#allocation7 + $0xc] sm:$0xf]
          %v690 = vld [vmem:[%s5] sm:$0x1]
          %v692 = vperm.slane %v690, 0
          %v698 = vunpack.c.l.b16 %v686
          %v699 = vunpack.c.l.b16 %v687
          %v700 = vunpack.c.l.b16 %v688
          %v701 = vunpack.c.l.b16 %v689
          %v702 = vpack.c.b16 %v699, %v698
          %v703 = vpack.c.b16 %v701, %v700
          %vm706 = vcmask 261120
          %v708 = vsel %vm706, %v685, 0
          %710 = vmatpush.bf16.msra.mxu0 0
          %711 = vmatpush.bf16.msra.mxu0 0
          %712 = vmatpush.bf16.msra.mxu0 0
          %713 = vmatpush.bf16.msra.mxu0 0
          %714 = vmatpush.bf16.msra.mxu0 0
          %715 = vmatpush.bf16.msra.mxu0 0
          %716 = vmatpush.bf16.msra.mxu0 %v703
          %717 = vmatpush.bf16.msra.mxu0 %v702
          %718 = vmatmul.bf16.gmra.mxu0 %v708
          %v719 = vpop.f32.mrf.mxu0
          %v720 = vadd.f32 %v692, %v719
          %v721 = vpop.f32.mrf.mxu0
          %v722 = vadd.f32 %v692, %v721
          %723 = vdwg.mxu0
          %726 = vrot.lane.b32.xlu0 %v720, 120
          %v727 = vpop.permute.xlu0 %726
          %728 = vrot.lane.b32.xlu0 %v722, 120
          %v729 = vpop.permute.xlu0 %728
          %732 = vrot.lane.b32.xlu0 %v720, 112
          %v733 = vpop.permute.xlu0 %732
          %734 = vrot.lane.b32.xlu0 %v722, 112
          %v735 = vpop.permute.xlu0 %734
          %738 = vrot.lane.b32.xlu0 %v720, 104
          %v739 = vpop.permute.xlu0 %738
          %740 = vrot.lane.b32.xlu0 %v722, 104
          %v741 = vpop.permute.xlu0 %740
          %v744 = vrot.slane %v733, 4
          %vm745 = vcmask 1047556
          %v746 = vsel %vm745, %v744, %v720
          %v747 = vrot.slane %v720, 4
          %v748 = vsel %vm745, %v733, %v747
          %v750 = vunpack.c.l.s4 1983009808
          %v751 = vunpack.c.0.s8 %v750
          %v752 = vperm.slane %v746, %v751
          %v754 = vunpack.c.l.s4 1983009808
          %v755 = vunpack.c.0.s8 %v754
          %v756 = vperm.slane %v748, %v755
          %v757 = vrot.slane %v739, 4
          %v758 = vsel %vm745, %v757, %v727
          %v759 = vrot.slane %v727, 4
          %v760 = vsel %vm745, %v739, %v759
          %v762 = vunpack.c.l.s4 1983009808
          %v763 = vunpack.c.0.s8 %v762
          %v764 = vperm.slane %v758, %v763
          %v766 = vunpack.c.l.s4 1983009808
          %v767 = vunpack.c.0.s8 %v766
          %v768 = vperm.slane %v760, %v767
          %v769 = vrot.slane %v764, 4
          %v770 = vsel %vm745, %v769, %v752
          %v771 = vrot.slane %v752, 4
          %v772 = vsel %vm745, %v764, %v771
          %v774 = vunpack.c.l.s4 1934713408
          %v775 = vunpack.c.0.s8 %v774
          %v776 = vperm.slane %v770, %v775
          %v778 = vunpack.c.l.s4 1934713408
          %v779 = vunpack.c.0.s8 %v778
          %v780 = vperm.slane %v772, %v779
          %v781 = vrot.slane %v768, 4
          %v782 = vsel %vm745, %v781, %v756
          %v783 = vrot.slane %v756, 4
          %v784 = vsel %vm745, %v768, %v783
          %v786 = vunpack.c.l.s4 1934713408
          %v787 = vunpack.c.0.s8 %v786
          %v788 = vperm.slane %v782, %v787
          %v790 = vunpack.c.l.s4 1934713408
          %v791 = vunpack.c.0.s8 %v790
          %v792 = vperm.slane %v784, %v791
          %v793 = vrot.slane %v776, 4
          %v794 = vsel %vm745, 0.0, %v793
          %v795 = vrot.slane %v780, 4
          %v796 = vsel %vm745, 0.0, %v795
          %v797 = vrot.slane %v788, 4
          %v798 = vsel %vm745, 0.0, %v797
          %v799 = vrot.slane %v792, 4
          %v800 = vsel %vm745, 0.0, %v799
          %v801 = vrot.slane %v735, 4
          %v802 = vsel %vm745, %v801, %v722
          %v803 = vrot.slane %v722, 4
          %v804 = vsel %vm745, %v735, %v803
          %v806 = vunpack.c.l.s4 1983009808
          %v807 = vunpack.c.0.s8 %v806
          %v808 = vperm.slane %v802, %v807
          %v810 = vunpack.c.l.s4 1983009808
          %v811 = vunpack.c.0.s8 %v810
          %v812 = vperm.slane %v804, %v811
          %v813 = vrot.slane %v741, 4
          %v814 = vsel %vm745, %v813, %v729
          %v815 = vrot.slane %v729, 4
          %v816 = vsel %vm745, %v741, %v815
          %v818 = vunpack.c.l.s4 1983009808
          %v819 = vunpack.c.0.s8 %v818
          %v820 = vperm.slane %v814, %v819
          %v822 = vunpack.c.l.s4 1983009808
          %v823 = vunpack.c.0.s8 %v822
          %v824 = vperm.slane %v816, %v823
          %v825 = vrot.slane %v820, 4
          %v826 = vsel %vm745, %v825, %v808
          %v827 = vrot.slane %v808, 4
          %v828 = vsel %vm745, %v820, %v827
          %v830 = vunpack.c.l.s4 1934713408
          %v831 = vunpack.c.0.s8 %v830
          %v832 = vperm.slane %v826, %v831
          %v834 = vunpack.c.l.s4 1934713408
          %v835 = vunpack.c.0.s8 %v834
          %v836 = vperm.slane %v828, %v835
          %v837 = vrot.slane %v824, 4
          %v838 = vsel %vm745, %v837, %v812
          %v839 = vrot.slane %v812, 4
          %v840 = vsel %vm745, %v824, %v839
          %v842 = vunpack.c.l.s4 1934713408
          %v843 = vunpack.c.0.s8 %v842
          %v844 = vperm.slane %v838, %v843
          %v846 = vunpack.c.l.s4 1934713408
          %v847 = vunpack.c.0.s8 %v846
          %v848 = vperm.slane %v840, %v847
          %v849 = vrot.slane %v832, 4
          %v850 = vsel %vm745, 0.0, %v849
          %v851 = vrot.slane %v836, 4
          %v852 = vsel %vm745, 0.0, %v851
          %v853 = vrot.slane %v844, 4
          %v854 = vsel %vm745, 0.0, %v853
          %v855 = vrot.slane %v848, 4
          %v856 = vsel %vm745, 0.0, %v855
          %v857 = vsel %vm745, %v795, %v776
          %v859 = vunpack.c.l.s4 1983009808
          %v860 = vunpack.c.0.s8 %v859
          %v861 = vperm.slane %v857, %v860
          %v862 = vrot.slane %v796, 4
          %v863 = vsel %vm745, %v862, %v794
          %v865 = vunpack.c.l.s4 1983009808
          %v866 = vunpack.c.0.s8 %v865
          %v867 = vperm.slane %v863, %v866
          %v868 = vsel %vm745, %v799, %v788
          %v870 = vunpack.c.l.s4 1983009808
          %v871 = vunpack.c.0.s8 %v870
          %v872 = vperm.slane %v868, %v871
          %v873 = vrot.slane %v800, 4
          %v874 = vsel %vm745, %v873, %v798
          %v876 = vunpack.c.l.s4 1983009808
          %v877 = vunpack.c.0.s8 %v876
          %v878 = vperm.slane %v874, %v877
          %v879 = vrot.slane %v867, 4
          %v880 = vsel %vm745, %v879, %v861
          %v881 = vrot.slane %v861, 4
          %v882 = vsel %vm745, %v867, %v881
          %v884 = vunpack.c.l.s4 1934713408
          %v885 = vunpack.c.0.s8 %v884
          %v886 = vperm.slane %v880, %v885
          %v888 = vunpack.c.l.s4 1934713408
          %v889 = vunpack.c.0.s8 %v888
          %v890 = vperm.slane %v882, %v889
          %v891 = vrot.slane %v878, 4
          %v892 = vsel %vm745, %v891, %v872
          %v893 = vrot.slane %v872, 4
          %v894 = vsel %vm745, %v878, %v893
          %v896 = vunpack.c.l.s4 1934713408
          %v897 = vunpack.c.0.s8 %v896
          %v898 = vperm.slane %v892, %v897
          %v900 = vunpack.c.l.s4 1934713408
          %v901 = vunpack.c.0.s8 %v900
          %v902 = vperm.slane %v894, %v901
          %v903 = vrot.slane %v898, 4
          %v904 = vsel %vm745, %v903, %v886
          %v905 = vrot.slane %v886, 4
          %v906 = vsel %vm745, %v898, %v905
          %v907 = vrot.slane %v902, 4
          %v908 = vsel %vm745, %v907, %v890
          %v909 = vrot.slane %v890, 4
          %v910 = vsel %vm745, %v902, %v909
          %v911 = vsel %vm745, %v851, %v832
          %v913 = vunpack.c.l.s4 1983009808
          %v914 = vunpack.c.0.s8 %v913
          %v915 = vperm.slane %v911, %v914
          %v916 = vrot.slane %v852, 4
          %v917 = vsel %vm745, %v916, %v850
          %v919 = vunpack.c.l.s4 1983009808
          %v920 = vunpack.c.0.s8 %v919
          %v921 = vperm.slane %v917, %v920
          %v922 = vsel %vm745, %v855, %v844
          %v924 = vunpack.c.l.s4 1983009808
          %v925 = vunpack.c.0.s8 %v924
          %v926 = vperm.slane %v922, %v925
          %v927 = vrot.slane %v856, 4
          %v928 = vsel %vm745, %v927, %v854
          %v930 = vunpack.c.l.s4 1983009808
          %v931 = vunpack.c.0.s8 %v930
          %v932 = vperm.slane %v928, %v931
          %v933 = vrot.slane %v921, 4
          %v934 = vsel %vm745, %v933, %v915
          %v935 = vrot.slane %v915, 4
          %v936 = vsel %vm745, %v921, %v935
          %v938 = vunpack.c.l.s4 1934713408
          %v939 = vunpack.c.0.s8 %v938
          %v940 = vperm.slane %v934, %v939
          %v942 = vunpack.c.l.s4 1934713408
          %v943 = vunpack.c.0.s8 %v942
          %v944 = vperm.slane %v936, %v943
          %v945 = vrot.slane %v932, 4
          %v946 = vsel %vm745, %v945, %v926
          %v947 = vrot.slane %v926, 4
          %v948 = vsel %vm745, %v932, %v947
          %v950 = vunpack.c.l.s4 1934713408
          %v951 = vunpack.c.0.s8 %v950
          %v952 = vperm.slane %v946, %v951
          %v954 = vunpack.c.l.s4 1934713408
          %v955 = vunpack.c.0.s8 %v954
          %v956 = vperm.slane %v948, %v955
          %v957 = vrot.slane %v952, 4
          %v958 = vsel %vm745, %v957, %v940
          %v959 = vrot.slane %v940, 4
          %v960 = vsel %vm745, %v952, %v959
          %v961 = vrot.slane %v956, 4
          %v962 = vsel %vm745, %v961, %v944
          %v963 = vrot.slane %v944, 4
          %v964 = vsel %vm745, %v956, %v963
          %v965 = vpack.c.bf16 %v904, %v904
          %v966 = vpack.c.bf16 %v906, %v906
          %v967 = vpack.c.bf16 %v908, %v908
          %v968 = vpack.c.bf16 %v910, %v910
          %v969 = vpack.c.bf16 %v958, %v958
          %v970 = vpack.c.bf16 %v960, %v960
          %v971 = vpack.c.bf16 %v962, %v962
          %v972 = vpack.c.bf16 %v964, %v964
          %vm973 = vcmask 60416
          %974 = vst.msk [vmem:[#allocation2] sm:$0xf] %vm973, %v965
          %975 = vst.msk [vmem:[#allocation2 + $0x4] sm:$0xf] %vm973, %v966
          %976 = vst.msk [vmem:[#allocation2 + $0x8] sm:$0xf] %vm973, %v967
          %977 = vst.msk [vmem:[#allocation2 + $0xc] sm:$0xf] %vm973, %v968
          %978 = vst.msk [vmem:[#allocation2 + $0x10] sm:$0xf] %vm973, %v969
          %979 = vst.msk [vmem:[#allocation2 + $0x14] sm:$0xf] %vm973, %v970
          %980 = vst.msk [vmem:[#allocation2 + $0x18] sm:$0xf] %vm973, %v971
          %981 = vst.msk [vmem:[#allocation2 + $0x1c] sm:$0xf] %vm973, %v972
          %982 = vrot.lane.b32.xlu0 %v720, 96
          %v983 = vpop.permute.xlu0 %982
          %984 = vrot.lane.b32.xlu0 %v722, 96
          %v985 = vpop.permute.xlu0 %984
          %986 = vrot.lane.b32.xlu0 %v727, 96
          %v987 = vpop.permute.xlu0 %986
          %988 = vrot.lane.b32.xlu0 %v729, 96
          %v989 = vpop.permute.xlu0 %988
          %990 = vrot.lane.b32.xlu0 %v733, 96
          %v991 = vpop.permute.xlu0 %990
          %992 = vrot.lane.b32.xlu0 %v735, 96
          %v993 = vpop.permute.xlu0 %992
          %994 = vrot.lane.b32.xlu0 %v739, 96
          %v995 = vpop.permute.xlu0 %994
          %996 = vrot.lane.b32.xlu0 %v741, 96
          %v997 = vpop.permute.xlu0 %996
          %v1006 = vrot.slane %v991, 4
          %v1007 = vsel %vm745, %v1006, %v983
          %v1008 = vrot.slane %v983, 4
          %v1009 = vsel %vm745, %v991, %v1008
          %v1011 = vunpack.c.l.s4 1983009808
          %v1012 = vunpack.c.0.s8 %v1011
          %v1013 = vperm.slane %v1007, %v1012
          %v1015 = vunpack.c.l.s4 1983009808
          %v1016 = vunpack.c.0.s8 %v1015
          %v1017 = vperm.slane %v1009, %v1016
          %v1018 = vrot.slane %v995, 4
          %v1019 = vsel %vm745, %v1018, %v987
          %v1020 = vrot.slane %v987, 4
          %v1021 = vsel %vm745, %v995, %v1020
          %v1023 = vunpack.c.l.s4 1983009808
          %v1024 = vunpack.c.0.s8 %v1023
          %v1025 = vperm.slane %v1019, %v1024
          %v1027 = vunpack.c.l.s4 1983009808
          %v1028 = vunpack.c.0.s8 %v1027
          %v1029 = vperm.slane %v1021, %v1028
          %v1030 = vrot.slane %v1025, 4
          %v1031 = vsel %vm745, %v1030, %v1013
          %v1032 = vrot.slane %v1013, 4
          %v1033 = vsel %vm745, %v1025, %v1032
          %v1035 = vunpack.c.l.s4 1934713408
          %v1036 = vunpack.c.0.s8 %v1035
          %v1037 = vperm.slane %v1031, %v1036
          %v1039 = vunpack.c.l.s4 1934713408
          %v1040 = vunpack.c.0.s8 %v1039
          %v1041 = vperm.slane %v1033, %v1040
          %v1042 = vrot.slane %v1029, 4
          %v1043 = vsel %vm745, %v1042, %v1017
          %v1044 = vrot.slane %v1017, 4
          %v1045 = vsel %vm745, %v1029, %v1044
          %v1047 = vunpack.c.l.s4 1934713408
          %v1048 = vunpack.c.0.s8 %v1047
          %v1049 = vperm.slane %v1043, %v1048
          %v1051 = vunpack.c.l.s4 1934713408
          %v1052 = vunpack.c.0.s8 %v1051
          %v1053 = vperm.slane %v1045, %v1052
          %v1054 = vrot.slane %v1037, 4
          %v1055 = vsel %vm745, 0.0, %v1054
          %v1056 = vrot.slane %v1041, 4
          %v1057 = vsel %vm745, 0.0, %v1056
          %v1058 = vrot.slane %v1049, 4
          %v1059 = vsel %vm745, 0.0, %v1058
          %v1060 = vrot.slane %v1053, 4
          %v1061 = vsel %vm745, 0.0, %v1060
          %v1062 = vrot.slane %v993, 4
          %v1063 = vsel %vm745, %v1062, %v985
          %v1064 = vrot.slane %v985, 4
          %v1065 = vsel %vm745, %v993, %v1064
          %v1067 = vunpack.c.l.s4 1983009808
          %v1068 = vunpack.c.0.s8 %v1067
          %v1069 = vperm.slane %v1063, %v1068
          %v1071 = vunpack.c.l.s4 1983009808
          %v1072 = vunpack.c.0.s8 %v1071
          %v1073 = vperm.slane %v1065, %v1072
          %v1074 = vrot.slane %v997, 4
          %v1075 = vsel %vm745, %v1074, %v989
          %v1076 = vrot.slane %v989, 4
          %v1077 = vsel %vm745, %v997, %v1076
          %v1079 = vunpack.c.l.s4 1983009808
          %v1080 = vunpack.c.0.s8 %v1079
          %v1081 = vperm.slane %v1075, %v1080
          %v1083 = vunpack.c.l.s4 1983009808
          %v1084 = vunpack.c.0.s8 %v1083
          %v1085 = vperm.slane %v1077, %v1084
          %v1086 = vrot.slane %v1081, 4
          %v1087 = vsel %vm745, %v1086, %v1069
          %v1088 = vrot.slane %v1069, 4
          %v1089 = vsel %vm745, %v1081, %v1088
          %v1091 = vunpack.c.l.s4 1934713408
          %v1092 = vunpack.c.0.s8 %v1091
          %v1093 = vperm.slane %v1087, %v1092
          %v1095 = vunpack.c.l.s4 1934713408
          %v1096 = vunpack.c.0.s8 %v1095
          %v1097 = vperm.slane %v1089, %v1096
          %v1098 = vrot.slane %v1085, 4
          %v1099 = vsel %vm745, %v1098, %v1073
          %v1100 = vrot.slane %v1073, 4
          %v1101 = vsel %vm745, %v1085, %v1100
          %v1103 = vunpack.c.l.s4 1934713408
          %v1104 = vunpack.c.0.s8 %v1103
          %v1105 = vperm.slane %v1099, %v1104
          %v1107 = vunpack.c.l.s4 1934713408
          %v1108 = vunpack.c.0.s8 %v1107
          %v1109 = vperm.slane %v1101, %v1108
          %v1110 = vrot.slane %v1093, 4
          %v1111 = vsel %vm745, 0.0, %v1110
          %v1112 = vrot.slane %v1097, 4
          %v1113 = vsel %vm745, 0.0, %v1112
          %v1114 = vrot.slane %v1105, 4
          %v1115 = vsel %vm745, 0.0, %v1114
          %v1116 = vrot.slane %v1109, 4
          %v1117 = vsel %vm745, 0.0, %v1116
          %v1118 = vsel %vm745, %v1056, %v1037
          %v1120 = vunpack.c.l.s4 1983009808
          %v1121 = vunpack.c.0.s8 %v1120
          %v1122 = vperm.slane %v1118, %v1121
          %v1123 = vrot.slane %v1057, 4
          %v1124 = vsel %vm745, %v1123, %v1055
          %v1126 = vunpack.c.l.s4 1983009808
          %v1127 = vunpack.c.0.s8 %v1126
          %v1128 = vperm.slane %v1124, %v1127
          %v1129 = vsel %vm745, %v1060, %v1049
          %v1131 = vunpack.c.l.s4 1983009808
          %v1132 = vunpack.c.0.s8 %v1131
          %v1133 = vperm.slane %v1129, %v1132
          %v1134 = vrot.slane %v1061, 4
          %v1135 = vsel %vm745, %v1134, %v1059
          %v1137 = vunpack.c.l.s4 1983009808
          %v1138 = vunpack.c.0.s8 %v1137
          %v1139 = vperm.slane %v1135, %v1138
          %v1140 = vrot.slane %v1128, 4
          %v1141 = vsel %vm745, %v1140, %v1122
          %v1142 = vrot.slane %v1122, 4
          %v1143 = vsel %vm745, %v1128, %v1142
          %v1145 = vunpack.c.l.s4 1934713408
          %v1146 = vunpack.c.0.s8 %v1145
          %v1147 = vperm.slane %v1141, %v1146
          %v1149 = vunpack.c.l.s4 1934713408
          %v1150 = vunpack.c.0.s8 %v1149
          %v1151 = vperm.slane %v1143, %v1150
          %v1152 = vrot.slane %v1139, 4
          %v1153 = vsel %vm745, %v1152, %v1133
          %v1154 = vrot.slane %v1133, 4
          %v1155 = vsel %vm745, %v1139, %v1154
          %v1157 = vunpack.c.l.s4 1934713408
          %v1158 = vunpack.c.0.s8 %v1157
          %v1159 = vperm.slane %v1153, %v1158
          %v1161 = vunpack.c.l.s4 1934713408
          %v1162 = vunpack.c.0.s8 %v1161
          %v1163 = vperm.slane %v1155, %v1162
          %v1164 = vrot.slane %v1159, 4
          %v1165 = vsel %vm745, %v1164, %v1147
          %v1166 = vrot.slane %v1147, 4
          %v1167 = vsel %vm745, %v1159, %v1166
          %v1168 = vrot.slane %v1163, 4
          %v1169 = vsel %vm745, %v1168, %v1151
          %v1170 = vrot.slane %v1151, 4
          %v1171 = vsel %vm745, %v1163, %v1170
          %v1172 = vsel %vm745, %v1112, %v1093
          %v1174 = vunpack.c.l.s4 1983009808
          %v1175 = vunpack.c.0.s8 %v1174
          %v1176 = vperm.slane %v1172, %v1175
          %v1177 = vrot.slane %v1113, 4
          %v1178 = vsel %vm745, %v1177, %v1111
          %v1180 = vunpack.c.l.s4 1983009808
          %v1181 = vunpack.c.0.s8 %v1180
          %v1182 = vperm.slane %v1178, %v1181
          %v1183 = vsel %vm745, %v1116, %v1105
          %v1185 = vunpack.c.l.s4 1983009808
          %v1186 = vunpack.c.0.s8 %v1185
          %v1187 = vperm.slane %v1183, %v1186
          %v1188 = vrot.slane %v1117, 4
          %v1189 = vsel %vm745, %v1188, %v1115
          %v1191 = vunpack.c.l.s4 1983009808
          %v1192 = vunpack.c.0.s8 %v1191
          %v1193 = vperm.slane %v1189, %v1192
          %v1194 = vrot.slane %v1182, 4
          %v1195 = vsel %vm745, %v1194, %v1176
          %v1196 = vrot.slane %v1176, 4
          %v1197 = vsel %vm745, %v1182, %v1196
          %v1199 = vunpack.c.l.s4 1934713408
          %v1200 = vunpack.c.0.s8 %v1199
          %v1201 = vperm.slane %v1195, %v1200
          %v1203 = vunpack.c.l.s4 1934713408
          %v1204 = vunpack.c.0.s8 %v1203
          %v1205 = vperm.slane %v1197, %v1204
          %v1206 = vrot.slane %v1193, 4
          %v1207 = vsel %vm745, %v1206, %v1187
          %v1208 = vrot.slane %v1187, 4
          %v1209 = vsel %vm745, %v1193, %v1208
          %v1211 = vunpack.c.l.s4 1934713408
          %v1212 = vunpack.c.0.s8 %v1211
          %v1213 = vperm.slane %v1207, %v1212
          %v1215 = vunpack.c.l.s4 1934713408
          %v1216 = vunpack.c.0.s8 %v1215
          %v1217 = vperm.slane %v1209, %v1216
          %v1218 = vrot.slane %v1213, 4
          %v1219 = vsel %vm745, %v1218, %v1201
          %v1220 = vrot.slane %v1201, 4
          %v1221 = vsel %vm745, %v1213, %v1220
          %v1222 = vrot.slane %v1217, 4
          %v1223 = vsel %vm745, %v1222, %v1205
          %v1224 = vrot.slane %v1205, 4
          %v1225 = vsel %vm745, %v1217, %v1224
          %v1226 = vpack.c.bf16 %v1165, %v1165
          %v1227 = vpack.c.bf16 %v1167, %v1167
          %v1228 = vpack.c.bf16 %v1169, %v1169
          %v1229 = vpack.c.bf16 %v1171, %v1171
          %v1230 = vpack.c.bf16 %v1219, %v1219
          %v1231 = vpack.c.bf16 %v1221, %v1221
          %v1232 = vpack.c.bf16 %v1223, %v1223
          %v1233 = vpack.c.bf16 %v1225, %v1225
          %1234 = vst.msk [vmem:[#allocation3] sm:$0xf] %vm973, %v1226
          %1235 = vst.msk [vmem:[#allocation3 + $0x4] sm:$0xf] %vm973, %v1227
          %1236 = vst.msk [vmem:[#allocation3 + $0x8] sm:$0xf] %vm973, %v1228
          %1237 = vst.msk [vmem:[#allocation3 + $0xc] sm:$0xf] %vm973, %v1229
          %1238 = vst.msk [vmem:[#allocation3 + $0x10] sm:$0xf] %vm973, %v1230
          %1239 = vst.msk [vmem:[#allocation3 + $0x14] sm:$0xf] %vm973, %v1231
          %1240 = vst.msk [vmem:[#allocation3 + $0x18] sm:$0xf] %vm973, %v1232
          %1241 = vst.msk [vmem:[#allocation3 + $0x1c] sm:$0xf] %vm973, %v1233
        $region104: #{tpu_custom_call.1} parent=83 // pred_fallthru
          _
        %s1242 = smul.u32 %s43, 8
        %s1243 = scalar_lea.vmem %s674, %s1242
        %v1244 = vld [vmem:[%s1243] sm:$0xff]
        %v1245 = vld [vmem:[%s1243 + $0x8] sm:$0xff]
        %v1246 = vpack.c.bf16 %v1245, %v1244
        %v1247 = vld [vmem:[#allocation4] sm:$0xf]
        %v1248 = vld [vmem:[#allocation4 + $0x4] sm:$0xf]
        %v1249 = vld [vmem:[#allocation4 + $0x8] sm:$0xf]
        %v1250 = vld [vmem:[#allocation4 + $0xc] sm:$0xf]
        %v1251 = vld [vmem:[%s3] sm:$0x1]
        %v1253 = vperm.slane %v1251, 0
        %v1259 = vunpack.c.l.b16 %v1247
        %v1260 = vunpack.c.l.b16 %v1248
        %v1261 = vunpack.c.l.b16 %v1249
        %v1262 = vunpack.c.l.b16 %v1250
        %v1263 = vpack.c.b16 %v1260, %v1259
        %v1264 = vpack.c.b16 %v1262, %v1261
        %vm1267 = vcmask 261120
        %v1269 = vsel %vm1267, %v1246, 0
        %1271 = vmatpush.bf16.msra.mxu0 0
        %1272 = vmatpush.bf16.msra.mxu0 0
        %1273 = vmatpush.bf16.msra.mxu0 0
        %1274 = vmatpush.bf16.msra.mxu0 0
        %1275 = vmatpush.bf16.msra.mxu0 0
        %1276 = vmatpush.bf16.msra.mxu0 0
        %1277 = vmatpush.bf16.msra.mxu0 %v1264
        %1278 = vmatpush.bf16.msra.mxu0 %v1263
        %1279 = vmatmul.bf16.gmra.mxu0 %v1269
        %v1280 = vpop.f32.mrf.mxu0
        %v1281 = vadd.f32 %v1253, %v1280
        %v1282 = vpop.f32.mrf.mxu0
        %v1283 = vadd.f32 %v1253, %v1282
        %1284 = vdwg.mxu0
        %1287 = vrot.lane.b32.xlu0 %v1281, 120
        %v1288 = vpop.permute.xlu0 %1287
        %1289 = vrot.lane.b32.xlu0 %v1283, 120
        %v1290 = vpop.permute.xlu0 %1289
        %1293 = vrot.lane.b32.xlu0 %v1281, 112
        %v1294 = vpop.permute.xlu0 %1293
        %1295 = vrot.lane.b32.xlu0 %v1283, 112
        %v1296 = vpop.permute.xlu0 %1295
        %1299 = vrot.lane.b32.xlu0 %v1281, 104
        %v1300 = vpop.permute.xlu0 %1299
        %1301 = vrot.lane.b32.xlu0 %v1283, 104
        %v1302 = vpop.permute.xlu0 %1301
        %v1305 = vrot.slane %v1294, 4
        %vm1306 = vcmask 1047556
        %v1307 = vsel %vm1306, %v1305, %v1281
        %v1308 = vrot.slane %v1281, 4
        %v1309 = vsel %vm1306, %v1294, %v1308
        %v1311 = vunpack.c.l.s4 1983009808
        %v1312 = vunpack.c.0.s8 %v1311
        %v1313 = vperm.slane %v1307, %v1312
        %v1315 = vunpack.c.l.s4 1983009808
        %v1316 = vunpack.c.0.s8 %v1315
        %v1317 = vperm.slane %v1309, %v1316
        %v1318 = vrot.slane %v1300, 4
        %v1319 = vsel %vm1306, %v1318, %v1288
        %v1320 = vrot.slane %v1288, 4
        %v1321 = vsel %vm1306, %v1300, %v1320
        %v1323 = vunpack.c.l.s4 1983009808
        %v1324 = vunpack.c.0.s8 %v1323
        %v1325 = vperm.slane %v1319, %v1324
        %v1327 = vunpack.c.l.s4 1983009808
        %v1328 = vunpack.c.0.s8 %v1327
        %v1329 = vperm.slane %v1321, %v1328
        %v1330 = vrot.slane %v1325, 4
        %v1331 = vsel %vm1306, %v1330, %v1313
        %v1332 = vrot.slane %v1313, 4
        %v1333 = vsel %vm1306, %v1325, %v1332
        %v1335 = vunpack.c.l.s4 1934713408
        %v1336 = vunpack.c.0.s8 %v1335
        %v1337 = vperm.slane %v1331, %v1336
        %v1339 = vunpack.c.l.s4 1934713408
        %v1340 = vunpack.c.0.s8 %v1339
        %v1341 = vperm.slane %v1333, %v1340
        %v1342 = vrot.slane %v1329, 4
        %v1343 = vsel %vm1306, %v1342, %v1317
        %v1344 = vrot.slane %v1317, 4
        %v1345 = vsel %vm1306, %v1329, %v1344
        %v1347 = vunpack.c.l.s4 1934713408
        %v1348 = vunpack.c.0.s8 %v1347
        %v1349 = vperm.slane %v1343, %v1348
        %v1351 = vunpack.c.l.s4 1934713408
        %v1352 = vunpack.c.0.s8 %v1351
        %v1353 = vperm.slane %v1345, %v1352
        %v1354 = vrot.slane %v1337, 4
        %v1355 = vsel %vm1306, 0.0, %v1354
        %v1356 = vrot.slane %v1341, 4
        %v1357 = vsel %vm1306, 0.0, %v1356
        %v1358 = vrot.slane %v1349, 4
        %v1359 = vsel %vm1306, 0.0, %v1358
        %v1360 = vrot.slane %v1353, 4
        %v1361 = vsel %vm1306, 0.0, %v1360
        %v1362 = vrot.slane %v1296, 4
        %v1363 = vsel %vm1306, %v1362, %v1283
        %v1364 = vrot.slane %v1283, 4
        %v1365 = vsel %vm1306, %v1296, %v1364
        %v1367 = vunpack.c.l.s4 1983009808
        %v1368 = vunpack.c.0.s8 %v1367
        %v1369 = vperm.slane %v1363, %v1368
        %v1371 = vunpack.c.l.s4 1983009808
        %v1372 = vunpack.c.0.s8 %v1371
        %v1373 = vperm.slane %v1365, %v1372
        %v1374 = vrot.slane %v1302, 4
        %v1375 = vsel %vm1306, %v1374, %v1290
        %v1376 = vrot.slane %v1290, 4
        %v1377 = vsel %vm1306, %v1302, %v1376
        %v1379 = vunpack.c.l.s4 1983009808
        %v1380 = vunpack.c.0.s8 %v1379
        %v1381 = vperm.slane %v1375, %v1380
        %v1383 = vunpack.c.l.s4 1983009808
        %v1384 = vunpack.c.0.s8 %v1383
        %v1385 = vperm.slane %v1377, %v1384
        %v1386 = vrot.slane %v1381, 4
        %v1387 = vsel %vm1306, %v1386, %v1369
        %v1388 = vrot.slane %v1369, 4
        %v1389 = vsel %vm1306, %v1381, %v1388
        %v1391 = vunpack.c.l.s4 1934713408
        %v1392 = vunpack.c.0.s8 %v1391
        %v1393 = vperm.slane %v1387, %v1392
        %v1395 = vunpack.c.l.s4 1934713408
        %v1396 = vunpack.c.0.s8 %v1395
        %v1397 = vperm.slane %v1389, %v1396
        %v1398 = vrot.slane %v1385, 4
        %v1399 = vsel %vm1306, %v1398, %v1373
        %v1400 = vrot.slane %v1373, 4
        %v1401 = vsel %vm1306, %v1385, %v1400
        %v1403 = vunpack.c.l.s4 1934713408
        %v1404 = vunpack.c.0.s8 %v1403
        %v1405 = vperm.slane %v1399, %v1404
        %v1407 = vunpack.c.l.s4 1934713408
        %v1408 = vunpack.c.0.s8 %v1407
        %v1409 = vperm.slane %v1401, %v1408
        %v1410 = vrot.slane %v1393, 4
        %v1411 = vsel %vm1306, 0.0, %v1410
        %v1412 = vrot.slane %v1397, 4
        %v1413 = vsel %vm1306, 0.0, %v1412
        %v1414 = vrot.slane %v1405, 4
        %v1415 = vsel %vm1306, 0.0, %v1414
        %v1416 = vrot.slane %v1409, 4
        %v1417 = vsel %vm1306, 0.0, %v1416
        %v1418 = vsel %vm1306, %v1356, %v1337
        %v1420 = vunpack.c.l.s4 1983009808
        %v1421 = vunpack.c.0.s8 %v1420
        %v1422 = vperm.slane %v1418, %v1421
        %v1423 = vrot.slane %v1357, 4
        %v1424 = vsel %vm1306, %v1423, %v1355
        %v1426 = vunpack.c.l.s4 1983009808
        %v1427 = vunpack.c.0.s8 %v1426
        %v1428 = vperm.slane %v1424, %v1427
        %v1429 = vsel %vm1306, %v1360, %v1349
        %v1431 = vunpack.c.l.s4 1983009808
        %v1432 = vunpack.c.0.s8 %v1431
        %v1433 = vperm.slane %v1429, %v1432
        %v1434 = vrot.slane %v1361, 4
        %v1435 = vsel %vm1306, %v1434, %v1359
        %v1437 = vunpack.c.l.s4 1983009808
        %v1438 = vunpack.c.0.s8 %v1437
        %v1439 = vperm.slane %v1435, %v1438
        %v1440 = vrot.slane %v1428, 4
        %v1441 = vsel %vm1306, %v1440, %v1422
        %v1442 = vrot.slane %v1422, 4
        %v1443 = vsel %vm1306, %v1428, %v1442
        %v1445 = vunpack.c.l.s4 1934713408
        %v1446 = vunpack.c.0.s8 %v1445
        %v1447 = vperm.slane %v1441, %v1446
        %v1449 = vunpack.c.l.s4 1934713408
        %v1450 = vunpack.c.0.s8 %v1449
        %v1451 = vperm.slane %v1443, %v1450
        %v1452 = vrot.slane %v1439, 4
        %v1453 = vsel %vm1306, %v1452, %v1433
        %v1454 = vrot.slane %v1433, 4
        %v1455 = vsel %vm1306, %v1439, %v1454
        %v1457 = vunpack.c.l.s4 1934713408
        %v1458 = vunpack.c.0.s8 %v1457
        %v1459 = vperm.slane %v1453, %v1458
        %v1461 = vunpack.c.l.s4 1934713408
        %v1462 = vunpack.c.0.s8 %v1461
        %v1463 = vperm.slane %v1455, %v1462
        %v1464 = vrot.slane %v1459, 4
        %v1465 = vsel %vm1306, %v1464, %v1447
        %v1466 = vrot.slane %v1447, 4
        %v1467 = vsel %vm1306, %v1459, %v1466
        %v1468 = vrot.slane %v1463, 4
        %v1469 = vsel %vm1306, %v1468, %v1451
        %v1470 = vrot.slane %v1451, 4
        %v1471 = vsel %vm1306, %v1463, %v1470
        %v1472 = vsel %vm1306, %v1412, %v1393
        %v1474 = vunpack.c.l.s4 1983009808
        %v1475 = vunpack.c.0.s8 %v1474
        %v1476 = vperm.slane %v1472, %v1475
        %v1477 = vrot.slane %v1413, 4
        %v1478 = vsel %vm1306, %v1477, %v1411
        %v1480 = vunpack.c.l.s4 1983009808
        %v1481 = vunpack.c.0.s8 %v1480
        %v1482 = vperm.slane %v1478, %v1481
        %v1483 = vsel %vm1306, %v1416, %v1405
        %v1485 = vunpack.c.l.s4 1983009808
        %v1486 = vunpack.c.0.s8 %v1485
        %v1487 = vperm.slane %v1483, %v1486
        %v1488 = vrot.slane %v1417, 4
        %v1489 = vsel %vm1306, %v1488, %v1415
        %v1491 = vunpack.c.l.s4 1983009808
        %v1492 = vunpack.c.0.s8 %v1491
        %v1493 = vperm.slane %v1489, %v1492
        %v1494 = vrot.slane %v1482, 4
        %v1495 = vsel %vm1306, %v1494, %v1476
        %v1496 = vrot.slane %v1476, 4
        %v1497 = vsel %vm1306, %v1482, %v1496
        %v1499 = vunpack.c.l.s4 1934713408
        %v1500 = vunpack.c.0.s8 %v1499
        %v1501 = vperm.slane %v1495, %v1500
        %v1503 = vunpack.c.l.s4 1934713408
        %v1504 = vunpack.c.0.s8 %v1503
        %v1505 = vperm.slane %v1497, %v1504
        %v1506 = vrot.slane %v1493, 4
        %v1507 = vsel %vm1306, %v1506, %v1487
        %v1508 = vrot.slane %v1487, 4
        %v1509 = vsel %vm1306, %v1493, %v1508
        %v1511 = vunpack.c.l.s4 1934713408
        %v1512 = vunpack.c.0.s8 %v1511
        %v1513 = vperm.slane %v1507, %v1512
        %v1515 = vunpack.c.l.s4 1934713408
        %v1516 = vunpack.c.0.s8 %v1515
        %v1517 = vperm.slane %v1509, %v1516
        %v1518 = vrot.slane %v1513, 4
        %v1519 = vsel %vm1306, %v1518, %v1501
        %v1520 = vrot.slane %v1501, 4
        %v1521 = vsel %vm1306, %v1513, %v1520
        %v1522 = vrot.slane %v1517, 4
        %v1523 = vsel %vm1306, %v1522, %v1505
        %v1524 = vrot.slane %v1505, 4
        %v1525 = vsel %vm1306, %v1517, %v1524
        %v1526 = vpack.c.bf16 %v1465, %v1465
        %v1527 = vpack.c.bf16 %v1467, %v1467
        %v1528 = vpack.c.bf16 %v1469, %v1469
        %v1529 = vpack.c.bf16 %v1471, %v1471
        %v1530 = vpack.c.bf16 %v1519, %v1519
        %v1531 = vpack.c.bf16 %v1521, %v1521
        %v1532 = vpack.c.bf16 %v1523, %v1523
        %v1533 = vpack.c.bf16 %v1525, %v1525
        %v1534 = vld [vmem:[#allocation2] sm:$0xf]
        %v1535 = vld [vmem:[#allocation2 + $0x4] sm:$0xf]
        %v1536 = vld [vmem:[#allocation2 + $0x8] sm:$0xf]
        %v1537 = vld [vmem:[#allocation2 + $0xc] sm:$0xf]
        %v1538 = vld [vmem:[#allocation2 + $0x10] sm:$0xf]
        %v1539 = vld [vmem:[#allocation2 + $0x14] sm:$0xf]
        %v1540 = vld [vmem:[#allocation2 + $0x18] sm:$0xf]
        %v1541 = vld [vmem:[#allocation2 + $0x1c] sm:$0xf]
        %vm1542 = vcmask 64512
        %v1544 = vsel %vm1542, %v1526, 0
        %v1547 = vsel %vm1542, %v1534, 0
        %1549 = vmatpush.bf16.xpose.msra.mxu0 0
        %1550 = vmatpush.bf16.xpose.msra.mxu0 0
        %1551 = vmatpush.bf16.xpose.msra.mxu0 0
        %1552 = vmatpush.bf16.xpose.msra.mxu0 0
        %1553 = vmatpush.bf16.xpose.msra.mxu0 0
        %1554 = vmatpush.bf16.xpose.msra.mxu0 0
        %1555 = vmatpush.bf16.xpose.msra.mxu0 0
        %1556 = vmatpush.bf16.xpose.msra.mxu0 %v1547
        %1557 = vmatmul.bf16.gmra.mxu0 %v1544
        %v1558 = vpop.f32.mrf.mxu0
        %v1559 = vadd.f32 0.0, %v1558
        %v1560 = vpop.f32.mrf.mxu0
        %1561 = vdwg.mxu0
        %v1563 = vsel %vm1542, %v1527, 0
        %v1566 = vsel %vm1542, %v1535, 0
        %1568 = vmatpush.bf16.xpose.msra.mxu0 0
        %1569 = vmatpush.bf16.xpose.msra.mxu0 0
        %1570 = vmatpush.bf16.xpose.msra.mxu0 0
        %1571 = vmatpush.bf16.xpose.msra.mxu0 0
        %1572 = vmatpush.bf16.xpose.msra.mxu0 0
        %1573 = vmatpush.bf16.xpose.msra.mxu0 0
        %1574 = vmatpush.bf16.xpose.msra.mxu0 0
        %1575 = vmatpush.bf16.xpose.msra.mxu0 %v1566
        %1576 = vmatmul.bf16.gmra.mxu0 %v1563
        %v1577 = vpop.f32.mrf.mxu0
        %v1578 = vadd.f32 0.0, %v1577
        %v1579 = vpop.f32.mrf.mxu0
        %1580 = vdwg.mxu0
        %v1582 = vsel %vm1542, %v1528, 0
        %v1585 = vsel %vm1542, %v1536, 0
        %1587 = vmatpush.bf16.xpose.msra.mxu0 0
        %1588 = vmatpush.bf16.xpose.msra.mxu0 0
        %1589 = vmatpush.bf16.xpose.msra.mxu0 0
        %1590 = vmatpush.bf16.xpose.msra.mxu0 0
        %1591 = vmatpush.bf16.xpose.msra.mxu0 0
        %1592 = vmatpush.bf16.xpose.msra.mxu0 0
        %1593 = vmatpush.bf16.xpose.msra.mxu0 0
        %1594 = vmatpush.bf16.xpose.msra.mxu0 %v1585
        %1595 = vmatmul.bf16.gmra.mxu0 %v1582
        %v1596 = vpop.f32.mrf.mxu0
        %v1597 = vadd.f32 0.0, %v1596
        %v1598 = vpop.f32.mrf.mxu0
        %1599 = vdwg.mxu0
        %v1601 = vsel %vm1542, %v1529, 0
        %v1604 = vsel %vm1542, %v1537, 0
        %1606 = vmatpush.bf16.xpose.msra.mxu0 0
        %1607 = vmatpush.bf16.xpose.msra.mxu0 0
        %1608 = vmatpush.bf16.xpose.msra.mxu0 0
        %1609 = vmatpush.bf16.xpose.msra.mxu0 0
        %1610 = vmatpush.bf16.xpose.msra.mxu0 0
        %1611 = vmatpush.bf16.xpose.msra.mxu0 0
        %1612 = vmatpush.bf16.xpose.msra.mxu0 0
        %1613 = vmatpush.bf16.xpose.msra.mxu0 %v1604
        %1614 = vmatmul.bf16.gmra.mxu0 %v1601
        %v1615 = vpop.f32.mrf.mxu0
        %v1616 = vadd.f32 0.0, %v1615
        %v1617 = vpop.f32.mrf.mxu0
        %1618 = vdwg.mxu0
        %v1620 = vsel %vm1542, %v1530, 0
        %v1623 = vsel %vm1542, %v1538, 0
        %1625 = vmatpush.bf16.xpose.msra.mxu0 0
        %1626 = vmatpush.bf16.xpose.msra.mxu0 0
        %1627 = vmatpush.bf16.xpose.msra.mxu0 0
        %1628 = vmatpush.bf16.xpose.msra.mxu0 0
        %1629 = vmatpush.bf16.xpose.msra.mxu0 0
        %1630 = vmatpush.bf16.xpose.msra.mxu0 0
        %1631 = vmatpush.bf16.xpose.msra.mxu0 0
        %1632 = vmatpush.bf16.xpose.msra.mxu0 %v1623
        %1633 = vmatmul.bf16.gmra.mxu0 %v1620
        %v1634 = vpop.f32.mrf.mxu0
        %v1635 = vadd.f32 0.0, %v1634
        %v1636 = vpop.f32.mrf.mxu0
        %1637 = vdwg.mxu0
        %v1639 = vsel %vm1542, %v1531, 0
        %v1642 = vsel %vm1542, %v1539, 0
        %1644 = vmatpush.bf16.xpose.msra.mxu0 0
        %1645 = vmatpush.bf16.xpose.msra.mxu0 0
        %1646 = vmatpush.bf16.xpose.msra.mxu0 0
        %1647 = vmatpush.bf16.xpose.msra.mxu0 0
        %1648 = vmatpush.bf16.xpose.msra.mxu0 0
        %1649 = vmatpush.bf16.xpose.msra.mxu0 0
        %1650 = vmatpush.bf16.xpose.msra.mxu0 0
        %1651 = vmatpush.bf16.xpose.msra.mxu0 %v1642
        %1652 = vmatmul.bf16.gmra.mxu0 %v1639
        %v1653 = vpop.f32.mrf.mxu0
        %v1654 = vadd.f32 0.0, %v1653
        %v1655 = vpop.f32.mrf.mxu0
        %1656 = vdwg.mxu0
        %v1658 = vsel %vm1542, %v1532, 0
        %v1661 = vsel %vm1542, %v1540, 0
        %1663 = vmatpush.bf16.xpose.msra.mxu0 0
        %1664 = vmatpush.bf16.xpose.msra.mxu0 0
        %1665 = vmatpush.bf16.xpose.msra.mxu0 0
        %1666 = vmatpush.bf16.xpose.msra.mxu0 0
        %1667 = vmatpush.bf16.xpose.msra.mxu0 0
        %1668 = vmatpush.bf16.xpose.msra.mxu0 0
        %1669 = vmatpush.bf16.xpose.msra.mxu0 0
        %1670 = vmatpush.bf16.xpose.msra.mxu0 %v1661
        %1671 = vmatmul.bf16.gmra.mxu0 %v1658
        %v1672 = vpop.f32.mrf.mxu0
        %v1673 = vadd.f32 0.0, %v1672
        %v1674 = vpop.f32.mrf.mxu0
        %1675 = vdwg.mxu0
        %v1677 = vsel %vm1542, %v1533, 0
        %v1680 = vsel %vm1542, %v1541, 0
        %1682 = vmatpush.bf16.xpose.msra.mxu0 0
        %1683 = vmatpush.bf16.xpose.msra.mxu0 0
        %1684 = vmatpush.bf16.xpose.msra.mxu0 0
        %1685 = vmatpush.bf16.xpose.msra.mxu0 0
        %1686 = vmatpush.bf16.xpose.msra.mxu0 0
        %1687 = vmatpush.bf16.xpose.msra.mxu0 0
        %1688 = vmatpush.bf16.xpose.msra.mxu0 0
        %1689 = vmatpush.bf16.xpose.msra.mxu0 %v1680
        %1690 = vmatmul.bf16.gmra.mxu0 %v1677
        %v1691 = vpop.f32.mrf.mxu0
        %v1692 = vadd.f32 0.0, %v1691
        %v1693 = vpop.f32.mrf.mxu0
        %1694 = vdwg.mxu0
        %v1695 = vld [vmem:[%s668] sm:$0xf]
        %v1696 = vld [vmem:[%s668 + $0x4] sm:$0xf]
        %v1697 = vunpack.c.l.bf16 %v1695
        %v1698 = vunpack.c.l.bf16 %v1696
        %v1699 = vadd.f32 %v1559, %v1697
        %v1700 = vadd.f32 %v1578, %v1697
        %v1701 = vadd.f32 %v1597, %v1697
        %v1702 = vadd.f32 %v1616, %v1697
        %v1703 = vadd.f32 %v1635, %v1698
        %v1704 = vadd.f32 %v1654, %v1698
        %v1705 = vadd.f32 %v1673, %v1698
        %v1706 = vadd.f32 %v1692, %v1698
        %v1707 = vsel %vm1542, %v1699, -inf
        %1708 = vmax.xlane.f32.xlu0 %v1707
        %v1709 = vpop.xlane.xlu0 %1708
        %v1710 = vsel %vm1542, %v1700, -inf
        %1711 = vmax.xlane.f32.xlu0 %v1710
        %v1712 = vpop.xlane.xlu0 %1711
        %v1713 = vsel %vm1542, %v1701, -inf
        %1714 = vmax.xlane.f32.xlu0 %v1713
        %v1715 = vpop.xlane.xlu0 %1714
        %v1716 = vsel %vm1542, %v1702, -inf
        %1717 = vmax.xlane.f32.xlu0 %v1716
        %v1718 = vpop.xlane.xlu0 %1717
        %v1719 = vsel %vm1542, %v1703, -inf
        %1720 = vmax.xlane.f32.xlu0 %v1719
        %v1721 = vpop.xlane.xlu0 %1720
        %v1722 = vsel %vm1542, %v1704, -inf
        %1723 = vmax.xlane.f32.xlu0 %v1722
        %v1724 = vpop.xlane.xlu0 %1723
        %v1725 = vsel %vm1542, %v1705, -inf
        %1726 = vmax.xlane.f32.xlu0 %v1725
        %v1727 = vpop.xlane.xlu0 %1726
        %v1728 = vsel %vm1542, %v1706, -inf
        %1729 = vmax.xlane.f32.xlu0 %v1728
        %v1730 = vpop.xlane.xlu0 %1729
        %v1731 = vsub.f32 %v1699, %v1709
        %v1732 = vsub.f32 %v1700, %v1712
        %v1733 = vsub.f32 %v1701, %v1715
        %v1734 = vsub.f32 %v1702, %v1718
        %v1735 = vsub.f32 %v1703, %v1721
        %v1736 = vsub.f32 %v1704, %v1724
        %v1737 = vsub.f32 %v1705, %v1727
        %v1738 = vsub.f32 %v1706, %v1730
        %v1739 = vmul.f32 %v1731, 1.442695
        %v1740 = vpow.pop %v1739
        %v1741 = vmul.f32 %v1732, 1.442695
        %v1742 = vpow.pop %v1741
        %v1743 = vmul.f32 %v1733, 1.442695
        %v1744 = vpow.pop %v1743
        %v1745 = vmul.f32 %v1734, 1.442695
        %v1746 = vpow.pop %v1745
        %v1747 = vmul.f32 %v1735, 1.442695
        %v1748 = vpow.pop %v1747
        %v1749 = vmul.f32 %v1736, 1.442695
        %v1750 = vpow.pop %v1749
        %v1751 = vmul.f32 %v1737, 1.442695
        %v1752 = vpow.pop %v1751
        %v1753 = vmul.f32 %v1738, 1.442695
        %v1754 = vpow.pop %v1753
        %v1755 = vsel %vm1542, %v1740, 0.0
        %1756 = vadd.xlane.f32.xlu0 %v1755
        %v1757 = vpop.xlane.xlu0 %1756
        %v1758 = vsel %vm1542, %v1742, 0.0
        %1759 = vadd.xlane.f32.xlu0 %v1758
        %v1760 = vpop.xlane.xlu0 %1759
        %v1761 = vsel %vm1542, %v1744, 0.0
        %1762 = vadd.xlane.f32.xlu0 %v1761
        %v1763 = vpop.xlane.xlu0 %1762
        %v1764 = vsel %vm1542, %v1746, 0.0
        %1765 = vadd.xlane.f32.xlu0 %v1764
        %v1766 = vpop.xlane.xlu0 %1765
        %v1767 = vsel %vm1542, %v1748, 0.0
        %1768 = vadd.xlane.f32.xlu0 %v1767
        %v1769 = vpop.xlane.xlu0 %1768
        %v1770 = vsel %vm1542, %v1750, 0.0
        %1771 = vadd.xlane.f32.xlu0 %v1770
        %v1772 = vpop.xlane.xlu0 %1771
        %v1773 = vsel %vm1542, %v1752, 0.0
        %1774 = vadd.xlane.f32.xlu0 %v1773
        %v1775 = vpop.xlane.xlu0 %1774
        %v1776 = vsel %vm1542, %v1754, 0.0
        %1777 = vadd.xlane.f32.xlu0 %v1776
        %v1778 = vpop.xlane.xlu0 %1777
        %v1779 = vrcp.pop %v1757
        %v1780 = vrcp.pop %v1760
        %v1781 = vrcp.pop %v1763
        %v1782 = vrcp.pop %v1766
        %v1783 = vrcp.pop %v1769
        %v1784 = vrcp.pop %v1772
        %v1785 = vrcp.pop %v1775
        %v1786 = vrcp.pop %v1778
        %v1787 = vmul.f32 %v1757, %v1779
        %v1788 = vmul.f32 %v1760, %v1780
        %v1789 = vmul.f32 %v1763, %v1781
        %v1790 = vmul.f32 %v1766, %v1782
        %v1791 = vmul.f32 %v1769, %v1783
        %v1792 = vmul.f32 %v1772, %v1784
        %v1793 = vmul.f32 %v1775, %v1785
        %v1794 = vmul.f32 %v1778, %v1786
        %v1795 = vsub.f32 2.0, %v1787
        %v1796 = vsub.f32 2.0, %v1788
        %v1797 = vsub.f32 2.0, %v1789
        %v1798 = vsub.f32 2.0, %v1790
        %v1799 = vsub.f32 2.0, %v1791
        %v1800 = vsub.f32 2.0, %v1792
        %v1801 = vsub.f32 2.0, %v1793
        %v1802 = vsub.f32 2.0, %v1794
        %v1803 = vmul.f32 %v1779, %v1795
        %v1804 = vmul.f32 %v1780, %v1796
        %v1805 = vmul.f32 %v1781, %v1797
        %v1806 = vmul.f32 %v1782, %v1798
        %v1807 = vmul.f32 %v1783, %v1799
        %v1808 = vmul.f32 %v1784, %v1800
        %v1809 = vmul.f32 %v1785, %v1801
        %v1810 = vmul.f32 %v1786, %v1802
        %v1811 = vmul.f32 %v1740, %v1803
        %v1812 = vmul.f32 %v1742, %v1804
        %v1813 = vmul.f32 %v1744, %v1805
        %v1814 = vmul.f32 %v1746, %v1806
        %v1815 = vmul.f32 %v1748, %v1807
        %v1816 = vmul.f32 %v1750, %v1808
        %v1817 = vmul.f32 %v1752, %v1809
        %v1818 = vmul.f32 %v1754, %v1810
        %v1819 = vpack.c.bf16 %v1811, %v1811
        %v1820 = vpack.c.bf16 %v1812, %v1812
        %v1821 = vpack.c.bf16 %v1813, %v1813
        %v1822 = vpack.c.bf16 %v1814, %v1814
        %v1823 = vpack.c.bf16 %v1815, %v1815
        %v1824 = vpack.c.bf16 %v1816, %v1816
        %v1825 = vpack.c.bf16 %v1817, %v1817
        %v1826 = vpack.c.bf16 %v1818, %v1818
        %vm1827 = vcmask 60416
        %1828 = vst.msk [vmem:[%s660] sm:$0xf] %vm1827, %v1819
        %1829 = vst.msk [vmem:[%s660 + $0x4] sm:$0xf] %vm1827, %v1820
        %1830 = vst.msk [vmem:[%s660 + $0x8] sm:$0xf] %vm1827, %v1821
        %1831 = vst.msk [vmem:[%s660 + $0xc] sm:$0xf] %vm1827, %v1822
        %1832 = vst.msk [vmem:[%s660 + $0x10] sm:$0xf] %vm1827, %v1823
        %1833 = vst.msk [vmem:[%s660 + $0x14] sm:$0xf] %vm1827, %v1824
        %1834 = vst.msk [vmem:[%s660 + $0x18] sm:$0xf] %vm1827, %v1825
        %1835 = vst.msk [vmem:[%s660 + $0x1c] sm:$0xf] %vm1827, %v1826
        %v1836 = vld [vmem:[#allocation3] sm:$0xf]
        %v1837 = vld [vmem:[#allocation3 + $0x4] sm:$0xf]
        %v1838 = vld [vmem:[#allocation3 + $0x8] sm:$0xf]
        %v1839 = vld [vmem:[#allocation3 + $0xc] sm:$0xf]
        %v1840 = vld [vmem:[#allocation3 + $0x10] sm:$0xf]
        %v1841 = vld [vmem:[#allocation3 + $0x14] sm:$0xf]
        %v1842 = vld [vmem:[#allocation3 + $0x18] sm:$0xf]
        %v1843 = vld [vmem:[#allocation3 + $0x1c] sm:$0xf]
        %v1845 = vsel %vm1542, %v1819, 0
        %vm1847 = vcmask 1043456
        %v1849 = vsel %vm1847, %v1836, 0
        %1851 = vmatpush.bf16.msra.mxu0 0
        %1852 = vmatpush.bf16.msra.mxu0 0
        %1853 = vmatpush.bf16.msra.mxu0 0
        %1854 = vmatpush.bf16.msra.mxu0 0
        %1855 = vmatpush.bf16.msra.mxu0 0
        %1856 = vmatpush.bf16.msra.mxu0 0
        %1857 = vmatpush.bf16.msra.mxu0 0
        %1858 = vmatpush.bf16.msra.mxu0 %v1849
        %1859 = vmatmul.bf16.gmra.mxu0 %v1845
        %v1860 = vpop.f32.mrf.mxu0
        %v1861 = vadd.f32 0.0, %v1860
        %v1862 = vpop.f32.mrf.mxu0
        %1863 = vdwg.mxu0
        %v1865 = vsel %vm1542, %v1820, 0
        %v1868 = vsel %vm1847, %v1837, 0
        %1870 = vmatpush.bf16.msra.mxu0 0
        %1871 = vmatpush.bf16.msra.mxu0 0
        %1872 = vmatpush.bf16.msra.mxu0 0
        %1873 = vmatpush.bf16.msra.mxu0 0
        %1874 = vmatpush.bf16.msra.mxu0 0
        %1875 = vmatpush.bf16.msra.mxu0 0
        %1876 = vmatpush.bf16.msra.mxu0 0
        %1877 = vmatpush.bf16.msra.mxu0 %v1868
        %1878 = vmatmul.bf16.gmra.mxu0 %v1865
        %v1879 = vpop.f32.mrf.mxu0
        %v1880 = vadd.f32 0.0, %v1879
        %v1881 = vpop.f32.mrf.mxu0
        %1882 = vdwg.mxu0
        %v1884 = vsel %vm1542, %v1821, 0
        %v1887 = vsel %vm1847, %v1838, 0
        %1889 = vmatpush.bf16.msra.mxu0 0
        %1890 = vmatpush.bf16.msra.mxu0 0
        %1891 = vmatpush.bf16.msra.mxu0 0
        %1892 = vmatpush.bf16.msra.mxu0 0
        %1893 = vmatpush.bf16.msra.mxu0 0
        %1894 = vmatpush.bf16.msra.mxu0 0
        %1895 = vmatpush.bf16.msra.mxu0 0
        %1896 = vmatpush.bf16.msra.mxu0 %v1887
        %1897 = vmatmul.bf16.gmra.mxu0 %v1884
        %v1898 = vpop.f32.mrf.mxu0
        %v1899 = vadd.f32 0.0, %v1898
        %v1900 = vpop.f32.mrf.mxu0
        %1901 = vdwg.mxu0
        %v1903 = vsel %vm1542, %v1822, 0
        %v1906 = vsel %vm1847, %v1839, 0
        %1908 = vmatpush.bf16.msra.mxu0 0
        %1909 = vmatpush.bf16.msra.mxu0 0
        %1910 = vmatpush.bf16.msra.mxu0 0
        %1911 = vmatpush.bf16.msra.mxu0 0
        %1912 = vmatpush.bf16.msra.mxu0 0
        %1913 = vmatpush.bf16.msra.mxu0 0
        %1914 = vmatpush.bf16.msra.mxu0 0
        %1915 = vmatpush.bf16.msra.mxu0 %v1906
        %1916 = vmatmul.bf16.gmra.mxu0 %v1903
        %v1917 = vpop.f32.mrf.mxu0
        %v1918 = vadd.f32 0.0, %v1917
        %v1919 = vpop.f32.mrf.mxu0
        %1920 = vdwg.mxu0
        %v1922 = vsel %vm1542, %v1823, 0
        %v1925 = vsel %vm1847, %v1840, 0
        %1927 = vmatpush.bf16.msra.mxu0 0
        %1928 = vmatpush.bf16.msra.mxu0 0
        %1929 = vmatpush.bf16.msra.mxu0 0
        %1930 = vmatpush.bf16.msra.mxu0 0
        %1931 = vmatpush.bf16.msra.mxu0 0
        %1932 = vmatpush.bf16.msra.mxu0 0
        %1933 = vmatpush.bf16.msra.mxu0 0
        %1934 = vmatpush.bf16.msra.mxu0 %v1925
        %1935 = vmatmul.bf16.gmra.mxu0 %v1922
        %v1936 = vpop.f32.mrf.mxu0
        %v1937 = vadd.f32 0.0, %v1936
        %v1938 = vpop.f32.mrf.mxu0
        %1939 = vdwg.mxu0
        %v1941 = vsel %vm1542, %v1824, 0
        %v1944 = vsel %vm1847, %v1841, 0
        %1946 = vmatpush.bf16.msra.mxu0 0
        %1947 = vmatpush.bf16.msra.mxu0 0
        %1948 = vmatpush.bf16.msra.mxu0 0
        %1949 = vmatpush.bf16.msra.mxu0 0
        %1950 = vmatpush.bf16.msra.mxu0 0
        %1951 = vmatpush.bf16.msra.mxu0 0
        %1952 = vmatpush.bf16.msra.mxu0 0
        %1953 = vmatpush.bf16.msra.mxu0 %v1944
        %1954 = vmatmul.bf16.gmra.mxu0 %v1941
        %v1955 = vpop.f32.mrf.mxu0
        %v1956 = vadd.f32 0.0, %v1955
        %v1957 = vpop.f32.mrf.mxu0
        %1958 = vdwg.mxu0
        %v1960 = vsel %vm1542, %v1825, 0
        %v1963 = vsel %vm1847, %v1842, 0
        %1965 = vmatpush.bf16.msra.mxu0 0
        %1966 = vmatpush.bf16.msra.mxu0 0
        %1967 = vmatpush.bf16.msra.mxu0 0
        %1968 = vmatpush.bf16.msra.mxu0 0
        %1969 = vmatpush.bf16.msra.mxu0 0
        %1970 = vmatpush.bf16.msra.mxu0 0
        %1971 = vmatpush.bf16.msra.mxu0 0
        %1972 = vmatpush.bf16.msra.mxu0 %v1963
        %1973 = vmatmul.bf16.gmra.mxu0 %v1960
        %v1974 = vpop.f32.mrf.mxu0
        %v1975 = vadd.f32 0.0, %v1974
        %v1976 = vpop.f32.mrf.mxu0
        %1977 = vdwg.mxu0
        %v1979 = vsel %vm1542, %v1826, 0
        %v1982 = vsel %vm1847, %v1843, 0
        %1984 = vmatpush.bf16.msra.mxu0 0
        %1985 = vmatpush.bf16.msra.mxu0 0
        %1986 = vmatpush.bf16.msra.mxu0 0
        %1987 = vmatpush.bf16.msra.mxu0 0
        %1988 = vmatpush.bf16.msra.mxu0 0
        %1989 = vmatpush.bf16.msra.mxu0 0
        %1990 = vmatpush.bf16.msra.mxu0 0
        %1991 = vmatpush.bf16.msra.mxu0 %v1982
        %1992 = vmatmul.bf16.gmra.mxu0 %v1979
        %v1993 = vpop.f32.mrf.mxu0
        %v1994 = vadd.f32 0.0, %v1993
        %v1995 = vpop.f32.mrf.mxu0
        %1996 = vdwg.mxu0
        %v1997 = vrot.slane %v1899, 4
        %v1998 = vsel %vm1306, %v1997, %v1861
        %v1999 = vrot.slane %v1861, 4
        %v2000 = vsel %vm1306, %v1899, %v1999
        %v2002 = vunpack.c.l.s4 1983009808
        %v2003 = vunpack.c.0.s8 %v2002
        %v2004 = vperm.slane %v1998, %v2003
        %v2006 = vunpack.c.l.s4 1983009808
        %v2007 = vunpack.c.0.s8 %v2006
        %v2008 = vperm.slane %v2000, %v2007
        %v2009 = vrot.slane %v1918, 4
        %v2010 = vsel %vm1306, %v2009, %v1880
        %v2011 = vrot.slane %v1880, 4
        %v2012 = vsel %vm1306, %v1918, %v2011
        %v2014 = vunpack.c.l.s4 1983009808
        %v2015 = vunpack.c.0.s8 %v2014
        %v2016 = vperm.slane %v2010, %v2015
        %v2018 = vunpack.c.l.s4 1983009808
        %v2019 = vunpack.c.0.s8 %v2018
        %v2020 = vperm.slane %v2012, %v2019
        %v2021 = vrot.slane %v2016, 4
        %v2022 = vsel %vm1306, %v2021, %v2004
        %v2023 = vrot.slane %v2004, 4
        %v2024 = vsel %vm1306, %v2016, %v2023
        %v2026 = vunpack.c.l.s4 1934713408
        %v2027 = vunpack.c.0.s8 %v2026
        %v2028 = vperm.slane %v2022, %v2027
        %v2030 = vunpack.c.l.s4 1934713408
        %v2031 = vunpack.c.0.s8 %v2030
        %v2032 = vperm.slane %v2024, %v2031
        %v2033 = vrot.slane %v2020, 4
        %v2034 = vsel %vm1306, %v2033, %v2008
        %v2035 = vrot.slane %v2008, 4
        %v2036 = vsel %vm1306, %v2020, %v2035
        %v2038 = vunpack.c.l.s4 1934713408
        %v2039 = vunpack.c.0.s8 %v2038
        %v2040 = vperm.slane %v2034, %v2039
        %v2042 = vunpack.c.l.s4 1934713408
        %v2043 = vunpack.c.0.s8 %v2042
        %v2044 = vperm.slane %v2036, %v2043
        %v2045 = vrot.slane %v2028, 4
        %v2046 = vsel %vm1306, 0.0, %v2045
        %v2047 = vrot.slane %v2032, 4
        %v2048 = vsel %vm1306, 0.0, %v2047
        %v2049 = vrot.slane %v2040, 4
        %v2050 = vsel %vm1306, 0.0, %v2049
        %v2051 = vrot.slane %v2044, 4
        %v2052 = vsel %vm1306, 0.0, %v2051
        %v2053 = vrot.slane %v1975, 4
        %v2054 = vsel %vm1306, %v2053, %v1937
        %v2055 = vrot.slane %v1937, 4
        %v2056 = vsel %vm1306, %v1975, %v2055
        %v2058 = vunpack.c.l.s4 1983009808
        %v2059 = vunpack.c.0.s8 %v2058
        %v2060 = vperm.slane %v2054, %v2059
        %v2062 = vunpack.c.l.s4 1983009808
        %v2063 = vunpack.c.0.s8 %v2062
        %v2064 = vperm.slane %v2056, %v2063
        %v2065 = vrot.slane %v1994, 4
        %v2066 = vsel %vm1306, %v2065, %v1956
        %v2067 = vrot.slane %v1956, 4
        %v2068 = vsel %vm1306, %v1994, %v2067
        %v2070 = vunpack.c.l.s4 1983009808
        %v2071 = vunpack.c.0.s8 %v2070
        %v2072 = vperm.slane %v2066, %v2071
        %v2074 = vunpack.c.l.s4 1983009808
        %v2075 = vunpack.c.0.s8 %v2074
        %v2076 = vperm.slane %v2068, %v2075
        %v2077 = vrot.slane %v2072, 4
        %v2078 = vsel %vm1306, %v2077, %v2060
        %v2079 = vrot.slane %v2060, 4
        %v2080 = vsel %vm1306, %v2072, %v2079
        %v2082 = vunpack.c.l.s4 1934713408
        %v2083 = vunpack.c.0.s8 %v2082
        %v2084 = vperm.slane %v2078, %v2083
        %v2086 = vunpack.c.l.s4 1934713408
        %v2087 = vunpack.c.0.s8 %v2086
        %v2088 = vperm.slane %v2080, %v2087
        %v2089 = vrot.slane %v2076, 4
        %v2090 = vsel %vm1306, %v2089, %v2064
        %v2091 = vrot.slane %v2064, 4
        %v2092 = vsel %vm1306, %v2076, %v2091
        %v2094 = vunpack.c.l.s4 1934713408
        %v2095 = vunpack.c.0.s8 %v2094
        %v2096 = vperm.slane %v2090, %v2095
        %v2098 = vunpack.c.l.s4 1934713408
        %v2099 = vunpack.c.0.s8 %v2098
        %v2100 = vperm.slane %v2092, %v2099
        %v2101 = vrot.slane %v2084, 4
        %v2102 = vsel %vm1306, 0.0, %v2101
        %v2103 = vrot.slane %v2088, 4
        %v2104 = vsel %vm1306, 0.0, %v2103
        %v2105 = vrot.slane %v2096, 4
        %v2106 = vsel %vm1306, 0.0, %v2105
        %v2107 = vrot.slane %v2100, 4
        %v2108 = vsel %vm1306, 0.0, %v2107
        %v2109 = vsel %vm1306, %v2047, %v2028
        %v2111 = vunpack.c.l.s4 1983009808
        %v2112 = vunpack.c.0.s8 %v2111
        %v2113 = vperm.slane %v2109, %v2112
        %v2114 = vrot.slane %v2048, 4
        %v2115 = vsel %vm1306, %v2114, %v2046
        %v2117 = vunpack.c.l.s4 1983009808
        %v2118 = vunpack.c.0.s8 %v2117
        %v2119 = vperm.slane %v2115, %v2118
        %v2120 = vsel %vm1306, %v2051, %v2040
        %v2122 = vunpack.c.l.s4 1983009808
        %v2123 = vunpack.c.0.s8 %v2122
        %v2124 = vperm.slane %v2120, %v2123
        %v2125 = vrot.slane %v2052, 4
        %v2126 = vsel %vm1306, %v2125, %v2050
        %v2128 = vunpack.c.l.s4 1983009808
        %v2129 = vunpack.c.0.s8 %v2128
        %v2130 = vperm.slane %v2126, %v2129
        %v2131 = vrot.slane %v2119, 4
        %v2132 = vsel %vm1306, %v2131, %v2113
        %v2133 = vrot.slane %v2113, 4
        %v2134 = vsel %vm1306, %v2119, %v2133
        %v2136 = vunpack.c.l.s4 1934713408
        %v2137 = vunpack.c.0.s8 %v2136
        %v2138 = vperm.slane %v2132, %v2137
        %v2140 = vunpack.c.l.s4 1934713408
        %v2141 = vunpack.c.0.s8 %v2140
        %v2142 = vperm.slane %v2134, %v2141
        %v2143 = vrot.slane %v2130, 4
        %v2144 = vsel %vm1306, %v2143, %v2124
        %v2145 = vrot.slane %v2124, 4
        %v2146 = vsel %vm1306, %v2130, %v2145
        %v2148 = vunpack.c.l.s4 1934713408
        %v2149 = vunpack.c.0.s8 %v2148
        %v2150 = vperm.slane %v2144, %v2149
        %v2152 = vunpack.c.l.s4 1934713408
        %v2153 = vunpack.c.0.s8 %v2152
        %v2154 = vperm.slane %v2146, %v2153
        %v2155 = vrot.slane %v2150, 4
        %v2156 = vsel %vm1306, %v2155, %v2138
        %v2157 = vrot.slane %v2138, 4
        %v2158 = vsel %vm1306, %v2150, %v2157
        %v2159 = vrot.slane %v2154, 4
        %v2160 = vsel %vm1306, %v2159, %v2142
        %v2161 = vrot.slane %v2142, 4
        %v2162 = vsel %vm1306, %v2154, %v2161
        %v2163 = vsel %vm1306, %v2103, %v2084
        %v2165 = vunpack.c.l.s4 1983009808
        %v2166 = vunpack.c.0.s8 %v2165
        %v2167 = vperm.slane %v2163, %v2166
        %v2168 = vrot.slane %v2104, 4
        %v2169 = vsel %vm1306, %v2168, %v2102
        %v2171 = vunpack.c.l.s4 1983009808
        %v2172 = vunpack.c.0.s8 %v2171
        %v2173 = vperm.slane %v2169, %v2172
        %v2174 = vsel %vm1306, %v2107, %v2096
        %v2176 = vunpack.c.l.s4 1983009808
        %v2177 = vunpack.c.0.s8 %v2176
        %v2178 = vperm.slane %v2174, %v2177
        %v2179 = vrot.slane %v2108, 4
        %v2180 = vsel %vm1306, %v2179, %v2106
        %v2182 = vunpack.c.l.s4 1983009808
        %v2183 = vunpack.c.0.s8 %v2182
        %v2184 = vperm.slane %v2180, %v2183
        %v2185 = vrot.slane %v2173, 4
        %v2186 = vsel %vm1306, %v2185, %v2167
        %v2187 = vrot.slane %v2167, 4
        %v2188 = vsel %vm1306, %v2173, %v2187
        %v2190 = vunpack.c.l.s4 1934713408
        %v2191 = vunpack.c.0.s8 %v2190
        %v2192 = vperm.slane %v2186, %v2191
        %v2194 = vunpack.c.l.s4 1934713408
        %v2195 = vunpack.c.0.s8 %v2194
        %v2196 = vperm.slane %v2188, %v2195
        %v2197 = vrot.slane %v2184, 4
        %v2198 = vsel %vm1306, %v2197, %v2178
        %v2199 = vrot.slane %v2178, 4
        %v2200 = vsel %vm1306, %v2184, %v2199
        %v2202 = vunpack.c.l.s4 1934713408
        %v2203 = vunpack.c.0.s8 %v2202
        %v2204 = vperm.slane %v2198, %v2203
        %v2206 = vunpack.c.l.s4 1934713408
        %v2207 = vunpack.c.0.s8 %v2206
        %v2208 = vperm.slane %v2200, %v2207
        %v2209 = vrot.slane %v2204, 4
        %v2210 = vsel %vm1306, %v2209, %v2192
        %v2211 = vrot.slane %v2192, 4
        %v2212 = vsel %vm1306, %v2204, %v2211
        %v2213 = vrot.slane %v2208, 4
        %v2214 = vsel %vm1306, %v2213, %v2196
        %v2215 = vrot.slane %v2196, 4
        %v2216 = vsel %vm1306, %v2208, %v2215
        %2219 = vrot.lane.b32.xlu0 %v2158, 8
        %v2220 = vpop.permute.xlu0 %2219
        %2221 = vrot.lane.b32.xlu0 %v2212, 8
        %v2222 = vpop.permute.xlu0 %2221
        %2227 = vrot.lane.b32.xlu0 %v2160, 16
        %v2228 = vpop.permute.xlu0 %2227
        %2229 = vrot.lane.b32.xlu0 %v2214, 16
        %v2230 = vpop.permute.xlu0 %2229
        %2235 = vrot.lane.b32.xlu0 %v2162, 24
        %v2236 = vpop.permute.xlu0 %2235
        %2237 = vrot.lane.b32.xlu0 %v2216, 24
        %v2238 = vpop.permute.xlu0 %2237
        %v2241 = vsel %vm1542, %v2156, %v2220
        %v2242 = vsel %vm1542, %v2210, %v2222
        %vm2243 = vcmask 130048
        %v2244 = vsel %vm2243, %v2241, %v2228
        %v2245 = vsel %vm2243, %v2242, %v2230
        %vm2246 = vcmask 195584
        %v2247 = vsel %vm2246, %v2244, %v2236
        %v2248 = vsel %vm2246, %v2245, %v2238
        %v2249 = vpack.c.bf16 %v2248, %v2247
        %v2250 = vld [vmem:[#allocation9] sm:$0xf]
        %v2251 = vld [vmem:[#allocation9 + $0x4] sm:$0xf]
        %v2252 = vld [vmem:[#allocation9 + $0x8] sm:$0xf]
        %v2253 = vld [vmem:[#allocation9 + $0xc] sm:$0xf]
        %v2254 = vld [vmem:[%s7] sm:$0x1]
        %v2256 = vperm.slane %v2254, 0
        %v2262 = vunpack.c.l.b16 %v2250
        %v2263 = vunpack.c.l.b16 %v2251
        %v2264 = vunpack.c.l.b16 %v2252
        %v2265 = vunpack.c.l.b16 %v2253
        %v2266 = vpack.c.b16 %v2263, %v2262
        %v2267 = vpack.c.b16 %v2265, %v2264
        %v2271 = vsel %vm1267, %v2249, 0
        %2273 = vmatpush.bf16.msra.mxu0 0
        %2274 = vmatpush.bf16.msra.mxu0 0
        %2275 = vmatpush.bf16.msra.mxu0 0
        %2276 = vmatpush.bf16.msra.mxu0 0
        %2277 = vmatpush.bf16.msra.mxu0 0
        %2278 = vmatpush.bf16.msra.mxu0 0
        %2279 = vmatpush.bf16.msra.mxu0 %v2267
        %2280 = vmatpush.bf16.msra.mxu0 %v2266
        %2281 = vmatmul.bf16.gmra.mxu0 %v2271
        %v2282 = vpop.f32.mrf.mxu0
        %v2283 = vadd.f32 %v2256, %v2282
        %v2284 = vpop.f32.mrf.mxu0
        %v2285 = vadd.f32 %v2256, %v2284
        %2286 = vdwg.mxu0
        %v2287 = vadd.f32 %v2283, %v1244
        %v2288 = vadd.f32 %v2285, %v1245
        %v2289 = vadd.f32 %v1244, %v2287
        %v2290 = vadd.f32 %v1245, %v2288
        %v2291 = vsel %vm1267, %v2289, 0.0
        %2292 = vadd.xlane.f32.xlu0 %v2291
        %v2293 = vpop.xlane.xlu0 %2292
        %v2294 = vsel %vm1267, %v2290, 0.0
        %2295 = vadd.xlane.f32.xlu0 %v2294
        %v2296 = vpop.xlane.xlu0 %2295
        %v2297 = vrcp.pop 32.0
        %v2298 = vmul.f32 32.0, %v2297
        %v2299 = vsub.f32 1.0, %v2298
        %v2300 = vmul.f32 %v2297, %v2299
        %v2301 = vadd.f32 %v2297, %v2300
        %vm2302 = vweird.f32 %v2297
        %v2303 = vsel %vm2302, %v2297, %v2301
        %v2304 = vmul.f32 %v2293, %v2303
        %v2305 = vmul.f32 %v2296, %v2303
        %v2306 = vsub.f32 %v2289, %v2304
        %v2307 = vsub.f32 %v2290, %v2305
        %v2308 = vmul.f32 %v2306, %v2306
        %v2309 = vmul.f32 %v2307, %v2307
        %v2310 = vsel %vm1267, %v2308, 0.0
        %2311 = vadd.xlane.f32.xlu0 %v2310
        %v2312 = vpop.xlane.xlu0 %2311
        %v2313 = vsel %vm1267, %v2309, 0.0
        %2314 = vadd.xlane.f32.xlu0 %v2313
        %v2315 = vpop.xlane.xlu0 %2314
        %v2316 = vmul.f32 %v2312, %v2303
        %v2317 = vmul.f32 %v2315, %v2303
        %v2318 = vadd.f32 %v2316, 1e-06
        %v2319 = vadd.f32 %v2317, 1e-06
        %v2320 = vrsqrt.pop %v2318
        %v2321 = vmul.f32 %v2320, %v2318
        %v2322 = vmul.f32 %v2321, %v2320
        %v2323 = vmul.f32 0.5, %v2322
        %v2324 = vsub.f32 1.5, %v2323
        %v2325 = vmul.f32 %v2320, %v2324
        %vm2326 = vweird.f32 %v2318
        %vm2327 = vweird.f32 %v2320
        %vm2328 = vmor %vm2326, %vm2327
        %v2329 = vsel %vm2328, %v2320, %v2325
        %v2330 = vrsqrt.pop %v2319
        %v2331 = vmul.f32 %v2330, %v2319
        %v2332 = vmul.f32 %v2331, %v2330
        %v2333 = vmul.f32 0.5, %v2332
        %v2334 = vsub.f32 1.5, %v2333
        %v2335 = vmul.f32 %v2330, %v2334
        %vm2336 = vweird.f32 %v2319
        %vm2337 = vweird.f32 %v2330
        %vm2338 = vmor %vm2336, %vm2337
        %v2339 = vsel %vm2338, %v2330, %v2335
        %v2340 = vmul.f32 %v2306, %v2329
        %v2341 = vmul.f32 %v2307, %v2339
        %v2342 = vld [vmem:[%s8] sm:$0x1]
        %v2344 = vperm.slane %v2342, 0
        %v2346 = vmul.f32 %v2340, %v2344
        %v2347 = vmul.f32 %v2341, %v2344
        %v2348 = vld [vmem:[%s9] sm:$0x1]
        %v2350 = vperm.slane %v2348, 0
        %v2352 = vadd.f32 %v2346, %v2350
        %v2353 = vadd.f32 %v2347, %v2350
        %v2354 = vpack.c.bf16 %v2353, %v2352
        %v2355 = vld [vmem:[#allocation10] sm:$0xf]
        %v2356 = vld [vmem:[#allocation10 + $0x4] sm:$0xf]
        %v2357 = vld [vmem:[#allocation10 + $0x8] sm:$0xf]
        %v2358 = vld [vmem:[#allocation10 + $0xc] sm:$0xf]
        %v2359 = vld [vmem:[%s11] sm:$0x1]
        %v2361 = vperm.slane %v2359, 0
        %v2367 = vunpack.c.l.b16 %v2355
        %v2368 = vunpack.c.l.b16 %v2356
        %v2369 = vunpack.c.l.b16 %v2357
        %v2370 = vunpack.c.l.b16 %v2358
        %v2371 = vpack.c.b16 %v2368, %v2367
        %v2372 = vpack.c.b16 %v2370, %v2369
        %v2376 = vsel %vm1267, %v2354, 0
        %2378 = vmatpush.bf16.msra.mxu0 0
        %2379 = vmatpush.bf16.msra.mxu0 0
        %2380 = vmatpush.bf16.msra.mxu0 0
        %2381 = vmatpush.bf16.msra.mxu0 0
        %2382 = vmatpush.bf16.msra.mxu0 0
        %2383 = vmatpush.bf16.msra.mxu0 0
        %2384 = vmatpush.bf16.msra.mxu0 %v2372
        %2385 = vmatpush.bf16.msra.mxu0 %v2371
        %2386 = vmatmul.bf16.gmra.mxu0 %v2376
        %v2387 = vpop.f32.mrf.mxu0
        %v2388 = vadd.f32 %v2361, %v2387
        %v2389 = vpop.f32.mrf.mxu0
        %v2390 = vadd.f32 %v2361, %v2389
        %2391 = vdwg.mxu0
        %v2392 = vmax.f32 %v2388, 0.0
        %v2393 = vmax.f32 %v2390, 0.0
        %v2394 = vpack.c.bf16 %v2393, %v2392
        %v2395 = vld [vmem:[%s12] sm:$0xf]
        %v2396 = vld [vmem:[%s12 + $0x4] sm:$0xf]
        %v2397 = vld [vmem:[%s12 + $0x8] sm:$0xf]
        %v2398 = vld [vmem:[%s12 + $0xc] sm:$0xf]
        %v2399 = vld [vmem:[%s12 + $0x10] sm:$0xf]
        %v2400 = vld [vmem:[%s12 + $0x14] sm:$0xf]
        %v2401 = vld [vmem:[%s12 + $0x18] sm:$0xf]
        %v2402 = vld [vmem:[%s12 + $0x1c] sm:$0xf]
        %v2403 = vld [vmem:[%s13] sm:$0x1]
        %v2405 = vperm.slane %v2403, 0
        %v2415 = vunpack.c.l.b16 %v2395
        %v2416 = vunpack.c.l.b16 %v2396
        %v2417 = vunpack.c.l.b16 %v2397
        %v2418 = vunpack.c.l.b16 %v2398
        %v2419 = vunpack.c.l.b16 %v2399
        %v2420 = vunpack.c.l.b16 %v2400
        %v2421 = vunpack.c.l.b16 %v2401
        %v2422 = vunpack.c.l.b16 %v2402
        %v2423 = vpack.c.b16 %v2416, %v2415
        %v2424 = vpack.c.b16 %v2418, %v2417
        %v2425 = vpack.c.b16 %v2420, %v2419
        %v2426 = vpack.c.b16 %v2422, %v2421
        %vm2431 = vcmask 523264
        %v2433 = vsel %vm2431, %v2394, 0
        %2435 = vmatpush.bf16.msra.mxu0 0
        %2436 = vmatpush.bf16.msra.mxu0 0
        %2437 = vmatpush.bf16.msra.mxu0 0
        %2438 = vmatpush.bf16.msra.mxu0 0
        %2439 = vmatpush.bf16.msra.mxu0 %v2426
        %2440 = vmatpush.bf16.msra.mxu0 %v2425
        %2441 = vmatpush.bf16.msra.mxu0 %v2424
        %2442 = vmatpush.bf16.msra.mxu0 %v2423
        %2443 = vmatmul.bf16.gmra.mxu0 %v2433
        %v2444 = vpop.f32.mrf.mxu0
        %v2445 = vadd.f32 %v2405, %v2444
        %v2446 = vpop.f32.mrf.mxu0
        %v2447 = vadd.f32 %v2405, %v2446
        %2448 = vdwg.mxu0
        %v2449 = vadd.f32 %v2352, %v2445
        %v2450 = vadd.f32 %v2353, %v2447
        %v2451 = vsel %vm1267, %v2449, 0.0
        %2452 = vadd.xlane.f32.xlu0 %v2451
        %v2453 = vpop.xlane.xlu0 %2452
        %v2454 = vsel %vm1267, %v2450, 0.0
        %2455 = vadd.xlane.f32.xlu0 %v2454
        %v2456 = vpop.xlane.xlu0 %2455
        %v2457 = vmul.f32 %v2453, %v2303
        %v2458 = vmul.f32 %v2456, %v2303
        %v2459 = vsub.f32 %v2449, %v2457
        %v2460 = vsub.f32 %v2450, %v2458
        %v2461 = vmul.f32 %v2459, %v2459
        %v2462 = vmul.f32 %v2460, %v2460
        %v2463 = vsel %vm1267, %v2461, 0.0
        %2464 = vadd.xlane.f32.xlu0 %v2463
        %v2465 = vpop.xlane.xlu0 %2464
        %v2466 = vsel %vm1267, %v2462, 0.0
        %2467 = vadd.xlane.f32.xlu0 %v2466
        %v2468 = vpop.xlane.xlu0 %2467
        %v2469 = vmul.f32 %v2465, %v2303
        %v2470 = vmul.f32 %v2468, %v2303
        %v2471 = vadd.f32 %v2469, 1e-06
        %v2472 = vadd.f32 %v2470, 1e-06
        %v2473 = vrsqrt.pop %v2471
        %v2474 = vmul.f32 %v2473, %v2471
        %v2475 = vmul.f32 %v2474, %v2473
        %v2476 = vmul.f32 0.5, %v2475
        %v2477 = vsub.f32 1.5, %v2476
        %v2478 = vmul.f32 %v2473, %v2477
        %vm2479 = vweird.f32 %v2471
        %vm2480 = vweird.f32 %v2473
        %vm2481 = vmor %vm2479, %vm2480
        %v2482 = vsel %vm2481, %v2473, %v2478
        %v2483 = vrsqrt.pop %v2472
        %v2484 = vmul.f32 %v2483, %v2472
        %v2485 = vmul.f32 %v2484, %v2483
        %v2486 = vmul.f32 0.5, %v2485
        %v2487 = vsub.f32 1.5, %v2486
        %v2488 = vmul.f32 %v2483, %v2487
        %vm2489 = vweird.f32 %v2472
        %vm2490 = vweird.f32 %v2483
        %vm2491 = vmor %vm2489, %vm2490
        %v2492 = vsel %vm2491, %v2483, %v2488
        %v2493 = vmul.f32 %v2459, %v2482
        %v2494 = vmul.f32 %v2460, %v2492
        %v2495 = vld [vmem:[%s14] sm:$0x1]
        %v2497 = vperm.slane %v2495, 0
        %v2499 = vmul.f32 %v2493, %v2497
        %v2500 = vmul.f32 %v2494, %v2497
        %v2501 = vld [vmem:[%s15] sm:$0x1]
        %v2503 = vperm.slane %v2501, 0
        %v2505 = vadd.f32 %v2499, %v2503
        %v2506 = vadd.f32 %v2500, %v2503
        %2507 = vst.msk [vmem:[%s653] sm:$0xff] %vm1267, %v2505
        %2508 = vst.msk [vmem:[%s653 + $0x8] sm:$0xff] %vm1267, %v2506
        %s2509 = sand.u32 %s408, 1
        %s2510 = scalar_lea.sflag [#allocation6], %s2509
        %s2511 = sand.u32 %s408, 1
        %s2512 = smul.addr %s2511, 16
        %s2513 = scalar_lea.vmem [#allocation12], %s2512
        %s2514 = sand.u32 %s436, 1
        %s2515 = scalar_lea.sflag [#allocation14], %s2514
        %s2516 = sand.u32 %s436, 1
        %s2517 = smul.addr %s2516, 32
        %s2518 = scalar_lea.vmem [#allocation13], %s2517
        // Predicated region
        $region105: #{tpu_custom_call.1} parent=83 // pred_check
          %p2519 = pneg %p418
        $region106: #{tpu_custom_call.1} parent=83 // pred_check_branch
          %2521 = sbr.rel (%p2519) target = $region108
        $region107: #{tpu_custom_call.1} parent=83 // pred_region
          %s2522 = smul.u32 2, %s42
          %2524 = vsyncadd %s2510, 0
          %s2525 = sadd.s32 %s43, %s2522
          %s2526 = smul.addr %s2525, 8
          %s2527 = scalar_lea.hbm %s16, %s2526
          %s2528 = sshll.u32 %s2513, 4
          %s2529 = int_to_ptr.vmem [resolvable:$true] %s2528
          %s2530 = sshll.u32 %s2527, 4
          %s2531 = int_to_ptr.hbm [resolvable:$true] %s2530
          %2536 = dma.vmem_to_hbm [thread:$0]  %s2529, 256, %s2531, %s2510, 128, 128, 8
        $region108: #{tpu_custom_call.1} parent=83 // pred_fallthru
          _
        // Predicated region
        $region109: #{tpu_custom_call.1} parent=83 // pred_check
          %p2537 = pneg %p446
        $region110: #{tpu_custom_call.1} parent=83 // pred_check_branch
          %2539 = sbr.rel (%p2537) target = $region112
        $region111: #{tpu_custom_call.1} parent=83 // pred_region
          %s2540 = smul.u32 2, %s42
          %2542 = vsyncadd %s2515, 0
          %s2543 = smul.addr %s2540, 4
          %s2544 = sadd.s32 %s43, %s2543
          %s2545 = smul.addr %s2544, 4
          %s2546 = scalar_lea.hbm %s17, %s2545
          %s2547 = sshll.u32 %s2518, 4
          %s2548 = int_to_ptr.vmem [resolvable:$true] %s2547
          %s2549 = sshll.u32 %s2546, 4
          %s2550 = int_to_ptr.hbm [resolvable:$true] %s2549
          %2555 = dma.vmem_to_hbm [thread:$0]  %s2548, 512, %s2550, %s2515, 64, 64, 4
        $region112: #{tpu_custom_call.1} parent=83 // pred_fallthru
          _
      $region84: #{tpu_custom_call.1} parent=5 // pred_fallthru
        _
      %p2556 = scmp.le.s32.totalorder 2, %s33
      // Predicated region
      $region113: #{tpu_custom_call.1} parent=5 // pred_check
        %p2557 = pneg %p2556
      $region114: #{tpu_custom_call.1} parent=5 // pred_check_branch
        %2559 = sbr.rel (%p2557) target = $region116
      $region115: #{tpu_custom_call.1} parent=5 // pred_region
        %s2560 = ssub.s32 %s33, 2
        // Predicated region
        $region117: #{tpu_custom_call.1} parent=115 // pred_check
          %p2561 = pneg %p424
        $region118: #{tpu_custom_call.1} parent=115 // pred_check_branch
          %2563 = sbr.rel (%p2561) target = $region120
        $region119: #{tpu_custom_call.1} parent=115 // pred_region
          %s2564 = sand.u32 %s409, 1
          %s2565 = scalar_lea.sflag [#allocation6], %s2564
          %s2566 = sand.u32 %s409, 1
          %s2567 = smul.addr %s2566, 16
          %s2568 = scalar_lea.vmem [#allocation12], %s2567
          %2570 = dma.done %s2565, 256
        $region120: #{tpu_custom_call.1} parent=115 // pred_fallthru
          _
        // Predicated region
        $region121: #{tpu_custom_call.1} parent=115 // pred_check
          %p2571 = pneg %p452
        $region122: #{tpu_custom_call.1} parent=115 // pred_check_branch
          %2573 = sbr.rel (%p2571) target = $region124
        $region123: #{tpu_custom_call.1} parent=115 // pred_region
          %s2574 = sand.u32 %s437, 1
          %s2575 = scalar_lea.sflag [#allocation14], %s2574
          %s2576 = sand.u32 %s437, 1
          %s2577 = smul.addr %s2576, 32
          %s2578 = scalar_lea.vmem [#allocation13], %s2577
          %2580 = dma.done %s2575, 512
        $region124: #{tpu_custom_call.1} parent=115 // pred_fallthru
          _
      $region116: #{tpu_custom_call.1} parent=5 // pred_fallthru
        _
    $region6: #{tpu_custom_call.1} parent=1 // loop_footer
      %s37 = sadd.s32 1, %s33
    $region7: #{tpu_custom_call.1} parent=1 // loop_footer_branch
      %32 = sbr.rel target = $region3
    $region8: #{tpu_custom_call.1} parent=1 // loop_exit
      _
    %2581 = vsyncpa [#allocation5], 1
    %s2582 = scalar_lea.sflag [#allocation5], 1
    %2583 = vsyncpa %s2582, 1
    %2584 = vsyncpa [#allocation8], 1
    %2585 = vsyncpa [#allocation11], 1
    %2586 = vsyncpa [#allocation6], 1
    %s2587 = scalar_lea.sflag [#allocation6], 1
    %2588 = vsyncpa %s2587, 1
    %2589 = vsyncpa [#allocation14], 1
    %s2590 = scalar_lea.sflag [#allocation14], 1
    %2591 = vsyncpa %s2590, 1

// kernel: tpu_custom_call.1
$region0: #{tpu_custom_call.1}
  #allocation0 [shape = 'u32[]', space=smem, size = 0x4, offset = 0x4, fixed_abs, tag = 'smem constant byte address 0x4 - core index']
  #allocation1 [shape = 'u32[72,128]{1,0:T(1,128)}', space=vmem, size = 0x9000, scoped, tag = 'internal scratch']
  #allocation2 [shape = 'bf16[8,8,8]{2,1,0:T(8,128)(2,1)}', space=vmem, size = 0x4000, scoped, tag = 'scratch operand']
  #allocation3 [shape = 'bf16[8,8,8]{2,1,0:T(8,128)(2,1)}', space=vmem, size = 0x4000, scoped, tag = 'scratch operand']
  %s0 = inlined_call_operand.vmem [shape: bf16[4,8,8], index: 0, kind: input, shape index: {}]
  %s1 = inlined_call_operand.vmem [shape: f32[4,8,32], index: 1, kind: input, shape index: {}]
  %s2 = inlined_call_operand.hbm [shape: bf16[32,32], index: 2, kind: input, shape index: {}]
  %s3 = inlined_call_operand.vmem [shape: f32[1,32], index: 3, kind: input, shape index: {}]
  %s4 = inlined_call_operand.hbm [shape: bf16[32,64], index: 4, kind: input, shape index: {}]
  %s5 = inlined_call_operand.vmem [shape: f32[1,64], index: 5, kind: input, shape index: {}]
  %s6 = inlined_call_operand.hbm [shape: bf16[32,32], index: 6, kind: input, shape index: {}]
  %s7 = inlined_call_operand.vmem [shape: f32[1,32], index: 7, kind: input, shape index: {}]
  %s8 = inlined_call_operand.vmem [shape: f32[1,32], index: 8, kind: input, shape index: {}]
  %s9 = inlined_call_operand.vmem [shape: f32[1,32], index: 9, kind: input, shape index: {}]
  %s10 = inlined_call_operand.hbm [shape: bf16[32,64], index: 10, kind: input, shape index: {}]
  %s11 = inlined_call_operand.vmem [shape: f32[1,64], index: 11, kind: input, shape index: {}]
  %s12 = inlined_call_operand.vmem [shape: bf16[64,32], index: 12, kind: input, shape index: {}]
  %s13 = inlined_call_operand.vmem [shape: f32[1,32], index: 13, kind: input, shape index: {}]
  %s14 = inlined_call_operand.vmem [shape: f32[1,32], index: 14, kind: input, shape index: {}]
  %s15 = inlined_call_operand.vmem [shape: f32[1,32], index: 15, kind: input, shape index: {}]
  %s16 = inlined_call_operand.hbm [shape: f32[4,8,32], index: 16, kind: output, shape index: {0}]
  %s17 = inlined_call_operand.hbm [shape: bf16[4,4,8,8], index: 17, kind: output, shape index: {1}]
  %18 = xla_tuple %s16, %s17
  %s19 = sld [smem:[#allocation0]]
  $region125: #{tpu_custom_call.1} parent=0
    _
  %s21 = ssub.s32 1, %s19
  %s22 = scalar_select 0, %s21, %s19
  $region1: #{tpu_custom_call.1} parent=0
    #allocation4 [shape = 'u8[8192]{0}', space=vmem, size = 0x2000, scoped, tag = 'input window, operand 2, single buffered']
    #allocation5 [shape = 's32[2]{0}', space=sflag, size = 0x8, scoped, tag = 'scoped memory for tpu_custom_call.1']
    #allocation6 [shape = 's32[2]{0}', space=sflag, size = 0x8, scoped, tag = 'scoped memory for tpu_custom_call.1']
    #allocation7 [shape = 'u8[8192]{0}', space=vmem, size = 0x2000, scoped, tag = 'input window, operand 4, single buffered']
    #allocation8 [shape = 's32[1]{0}', space=sflag, size = 0x4, scoped, tag = 'scoped memory for tpu_custom_call.1']
    #allocation9 [shape = 'u8[8192]{0}', space=vmem, size = 0x2000, scoped, tag = 'input window, operand 6, single buffered']
    #allocation10 [shape = 'u8[8192]{0}', space=vmem, size = 0x2000, scoped, tag = 'input window, operand 10, single buffered']
    #allocation11 [shape = 's32[1]{0}', space=sflag, size = 0x4, scoped, tag = 'scoped memory for tpu_custom_call.1']
    #allocation12 [shape = 'u8[16384]{0}', space=vmem, size = 0x4000, scoped, tag = 'output window, operand 0']
    #allocation13 [shape = 'u8[32768]{0}', space=vmem, size = 0x8000, scoped, tag = 'output window, operand 1']
    #allocation14 [shape = 's32[2]{0}', space=sflag, size = 0x8, scoped, tag = 'scoped memory for tpu_custom_call.1']
    %23 = vsyncpa [#allocation5], 0
    %24 = vsyncpa [#allocation8], 0
    %25 = vsyncpa [#allocation11], 0
    %26 = vsyncpa [#allocation6], 0
    %s27 = scalar_lea.sflag [#allocation6], 1
    %28 = vsyncpa %s27, 0
    %29 = vsyncpa [#allocation14], 0
    %s30 = scalar_lea.sflag [#allocation14], 1
    %31 = vsyncpa %s30, 0
    loop: start=0, step=1, limit=4
    $region2: #{tpu_custom_call.1} parent=1 // loop_pre_header
      _
    $region3: #{tpu_custom_call.1} parent=1 // loop_header
      %s33 = sphi 0, %s37
      %p34 = scmp.ge.s32.totalorder %s33, 4
      %s40 = sphi 0, %s52
      %s41 = sphi 0, %s48
      %s42 = sphi 0, %s40
      %s43 = sphi 0, %s41
      %s44 = sphi 0, %s42
      %s45 = sphi 0, %s43
      %s57 = sphi 0, %s59
      %s60 = sphi 0, %s57
      %s61 = sphi 0, %s60
      %s77 = sphi 0, %s61
      %s83 = sphi 0, %s85
      %s86 = sphi 0, %s83
      %s87 = sphi 0, %s86
      %s103 = sphi 0, %s87
      %s107 = sphi 0, %s107
      %s109 = sphi 0, %s107
      %s110 = sphi 0, %s109
      %s124 = sphi 0, %s110
      %s128 = sphi 0, %s128
      %s130 = sphi 0, %s128
      %s131 = sphi 0, %s130
      %s145 = sphi 0, %s131
      %s149 = sphi 0, %s149
      %s151 = sphi 0, %s149
      %s152 = sphi 0, %s151
      %s166 = sphi 0, %s152
      %s170 = sphi 0, %s170
      %s172 = sphi 0, %s170
      %s173 = sphi 0, %s172
      %s187 = sphi 0, %s173
      %s191 = sphi 0, %s191
      %s193 = sphi 0, %s191
      %s194 = sphi 0, %s193
      %s208 = sphi 0, %s194
      %s212 = sphi 0, %s212
      %s214 = sphi 0, %s212
      %s215 = sphi 0, %s214
      %s229 = sphi 0, %s215
      %s233 = sphi 0, %s233
      %s235 = sphi 0, %s233
      %s236 = sphi 0, %s235
      %s250 = sphi 0, %s236
      %s254 = sphi 0, %s254
      %s256 = sphi 0, %s254
      %s257 = sphi 0, %s256
      %s271 = sphi 0, %s257
      %s275 = sphi 0, %s275
      %s277 = sphi 0, %s275
      %s278 = sphi 0, %s277
      %s292 = sphi 0, %s278
      %s296 = sphi 0, %s296
      %s298 = sphi 0, %s296
      %s299 = sphi 0, %s298
      %s313 = sphi 0, %s299
      %s317 = sphi 0, %s317
      %s319 = sphi 0, %s317
      %s320 = sphi 0, %s319
      %s334 = sphi 0, %s320
      %s338 = sphi 0, %s338
      %s340 = sphi 0, %s338
      %s341 = sphi 0, %s340
      %s355 = sphi 0, %s341
      %s359 = sphi 0, %s359
      %s361 = sphi 0, %s359
      %s362 = sphi 0, %s361
      %s376 = sphi 0, %s362
      %s380 = sphi 0, %s380
      %s382 = sphi 0, %s380
      %s383 = sphi 0, %s382
      %s397 = sphi 0, %s383
      %s405 = sphi 0, %s407
      %s408 = sphi 0, %s405
      %s409 = sphi 0, %s408
      %s425 = sphi 0, %s409
      %s433 = sphi 0, %s435
      %s436 = sphi 0, %s433
      %s437 = sphi 0, %s436
      %s453 = sphi 0, %s437
    $region4: #{tpu_custom_call.1} parent=1 // loop_header_branch
      %36 = sbr.rel (%p34) target = $region8
    $region5: #{tpu_custom_call.1} parent=1 // loop_body
      %s38 = ssub.s32 %s33, 1
      %s39 = ssub.s32 %s33, 2
      %s46 = sadd.s32 1, %s41
      %p47 = scmp.ge.s32.totalorder %s46, 1
      %s48 = scalar_select %p47, 0, %s46
      %s49 = sadd.s32 1, %s40
      %s50 = scalar_select %p47, %s49, %s40
      %p51 = scmp.ge.s32.totalorder %s50, 2
      %s52 = scalar_select %p51, 0, %s50
      %s53 = ssub.s32 %s40, %s52
      %s54 = ssub.s32 %s41, %s48
      %s55 = sor.u32 %s53, %s54
      %p56 = scmp.eq.s32.totalorder %s55, 0
      %s58 = sadd.s32 %s57, 1
      %s59 = scalar_select %p56, %s57, %s58
      %p62 = pneg %p56
      %p63 = scmp.eq.s32.totalorder %s33, 1
      %p64 = por %p62, %p63
      %p65 = scmp.ne.s32.totalorder %s57, %s60
      %p66 = scmp.eq.s32.totalorder %s33, 0
      %p67 = por %p65, %p66
      %p68 = scmp.ne.s32.totalorder %s57, %s60
      %p69 = scmp.eq.s32.totalorder %s38, 1
      %p70 = por %p68, %p69
      %p71 = scmp.ne.s32.totalorder %s60, %s61
      %p72 = scmp.eq.s32.totalorder %s38, 0
      %p73 = por %p71, %p72
      %p74 = scmp.ne.s32.totalorder %s60, %s61
      %p75 = scmp.eq.s32.totalorder %s39, 1
      %p76 = por %p74, %p75
      %p78 = scmp.ne.s32.totalorder %s61, %s77
      %p79 = scmp.eq.s32.totalorder %s39, 0
      %p80 = por %p78, %p79
      %s81 = ssub.s32 %s40, %s52
      %p82 = scmp.eq.s32.totalorder %s81, 0
      %s84 = sadd.s32 %s83, 1
      %s85 = scalar_select %p82, %s83, %s84
      %p88 = pneg %p82
      %p89 = scmp.eq.s32.totalorder %s33, 1
      %p90 = por %p88, %p89
      %p91 = scmp.ne.s32.totalorder %s83, %s86
      %p92 = scmp.eq.s32.totalorder %s33, 0
      %p93 = por %p91, %p92
      %p94 = scmp.ne.s32.totalorder %s83, %s86
      %p95 = scmp.eq.s32.totalorder %s38, 1
      %p96 = por %p94, %p95
      %p97 = scmp.ne.s32.totalorder %s86, %s87
      %p98 = scmp.eq.s32.totalorder %s38, 0
      %p99 = por %p97, %p98
      %p100 = scmp.ne.s32.totalorder %s86, %s87
      %p101 = scmp.eq.s32.totalorder %s39, 1
      %p102 = por %p100, %p101
      %p104 = scmp.ne.s32.totalorder %s87, %s103
      %p105 = scmp.eq.s32.totalorder %s39, 0
      %p106 = por %p104, %p105
      %s108 = sadd.s32 %s107, 1
      %p111 = scmp.eq.s32.totalorder %s33, 1
      %p112 = scmp.ne.s32.totalorder %s107, %s109
      %p113 = scmp.eq.s32.totalorder %s33, 0
      %p114 = por %p112, %p113
      %p115 = scmp.ne.s32.totalorder %s107, %s109
      %p116 = scmp.eq.s32.totalorder %s38, 1
      %p117 = por %p115, %p116
      %p118 = scmp.ne.s32.totalorder %s109, %s110
      %p119 = scmp.eq.s32.totalorder %s38, 0
      %p120 = por %p118, %p119
      %p121 = scmp.ne.s32.totalorder %s109, %s110
      %p122 = scmp.eq.s32.totalorder %s39, 1
      %p123 = por %p121, %p122
      %p125 = scmp.ne.s32.totalorder %s110, %s124
      %p126 = scmp.eq.s32.totalorder %s39, 0
      %p127 = por %p125, %p126
      %s129 = sadd.s32 %s128, 1
      %p132 = scmp.eq.s32.totalorder %s33, 1
      %p133 = scmp.ne.s32.totalorder %s128, %s130
      %p134 = scmp.eq.s32.totalorder %s33, 0
      %p135 = por %p133, %p134
      %p136 = scmp.ne.s32.totalorder %s128, %s130
      %p137 = scmp.eq.s32.totalorder %s38, 1
      %p138 = por %p136, %p137
      %p139 = scmp.ne.s32.totalorder %s130, %s131
      %p140 = scmp.eq.s32.totalorder %s38, 0
      %p141 = por %p139, %p140
      %p142 = scmp.ne.s32.totalorder %s130, %s131
      %p143 = scmp.eq.s32.totalorder %s39, 1
      %p144 = por %p142, %p143
      %p146 = scmp.ne.s32.totalorder %s131, %s145
      %p147 = scmp.eq.s32.totalorder %s39, 0
      %p148 = por %p146, %p147
      %s150 = sadd.s32 %s149, 1
      %p153 = scmp.eq.s32.totalorder %s33, 1
      %p154 = scmp.ne.s32.totalorder %s149, %s151
      %p155 = scmp.eq.s32.totalorder %s33, 0
      %p156 = por %p154, %p155
      %p157 = scmp.ne.s32.totalorder %s149, %s151
      %p158 = scmp.eq.s32.totalorder %s38, 1
      %p159 = por %p157, %p158
      %p160 = scmp.ne.s32.totalorder %s151, %s152
      %p161 = scmp.eq.s32.totalorder %s38, 0
      %p162 = por %p160, %p161
      %p163 = scmp.ne.s32.totalorder %s151, %s152
      %p164 = scmp.eq.s32.totalorder %s39, 1
      %p165 = por %p163, %p164
      %p167 = scmp.ne.s32.totalorder %s152, %s166
      %p168 = scmp.eq.s32.totalorder %s39, 0
      %p169 = por %p167, %p168
      %s171 = sadd.s32 %s170, 1
      %p174 = scmp.eq.s32.totalorder %s33, 1
      %p175 = scmp.ne.s32.totalorder %s170, %s172
      %p176 = scmp.eq.s32.totalorder %s33, 0
      %p177 = por %p175, %p176
      %p178 = scmp.ne.s32.totalorder %s170, %s172
      %p179 = scmp.eq.s32.totalorder %s38, 1
      %p180 = por %p178, %p179
      %p181 = scmp.ne.s32.totalorder %s172, %s173
      %p182 = scmp.eq.s32.totalorder %s38, 0
      %p183 = por %p181, %p182
      %p184 = scmp.ne.s32.totalorder %s172, %s173
      %p185 = scmp.eq.s32.totalorder %s39, 1
      %p186 = por %p184, %p185
      %p188 = scmp.ne.s32.totalorder %s173, %s187
      %p189 = scmp.eq.s32.totalorder %s39, 0
      %p190 = por %p188, %p189
      %s192 = sadd.s32 %s191, 1
      %p195 = scmp.eq.s32.totalorder %s33, 1
      %p196 = scmp.ne.s32.totalorder %s191, %s193
      %p197 = scmp.eq.s32.totalorder %s33, 0
      %p198 = por %p196, %p197
      %p199 = scmp.ne.s32.totalorder %s191, %s193
      %p200 = scmp.eq.s32.totalorder %s38, 1
      %p201 = por %p199, %p200
      %p202 = scmp.ne.s32.totalorder %s193, %s194
      %p203 = scmp.eq.s32.totalorder %s38, 0
      %p204 = por %p202, %p203
      %p205 = scmp.ne.s32.totalorder %s193, %s194
      %p206 = scmp.eq.s32.totalorder %s39, 1
      %p207 = por %p205, %p206
      %p209 = scmp.ne.s32.totalorder %s194, %s208
      %p210 = scmp.eq.s32.totalorder %s39, 0
      %p211 = por %p209, %p210
      %s213 = sadd.s32 %s212, 1
      %p216 = scmp.eq.s32.totalorder %s33, 1
      %p217 = scmp.ne.s32.totalorder %s212, %s214
      %p218 = scmp.eq.s32.totalorder %s33, 0
      %p219 = por %p217, %p218
      %p220 = scmp.ne.s32.totalorder %s212, %s214
      %p221 = scmp.eq.s32.totalorder %s38, 1
      %p222 = por %p220, %p221
      %p223 = scmp.ne.s32.totalorder %s214, %s215
      %p224 = scmp.eq.s32.totalorder %s38, 0
      %p225 = por %p223, %p224
      %p226 = scmp.ne.s32.totalorder %s214, %s215
      %p227 = scmp.eq.s32.totalorder %s39, 1
      %p228 = por %p226, %p227
      %p230 = scmp.ne.s32.totalorder %s215, %s229
      %p231 = scmp.eq.s32.totalorder %s39, 0
      %p232 = por %p230, %p231
      %s234 = sadd.s32 %s233, 1
      %p237 = scmp.eq.s32.totalorder %s33, 1
      %p238 = scmp.ne.s32.totalorder %s233, %s235
      %p239 = scmp.eq.s32.totalorder %s33, 0
      %p240 = por %p238, %p239
      %p241 = scmp.ne.s32.totalorder %s233, %s235
      %p242 = scmp.eq.s32.totalorder %s38, 1
      %p243 = por %p241, %p242
      %p244 = scmp.ne.s32.totalorder %s235, %s236
      %p245 = scmp.eq.s32.totalorder %s38, 0
      %p246 = por %p244, %p245
      %p247 = scmp.ne.s32.totalorder %s235, %s236
      %p248 = scmp.eq.s32.totalorder %s39, 1
      %p249 = por %p247, %p248
      %p251 = scmp.ne.s32.totalorder %s236, %s250
      %p252 = scmp.eq.s32.totalorder %s39, 0
      %p253 = por %p251, %p252
      %s255 = sadd.s32 %s254, 1
      %p258 = scmp.eq.s32.totalorder %s33, 1
      %p259 = scmp.ne.s32.totalorder %s254, %s256
      %p260 = scmp.eq.s32.totalorder %s33, 0
      %p261 = por %p259, %p260
      %p262 = scmp.ne.s32.totalorder %s254, %s256
      %p263 = scmp.eq.s32.totalorder %s38, 1
      %p264 = por %p262, %p263
      %p265 = scmp.ne.s32.totalorder %s256, %s257
      %p266 = scmp.eq.s32.totalorder %s38, 0
      %p267 = por %p265, %p266
      %p268 = scmp.ne.s32.totalorder %s256, %s257
      %p269 = scmp.eq.s32.totalorder %s39, 1
      %p270 = por %p268, %p269
      %p272 = scmp.ne.s32.totalorder %s257, %s271
      %p273 = scmp.eq.s32.totalorder %s39, 0
      %p274 = por %p272, %p273
      %s276 = sadd.s32 %s275, 1
      %p279 = scmp.eq.s32.totalorder %s33, 1
      %p280 = scmp.ne.s32.totalorder %s275, %s277
      %p281 = scmp.eq.s32.totalorder %s33, 0
      %p282 = por %p280, %p281
      %p283 = scmp.ne.s32.totalorder %s275, %s277
      %p284 = scmp.eq.s32.totalorder %s38, 1
      %p285 = por %p283, %p284
      %p286 = scmp.ne.s32.totalorder %s277, %s278
      %p287 = scmp.eq.s32.totalorder %s38, 0
      %p288 = por %p286, %p287
      %p289 = scmp.ne.s32.totalorder %s277, %s278
      %p290 = scmp.eq.s32.totalorder %s39, 1
      %p291 = por %p289, %p290
      %p293 = scmp.ne.s32.totalorder %s278, %s292
      %p294 = scmp.eq.s32.totalorder %s39, 0
      %p295 = por %p293, %p294
      %s297 = sadd.s32 %s296, 1
      %p300 = scmp.eq.s32.totalorder %s33, 1
      %p301 = scmp.ne.s32.totalorder %s296, %s298
      %p302 = scmp.eq.s32.totalorder %s33, 0
      %p303 = por %p301, %p302
      %p304 = scmp.ne.s32.totalorder %s296, %s298
      %p305 = scmp.eq.s32.totalorder %s38, 1
      %p306 = por %p304, %p305
      %p307 = scmp.ne.s32.totalorder %s298, %s299
      %p308 = scmp.eq.s32.totalorder %s38, 0
      %p309 = por %p307, %p308
      %p310 = scmp.ne.s32.totalorder %s298, %s299
      %p311 = scmp.eq.s32.totalorder %s39, 1
      %p312 = por %p310, %p311
      %p314 = scmp.ne.s32.totalorder %s299, %s313
      %p315 = scmp.eq.s32.totalorder %s39, 0
      %p316 = por %p314, %p315
      %s318 = sadd.s32 %s317, 1
      %p321 = scmp.eq.s32.totalorder %s33, 1
      %p322 = scmp.ne.s32.totalorder %s317, %s319
      %p323 = scmp.eq.s32.totalorder %s33, 0
      %p324 = por %p322, %p323
      %p325 = scmp.ne.s32.totalorder %s317, %s319
      %p326 = scmp.eq.s32.totalorder %s38, 1
      %p327 = por %p325, %p326
      %p328 = scmp.ne.s32.totalorder %s319, %s320
      %p329 = scmp.eq.s32.totalorder %s38, 0
      %p330 = por %p328, %p329
      %p331 = scmp.ne.s32.totalorder %s319, %s320
      %p332 = scmp.eq.s32.totalorder %s39, 1
      %p333 = por %p331, %p332
      %p335 = scmp.ne.s32.totalorder %s320, %s334
      %p336 = scmp.eq.s32.totalorder %s39, 0
      %p337 = por %p335, %p336
      %s339 = sadd.s32 %s338, 1
      %p342 = scmp.eq.s32.totalorder %s33, 1
      %p343 = scmp.ne.s32.totalorder %s338, %s340
      %p344 = scmp.eq.s32.totalorder %s33, 0
      %p345 = por %p343, %p344
      %p346 = scmp.ne.s32.totalorder %s338, %s340
      %p347 = scmp.eq.s32.totalorder %s38, 1
      %p348 = por %p346, %p347
      %p349 = scmp.ne.s32.totalorder %s340, %s341
      %p350 = scmp.eq.s32.totalorder %s38, 0
      %p351 = por %p349, %p350
      %p352 = scmp.ne.s32.totalorder %s340, %s341
      %p353 = scmp.eq.s32.totalorder %s39, 1
      %p354 = por %p352, %p353
      %p356 = scmp.ne.s32.totalorder %s341, %s355
      %p357 = scmp.eq.s32.totalorder %s39, 0
      %p358 = por %p356, %p357
      %s360 = sadd.s32 %s359, 1
      %p363 = scmp.eq.s32.totalorder %s33, 1
      %p364 = scmp.ne.s32.totalorder %s359, %s361
      %p365 = scmp.eq.s32.totalorder %s33, 0
      %p366 = por %p364, %p365
      %p367 = scmp.ne.s32.totalorder %s359, %s361
      %p368 = scmp.eq.s32.totalorder %s38, 1
      %p369 = por %p367, %p368
      %p370 = scmp.ne.s32.totalorder %s361, %s362
      %p371 = scmp.eq.s32.totalorder %s38, 0
      %p372 = por %p370, %p371
      %p373 = scmp.ne.s32.totalorder %s361, %s362
      %p374 = scmp.eq.s32.totalorder %s39, 1
      %p375 = por %p373, %p374
      %p377 = scmp.ne.s32.totalorder %s362, %s376
      %p378 = scmp.eq.s32.totalorder %s39, 0
      %p379 = por %p377, %p378
      %s381 = sadd.s32 %s380, 1
      %p384 = scmp.eq.s32.totalorder %s33, 1
      %p385 = scmp.ne.s32.totalorder %s380, %s382
      %p386 = scmp.eq.s32.totalorder %s33, 0
      %p387 = por %p385, %p386
      %p388 = scmp.ne.s32.totalorder %s380, %s382
      %p389 = scmp.eq.s32.totalorder %s38, 1
      %p390 = por %p388, %p389
      %p391 = scmp.ne.s32.totalorder %s382, %s383
      %p392 = scmp.eq.s32.totalorder %s38, 0
      %p393 = por %p391, %p392
      %p394 = scmp.ne.s32.totalorder %s382, %s383
      %p395 = scmp.eq.s32.totalorder %s39, 1
      %p396 = por %p394, %p395
      %p398 = scmp.ne.s32.totalorder %s383, %s397
      %p399 = scmp.eq.s32.totalorder %s39, 0
      %p400 = por %p398, %p399
      %s401 = ssub.s32 %s40, %s52
      %s402 = ssub.s32 %s41, %s48
      %s403 = sor.u32 %s401, %s402
      %p404 = scmp.eq.s32.totalorder %s403, 0
      %s406 = sadd.s32 %s405, 1
      %s407 = scalar_select %p404, %s405, %s406
      %p410 = pneg %p404
      %p411 = scmp.eq.s32.totalorder %s33, 1
      %p412 = por %p410, %p411
      %p413 = scmp.ne.s32.totalorder %s405, %s408
      %p414 = scmp.eq.s32.totalorder %s33, 0
      %p415 = por %p413, %p414
      %p416 = scmp.ne.s32.totalorder %s405, %s408
      %p417 = scmp.eq.s32.totalorder %s38, 1
      %p418 = por %p416, %p417
      %p419 = scmp.ne.s32.totalorder %s408, %s409
      %p420 = scmp.eq.s32.totalorder %s38, 0
      %p421 = por %p419, %p420
      %p422 = scmp.ne.s32.totalorder %s408, %s409
      %p423 = scmp.eq.s32.totalorder %s39, 1
      %p424 = por %p422, %p423
      %p426 = scmp.ne.s32.totalorder %s409, %s425
      %p427 = scmp.eq.s32.totalorder %s39, 0
      %p428 = por %p426, %p427
      %s429 = ssub.s32 %s40, %s52
      %s430 = ssub.s32 %s41, %s48
      %s431 = sor.u32 %s429, %s430
      %p432 = scmp.eq.s32.totalorder %s431, 0
      %s434 = sadd.s32 %s433, 1
      %s435 = scalar_select %p432, %s433, %s434
      %p438 = pneg %p432
      %p439 = scmp.eq.s32.totalorder %s33, 1
      %p440 = por %p438, %p439
      %p441 = scmp.ne.s32.totalorder %s433, %s436
      %p442 = scmp.eq.s32.totalorder %s33, 0
      %p443 = por %p441, %p442
      %p444 = scmp.ne.s32.totalorder %s433, %s436
      %p445 = scmp.eq.s32.totalorder %s38, 1
      %p446 = por %p444, %p445
      %p447 = scmp.ne.s32.totalorder %s436, %s437
      %p448 = scmp.eq.s32.totalorder %s38, 0
      %p449 = por %p447, %p448
      %p450 = scmp.ne.s32.totalorder %s436, %s437
      %p451 = scmp.eq.s32.totalorder %s39, 1
      %p452 = por %p450, %p451
      %p454 = scmp.ne.s32.totalorder %s437, %s453
      %p455 = scmp.eq.s32.totalorder %s39, 0
      %p456 = por %p454, %p455
      %p457 = scmp.le.s32.totalorder 1, %s33
      %p458 = scmp.lt.s32.totalorder %s33, 3
      %p459 = pnand %p457, %p458
      %p460 = pneg %p459
      // Predicated region
      $region9: #{tpu_custom_call.1} parent=5 // pred_check
        _
      $region10: #{tpu_custom_call.1} parent=5 // pred_check_branch
        %462 = sbr.rel (%p459) target = $region12
      $region11: #{tpu_custom_call.1} parent=5 // pred_region
        %s463 = ssub.s32 %s33, 1
        // Predicated region
        $region13: #{tpu_custom_call.1} parent=11 // pred_check
          %p464 = pneg %p120
        $region14: #{tpu_custom_call.1} parent=11 // pred_check_branch
          %466 = sbr.rel (%p464) target = $region16
        $region15: #{tpu_custom_call.1} parent=11 // pred_region
          %468 = vsyncadd [#allocation5], 0
          %s469 = sshll.u32 %s2, 4
          %s470 = int_to_ptr.hbm [resolvable:$true] %s469
          %s471 = sshll.u32 [#allocation4], 4
          %s472 = int_to_ptr.vmem [resolvable:$true] %s471
          %477 = dma.hbm_to_vmem [thread:$0]  %s470, 256, %s472, [#allocation5], 64, 64, 4
        $region16: #{tpu_custom_call.1} parent=11 // pred_fallthru
          _
        // Predicated region
        $region17: #{tpu_custom_call.1} parent=11 // pred_check
          %p478 = pneg %p141
        $region18: #{tpu_custom_call.1} parent=11 // pred_check_branch
          %480 = sbr.rel (%p478) target = $region20
        $region19: #{tpu_custom_call.1} parent=11 // pred_region
          _
        $region20: #{tpu_custom_call.1} parent=11 // pred_fallthru
          _
        // Predicated region
        $region21: #{tpu_custom_call.1} parent=11 // pred_check
          %p481 = pneg %p162
        $region22: #{tpu_custom_call.1} parent=11 // pred_check_branch
          %483 = sbr.rel (%p481) target = $region24
        $region23: #{tpu_custom_call.1} parent=11 // pred_region
          %485 = vsyncadd [#allocation8], 0
          %s486 = sshll.u32 %s4, 4
          %s487 = int_to_ptr.hbm [resolvable:$true] %s486
          %s488 = sshll.u32 [#allocation7], 4
          %s489 = int_to_ptr.vmem [resolvable:$true] %s488
          %494 = dma.hbm_to_vmem [thread:$0]  %s487, 256, %s489, [#allocation8], 64, 64, 4
        $region24: #{tpu_custom_call.1} parent=11 // pred_fallthru
          _
        // Predicated region
        $region25: #{tpu_custom_call.1} parent=11 // pred_check
          %p495 = pneg %p183
        $region26: #{tpu_custom_call.1} parent=11 // pred_check_branch
          %497 = sbr.rel (%p495) target = $region28
        $region27: #{tpu_custom_call.1} parent=11 // pred_region
          _
        $region28: #{tpu_custom_call.1} parent=11 // pred_fallthru
          _
        // Predicated region
        $region29: #{tpu_custom_call.1} parent=11 // pred_check
          %p498 = pneg %p204
        $region30: #{tpu_custom_call.1} parent=11 // pred_check_branch
          %500 = sbr.rel (%p498) target = $region32
        $region31: #{tpu_custom_call.1} parent=11 // pred_region
          %502 = vsyncadd [#allocation8], 0
          %s503 = sshll.u32 %s6, 4
          %s504 = int_to_ptr.hbm [resolvable:$true] %s503
          %s505 = sshll.u32 [#allocation9], 4
          %s506 = int_to_ptr.vmem [resolvable:$true] %s505
          %511 = dma.hbm_to_vmem [thread:$0]  %s504, 256, %s506, [#allocation8], 64, 64, 4
        $region32: #{tpu_custom_call.1} parent=11 // pred_fallthru
          _
        // Predicated region
        $region33: #{tpu_custom_call.1} parent=11 // pred_check
          %p512 = pneg %p225
        $region34: #{tpu_custom_call.1} parent=11 // pred_check_branch
          %514 = sbr.rel (%p512) target = $region36
        $region35: #{tpu_custom_call.1} parent=11 // pred_region
          _
        $region36: #{tpu_custom_call.1} parent=11 // pred_fallthru
          _
        // Predicated region
        $region37: #{tpu_custom_call.1} parent=11 // pred_check
          %p515 = pneg %p246
        $region38: #{tpu_custom_call.1} parent=11 // pred_check_branch
          %517 = sbr.rel (%p515) target = $region40
        $region39: #{tpu_custom_call.1} parent=11 // pred_region
          _
        $region40: #{tpu_custom_call.1} parent=11 // pred_fallthru
          _
        // Predicated region
        $region41: #{tpu_custom_call.1} parent=11 // pred_check
          %p518 = pneg %p267
        $region42: #{tpu_custom_call.1} parent=11 // pred_check_branch
          %520 = sbr.rel (%p518) target = $region44
        $region43: #{tpu_custom_call.1} parent=11 // pred_region
          _
        $region44: #{tpu_custom_call.1} parent=11 // pred_fallthru
          _
        // Predicated region
        $region45: #{tpu_custom_call.1} parent=11 // pred_check
          %p521 = pneg %p288
        $region46: #{tpu_custom_call.1} parent=11 // pred_check_branch
          %523 = sbr.rel (%p521) target = $region48
        $region47: #{tpu_custom_call.1} parent=11 // pred_region
          %525 = vsyncadd [#allocation11], 0
          %s526 = sshll.u32 %s10, 4
          %s527 = int_to_ptr.hbm [resolvable:$true] %s526
          %s528 = sshll.u32 [#allocation10], 4
          %s529 = int_to_ptr.vmem [resolvable:$true] %s528
          %534 = dma.hbm_to_vmem [thread:$0]  %s527, 256, %s529, [#allocation11], 64, 64, 4
        $region48: #{tpu_custom_call.1} parent=11 // pred_fallthru
          _
        // Predicated region
        $region49: #{tpu_custom_call.1} parent=11 // pred_check
          %p535 = pneg %p309
        $region50: #{tpu_custom_call.1} parent=11 // pred_check_branch
          %537 = sbr.rel (%p535) target = $region52
        $region51: #{tpu_custom_call.1} parent=11 // pred_region
          _
        $region52: #{tpu_custom_call.1} parent=11 // pred_fallthru
          _
        // Predicated region
        $region53: #{tpu_custom_call.1} parent=11 // pred_check
          %p538 = pneg %p330
        $region54: #{tpu_custom_call.1} parent=11 // pred_check_branch
          %540 = sbr.rel (%p538) target = $region56
        $region55: #{tpu_custom_call.1} parent=11 // pred_region
          _
        $region56: #{tpu_custom_call.1} parent=11 // pred_fallthru
          _
        // Predicated region
        $region57: #{tpu_custom_call.1} parent=11 // pred_check
          %p541 = pneg %p351
        $region58: #{tpu_custom_call.1} parent=11 // pred_check_branch
          %543 = sbr.rel (%p541) target = $region60
        $region59: #{tpu_custom_call.1} parent=11 // pred_region
          _
        $region60: #{tpu_custom_call.1} parent=11 // pred_fallthru
          _
        // Predicated region
        $region61: #{tpu_custom_call.1} parent=11 // pred_check
          %p544 = pneg %p372
        $region62: #{tpu_custom_call.1} parent=11 // pred_check_branch
          %546 = sbr.rel (%p544) target = $region64
        $region63: #{tpu_custom_call.1} parent=11 // pred_region
          _
        $region64: #{tpu_custom_call.1} parent=11 // pred_fallthru
          _
        // Predicated region
        $region65: #{tpu_custom_call.1} parent=11 // pred_check
          %p547 = pneg %p393
        $region66: #{tpu_custom_call.1} parent=11 // pred_check_branch
          %549 = sbr.rel (%p547) target = $region68
        $region67: #{tpu_custom_call.1} parent=11 // pred_region
          _
        $region68: #{tpu_custom_call.1} parent=11 // pred_fallthru
          _
      $region12: #{tpu_custom_call.1} parent=5 // pred_fallthru
        _
      %p550 = scmp.lt.s32.totalorder %s33, 2
      // Predicated region
      $region69: #{tpu_custom_call.1} parent=5 // pred_check
        %p551 = pneg %p550
      $region70: #{tpu_custom_call.1} parent=5 // pred_check_branch
        %553 = sbr.rel (%p551) target = $region72
      $region71: #{tpu_custom_call.1} parent=5 // pred_region
        // Predicated region
        $region73: #{tpu_custom_call.1} parent=71 // pred_check
          %p554 = pneg %p67
        $region74: #{tpu_custom_call.1} parent=71 // pred_check_branch
          %556 = sbr.rel (%p554) target = $region76
        $region75: #{tpu_custom_call.1} parent=71 // pred_region
          %s557 = smul.u32 2, %s40
          %p558 = scmp.lt.s32.totalorder %s557, 3
          %s559 = scalar_select %p558, %s557, 3
          %p560 = scmp.lt.s32.totalorder %s41, 0
          %s561 = scalar_select %p560, %s41, 0
          %s562 = sadd.s32 %s561, %s559
          %s563 = smul.addr %s562, 4
          %s564 = scalar_lea.vmem %s0, %s563
          %s565 = smul.u32 2, %s40
        $region76: #{tpu_custom_call.1} parent=71 // pred_fallthru
          _
        // Predicated region
        $region77: #{tpu_custom_call.1} parent=71 // pred_check
          %p566 = pneg %p93
        $region78: #{tpu_custom_call.1} parent=71 // pred_check_branch
          %568 = sbr.rel (%p566) target = $region80
        $region79: #{tpu_custom_call.1} parent=71 // pred_region
          %s569 = smul.u32 2, %s40
          %p570 = scmp.lt.s32.totalorder %s569, 3
          %s571 = scalar_select %p570, %s569, 3
          %s572 = smul.addr %s571, 8
          %s573 = scalar_lea.vmem %s1, %s572
          %s574 = smul.u32 2, %s40
        $region80: #{tpu_custom_call.1} parent=71 // pred_fallthru
          _
      $region72: #{tpu_custom_call.1} parent=5 // pred_fallthru
        _
      %p575 = scmp.le.s32.totalorder 1, %s33
      %p576 = scmp.lt.s32.totalorder %s33, 3
      %p577 = pnand %p575, %p576
      %p578 = pneg %p577
      // Predicated region
      $region81: #{tpu_custom_call.1} parent=5 // pred_check
        _
      $region82: #{tpu_custom_call.1} parent=5 // pred_check_branch
        %580 = sbr.rel (%p577) target = $region84
      $region83: #{tpu_custom_call.1} parent=5 // pred_region
        %s581 = ssub.s32 %s33, 1
        // Predicated region
        $region85: #{tpu_custom_call.1} parent=83 // pred_check
          %p582 = pneg %p120
        $region86: #{tpu_custom_call.1} parent=83 // pred_check_branch
          %584 = sbr.rel (%p582) target = $region88
        $region87: #{tpu_custom_call.1} parent=83 // pred_region
          %586 = dma.done [#allocation5], 256
        $region88: #{tpu_custom_call.1} parent=83 // pred_fallthru
          _
        // Predicated region
        $region89: #{tpu_custom_call.1} parent=83 // pred_check
          %p587 = pneg %p162
        $region90: #{tpu_custom_call.1} parent=83 // pred_check_branch
          %589 = sbr.rel (%p587) target = $region92
        $region91: #{tpu_custom_call.1} parent=83 // pred_region
          %591 = dma.done [#allocation8], 256
        $region92: #{tpu_custom_call.1} parent=83 // pred_fallthru
          _
        // Predicated region
        $region93: #{tpu_custom_call.1} parent=83 // pred_check
          %p592 = pneg %p204
        $region94: #{tpu_custom_call.1} parent=83 // pred_check_branch
          %594 = sbr.rel (%p592) target = $region96
        $region95: #{tpu_custom_call.1} parent=83 // pred_region
          %596 = dma.done [#allocation8], 256
        $region96: #{tpu_custom_call.1} parent=83 // pred_fallthru
          _
        // Predicated region
        $region97: #{tpu_custom_call.1} parent=83 // pred_check
          %p597 = pneg %p288
        $region98: #{tpu_custom_call.1} parent=83 // pred_check_branch
          %599 = sbr.rel (%p597) target = $region100
        $region99: #{tpu_custom_call.1} parent=83 // pred_region
          %601 = dma.done [#allocation11], 256
        $region100: #{tpu_custom_call.1} parent=83 // pred_fallthru
          _
        %s602 = smul.u32 2, %s42
        %p603 = scmp.lt.s32.totalorder %s602, 3
        %s604 = scalar_select %p603, %s602, 3
        %p605 = scmp.lt.s32.totalorder %s43, 0
        %s606 = scalar_select %p605, %s43, 0
        %s607 = sadd.s32 %s606, %s604
        %s608 = smul.addr %s607, 4
        %s609 = scalar_lea.vmem %s0, %s608
        %p610 = pneg %p73
        %p611 = pneg %p70
        %s612 = smul.u32 2, %s42
        %p613 = scmp.lt.s32.totalorder %s612, 3
        %s614 = scalar_select %p613, %s612, 3
        %s615 = smul.addr %s614, 8
        %s616 = scalar_lea.vmem %s1, %s615
        %p617 = pneg %p99
        %p618 = pneg %p96
        %p619 = pneg %p120
        %p620 = pneg %p117
        %p621 = pneg %p141
        %p622 = pneg %p138
        %p623 = pneg %p162
        %p624 = pneg %p159
        %p625 = pneg %p183
        %p626 = pneg %p180
        %p627 = pneg %p204
        %p628 = pneg %p201
        %p629 = pneg %p225
        %p630 = pneg %p222
        %p631 = pneg %p246
        %p632 = pneg %p243
        %p633 = pneg %p267
        %p634 = pneg %p264
        %p635 = pneg %p288
        %p636 = pneg %p285
        %p637 = pneg %p309
        %p638 = pneg %p306
        %p639 = pneg %p330
        %p640 = pneg %p327
        %p641 = pneg %p351
        %p642 = pneg %p348
        %p643 = pneg %p372
        %p644 = pneg %p369
        %p645 = pneg %p393
        %p646 = pneg %p390
        %p647 = pneg %p421
        %p648 = pneg %p418
        %s649 = sand.u32 %s408, 1
        %s650 = scalar_lea.sflag [#allocation6], %s649
        %s651 = sand.u32 %s408, 1
        %s652 = smul.addr %s651, 16
        %s653 = scalar_lea.vmem [#allocation12], %s652
        %p654 = pneg %p449
        %p655 = pneg %p446
        %s656 = sand.u32 %s436, 1
        %s657 = scalar_lea.sflag [#allocation14], %s656
        %s658 = sand.u32 %s436, 1
        %s659 = smul.addr %s658, 32
        %s660 = scalar_lea.vmem [#allocation13], %s659
        %s661 = smul.u32 2, %s42
        %p662 = scmp.lt.s32.totalorder %s661, 3
        %s663 = scalar_select %p662, %s661, 3
        %p664 = scmp.lt.s32.totalorder %s43, 0
        %s665 = scalar_select %p664, %s43, 0
        %s666 = sadd.s32 %s665, %s663
        %s667 = smul.addr %s666, 4
        %s668 = scalar_lea.vmem %s0, %s667
        %s669 = smul.u32 2, %s42
        %s670 = smul.u32 2, %s42
        %p671 = scmp.lt.s32.totalorder %s670, 3
        %s672 = scalar_select %p671, %s670, 3
        %s673 = smul.addr %s672, 8
        %s674 = scalar_lea.vmem %s1, %s673
        %s675 = smul.u32 2, %s42
        %s676 = smul.u32 2, %s42
        %s677 = smul.u32 2, %s42
        %p679 = scmp.eq.s32.totalorder %s43, 0
        // Predicated region
        $region101: #{tpu_custom_call.1} parent=83 // pred_check
          %p680 = pneg %p679
        $region102: #{tpu_custom_call.1} parent=83 // pred_check_branch
          %682 = sbr.rel (%p680) target = $region104
        $region103: #{tpu_custom_call.1} parent=83 // pred_region
          %v683 = vld [vmem:[%s674] sm:$0xff]
          %v684 = vld [vmem:[%s674 + $0x8] sm:$0xff]
          %v685 = vpack.c.bf16 %v684, %v683
          %v686 = vld [vmem:[#allocation7] sm:$0xf]
          %v687 = vld [vmem:[#allocation7 + $0x4] sm:$0xf]
          %v688 = vld [vmem:[#allocation7 + $0x8] sm:$0xf]
          %v689 = vld [vmem:[#allocation7 + $0xc] sm:$0xf]
          %v690 = vld [vmem:[%s5] sm:$0x1]
          %v692 = vperm.slane %v690, 0
          %v698 = vunpack.c.l.b16 %v686
          %v699 = vunpack.c.l.b16 %v687
          %v700 = vunpack.c.l.b16 %v688
          %v701 = vunpack.c.l.b16 %v689
          %v702 = vpack.c.b16 %v699, %v698
          %v703 = vpack.c.b16 %v701, %v700
          %vm706 = vcmask 261120
          %v708 = vsel %vm706, %v685, 0
          %710 = vmatpush.bf16.msra.mxu0 0
          %711 = vmatpush.bf16.msra.mxu0 0
          %712 = vmatpush.bf16.msra.mxu0 0
          %713 = vmatpush.bf16.msra.mxu0 0
          %714 = vmatpush.bf16.msra.mxu0 0
          %715 = vmatpush.bf16.msra.mxu0 0
          %716 = vmatpush.bf16.msra.mxu0 %v703
          %717 = vmatpush.bf16.msra.mxu0 %v702
          %718 = vmatmul.bf16.gmra.mxu0 %v708
          %v719 = vpop.f32.mrf.mxu0
          %v720 = vadd.f32 %v692, %v719
          %v721 = vpop.f32.mrf.mxu0
          %v722 = vadd.f32 %v692, %v721
          %723 = vdwg.mxu0
          %726 = vrot.lane.b32.xlu0 %v720, 120
          %v727 = vpop.permute.xlu0 %726
          %728 = vrot.lane.b32.xlu0 %v722, 120
          %v729 = vpop.permute.xlu0 %728
          %732 = vrot.lane.b32.xlu0 %v720, 112
          %v733 = vpop.permute.xlu0 %732
          %734 = vrot.lane.b32.xlu0 %v722, 112
          %v735 = vpop.permute.xlu0 %734
          %738 = vrot.lane.b32.xlu0 %v720, 104
          %v739 = vpop.permute.xlu0 %738
          %740 = vrot.lane.b32.xlu0 %v722, 104
          %v741 = vpop.permute.xlu0 %740
          %v744 = vrot.slane %v733, 4
          %vm745 = vcmask 1047556
          %v746 = vsel %vm745, %v744, %v720
          %v747 = vrot.slane %v720, 4
          %v748 = vsel %vm745, %v733, %v747
          %v750 = vunpack.c.l.s4 1983009808
          %v751 = vunpack.c.0.s8 %v750
          %v752 = vperm.slane %v746, %v751
          %v754 = vunpack.c.l.s4 1983009808
          %v755 = vunpack.c.0.s8 %v754
          %v756 = vperm.slane %v748, %v755
          %v757 = vrot.slane %v739, 4
          %v758 = vsel %vm745, %v757, %v727
          %v759 = vrot.slane %v727, 4
          %v760 = vsel %vm745, %v739, %v759
          %v762 = vunpack.c.l.s4 1983009808
          %v763 = vunpack.c.0.s8 %v762
          %v764 = vperm.slane %v758, %v763
          %v766 = vunpack.c.l.s4 1983009808
          %v767 = vunpack.c.0.s8 %v766
          %v768 = vperm.slane %v760, %v767
          %v769 = vrot.slane %v764, 4
          %v770 = vsel %vm745, %v769, %v752
          %v771 = vrot.slane %v752, 4
          %v772 = vsel %vm745, %v764, %v771
          %v774 = vunpack.c.l.s4 1934713408
          %v775 = vunpack.c.0.s8 %v774
          %v776 = vperm.slane %v770, %v775
          %v778 = vunpack.c.l.s4 1934713408
          %v779 = vunpack.c.0.s8 %v778
          %v780 = vperm.slane %v772, %v779
          %v781 = vrot.slane %v768, 4
          %v782 = vsel %vm745, %v781, %v756
          %v783 = vrot.slane %v756, 4
          %v784 = vsel %vm745, %v768, %v783
          %v786 = vunpack.c.l.s4 1934713408
          %v787 = vunpack.c.0.s8 %v786
          %v788 = vperm.slane %v782, %v787
          %v790 = vunpack.c.l.s4 1934713408
          %v791 = vunpack.c.0.s8 %v790
          %v792 = vperm.slane %v784, %v791
          %v793 = vrot.slane %v776, 4
          %v794 = vsel %vm745, 0.0, %v793
          %v795 = vrot.slane %v780, 4
          %v796 = vsel %vm745, 0.0, %v795
          %v797 = vrot.slane %v788, 4
          %v798 = vsel %vm745, 0.0, %v797
          %v799 = vrot.slane %v792, 4
          %v800 = vsel %vm745, 0.0, %v799
          %v801 = vrot.slane %v735, 4
          %v802 = vsel %vm745, %v801, %v722
          %v803 = vrot.slane %v722, 4
          %v804 = vsel %vm745, %v735, %v803
          %v806 = vunpack.c.l.s4 1983009808
          %v807 = vunpack.c.0.s8 %v806
          %v808 = vperm.slane %v802, %v807
          %v810 = vunpack.c.l.s4 1983009808
          %v811 = vunpack.c.0.s8 %v810
          %v812 = vperm.slane %v804, %v811
          %v813 = vrot.slane %v741, 4
          %v814 = vsel %vm745, %v813, %v729
          %v815 = vrot.slane %v729, 4
          %v816 = vsel %vm745, %v741, %v815
          %v818 = vunpack.c.l.s4 1983009808
          %v819 = vunpack.c.0.s8 %v818
          %v820 = vperm.slane %v814, %v819
          %v822 = vunpack.c.l.s4 1983009808
          %v823 = vunpack.c.0.s8 %v822
          %v824 = vperm.slane %v816, %v823
          %v825 = vrot.slane %v820, 4
          %v826 = vsel %vm745, %v825, %v808
          %v827 = vrot.slane %v808, 4
          %v828 = vsel %vm745, %v820, %v827
          %v830 = vunpack.c.l.s4 1934713408
          %v831 = vunpack.c.0.s8 %v830
          %v832 = vperm.slane %v826, %v831
          %v834 = vunpack.c.l.s4 1934713408
          %v835 = vunpack.c.0.s8 %v834
          %v836 = vperm.slane %v828, %v835
          %v837 = vrot.slane %v824, 4
          %v838 = vsel %vm745, %v837, %v812
          %v839 = vrot.slane %v812, 4
          %v840 = vsel %vm745, %v824, %v839
          %v842 = vunpack.c.l.s4 1934713408
          %v843 = vunpack.c.0.s8 %v842
          %v844 = vperm.slane %v838, %v843
          %v846 = vunpack.c.l.s4 1934713408
          %v847 = vunpack.c.0.s8 %v846
          %v848 = vperm.slane %v840, %v847
          %v849 = vrot.slane %v832, 4
          %v850 = vsel %vm745, 0.0, %v849
          %v851 = vrot.slane %v836, 4
          %v852 = vsel %vm745, 0.0, %v851
          %v853 = vrot.slane %v844, 4
          %v854 = vsel %vm745, 0.0, %v853
          %v855 = vrot.slane %v848, 4
          %v856 = vsel %vm745, 0.0, %v855
          %v857 = vsel %vm745, %v795, %v776
          %v859 = vunpack.c.l.s4 1983009808
          %v860 = vunpack.c.0.s8 %v859
          %v861 = vperm.slane %v857, %v860
          %v862 = vrot.slane %v796, 4
          %v863 = vsel %vm745, %v862, %v794
          %v865 = vunpack.c.l.s4 1983009808
          %v866 = vunpack.c.0.s8 %v865
          %v867 = vperm.slane %v863, %v866
          %v868 = vsel %vm745, %v799, %v788
          %v870 = vunpack.c.l.s4 1983009808
          %v871 = vunpack.c.0.s8 %v870
          %v872 = vperm.slane %v868, %v871
          %v873 = vrot.slane %v800, 4
          %v874 = vsel %vm745, %v873, %v798
          %v876 = vunpack.c.l.s4 1983009808
          %v877 = vunpack.c.0.s8 %v876
          %v878 = vperm.slane %v874, %v877
          %v879 = vrot.slane %v867, 4
          %v880 = vsel %vm745, %v879, %v861
          %v881 = vrot.slane %v861, 4
          %v882 = vsel %vm745, %v867, %v881
          %v884 = vunpack.c.l.s4 1934713408
          %v885 = vunpack.c.0.s8 %v884
          %v886 = vperm.slane %v880, %v885
          %v888 = vunpack.c.l.s4 1934713408
          %v889 = vunpack.c.0.s8 %v888
          %v890 = vperm.slane %v882, %v889
          %v891 = vrot.slane %v878, 4
          %v892 = vsel %vm745, %v891, %v872
          %v893 = vrot.slane %v872, 4
          %v894 = vsel %vm745, %v878, %v893
          %v896 = vunpack.c.l.s4 1934713408
          %v897 = vunpack.c.0.s8 %v896
          %v898 = vperm.slane %v892, %v897
          %v900 = vunpack.c.l.s4 1934713408
          %v901 = vunpack.c.0.s8 %v900
          %v902 = vperm.slane %v894, %v901
          %v903 = vrot.slane %v898, 4
          %v904 = vsel %vm745, %v903, %v886
          %v905 = vrot.slane %v886, 4
          %v906 = vsel %vm745, %v898, %v905
          %v907 = vrot.slane %v902, 4
          %v908 = vsel %vm745, %v907, %v890
          %v909 = vrot.slane %v890, 4
          %v910 = vsel %vm745, %v902, %v909
          %v911 = vsel %vm745, %v851, %v832
          %v913 = vunpack.c.l.s4 1983009808
          %v914 = vunpack.c.0.s8 %v913
          %v915 = vperm.slane %v911, %v914
          %v916 = vrot.slane %v852, 4
          %v917 = vsel %vm745, %v916, %v850
          %v919 = vunpack.c.l.s4 1983009808
          %v920 = vunpack.c.0.s8 %v919
          %v921 = vperm.slane %v917, %v920
          %v922 = vsel %vm745, %v855, %v844
          %v924 = vunpack.c.l.s4 1983009808
          %v925 = vunpack.c.0.s8 %v924
          %v926 = vperm.slane %v922, %v925
          %v927 = vrot.slane %v856, 4
          %v928 = vsel %vm745, %v927, %v854
          %v930 = vunpack.c.l.s4 1983009808
          %v931 = vunpack.c.0.s8 %v930
          %v932 = vperm.slane %v928, %v931
          %v933 = vrot.slane %v921, 4
          %v934 = vsel %vm745, %v933, %v915
          %v935 = vrot.slane %v915, 4
          %v936 = vsel %vm745, %v921, %v935
          %v938 = vunpack.c.l.s4 1934713408
          %v939 = vunpack.c.0.s8 %v938
          %v940 = vperm.slane %v934, %v939
          %v942 = vunpack.c.l.s4 1934713408
          %v943 = vunpack.c.0.s8 %v942
          %v944 = vperm.slane %v936, %v943
          %v945 = vrot.slane %v932, 4
          %v946 = vsel %vm745, %v945, %v926
          %v947 = vrot.slane %v926, 4
          %v948 = vsel %vm745, %v932, %v947
          %v950 = vunpack.c.l.s4 1934713408
          %v951 = vunpack.c.0.s8 %v950
          %v952 = vperm.slane %v946, %v951
          %v954 = vunpack.c.l.s4 1934713408
          %v955 = vunpack.c.0.s8 %v954
          %v956 = vperm.slane %v948, %v955
          %v957 = vrot.slane %v952, 4
          %v958 = vsel %vm745, %v957, %v940
          %v959 = vrot.slane %v940, 4
          %v960 = vsel %vm745, %v952, %v959
          %v961 = vrot.slane %v956, 4
          %v962 = vsel %vm745, %v961, %v944
          %v963 = vrot.slane %v944, 4
          %v964 = vsel %vm745, %v956, %v963
          %v965 = vpack.c.bf16 %v904, %v904
          %v966 = vpack.c.bf16 %v906, %v906
          %v967 = vpack.c.bf16 %v908, %v908
          %v968 = vpack.c.bf16 %v910, %v910
          %v969 = vpack.c.bf16 %v958, %v958
          %v970 = vpack.c.bf16 %v960, %v960
          %v971 = vpack.c.bf16 %v962, %v962
          %v972 = vpack.c.bf16 %v964, %v964
          %vm973 = vcmask 60416
          %974 = vst.msk [vmem:[#allocation2] sm:$0xf] %vm973, %v965
          %975 = vst.msk [vmem:[#allocation2 + $0x4] sm:$0xf] %vm973, %v966
          %976 = vst.msk [vmem:[#allocation2 + $0x8] sm:$0xf] %vm973, %v967
          %977 = vst.msk [vmem:[#allocation2 + $0xc] sm:$0xf] %vm973, %v968
          %978 = vst.msk [vmem:[#allocation2 + $0x10] sm:$0xf] %vm973, %v969
          %979 = vst.msk [vmem:[#allocation2 + $0x14] sm:$0xf] %vm973, %v970
          %980 = vst.msk [vmem:[#allocation2 + $0x18] sm:$0xf] %vm973, %v971
          %981 = vst.msk [vmem:[#allocation2 + $0x1c] sm:$0xf] %vm973, %v972
          %982 = vrot.lane.b32.xlu0 %v720, 96
          %v983 = vpop.permute.xlu0 %982
          %984 = vrot.lane.b32.xlu0 %v722, 96
          %v985 = vpop.permute.xlu0 %984
          %986 = vrot.lane.b32.xlu0 %v727, 96
          %v987 = vpop.permute.xlu0 %986
          %988 = vrot.lane.b32.xlu0 %v729, 96
          %v989 = vpop.permute.xlu0 %988
          %990 = vrot.lane.b32.xlu0 %v733, 96
          %v991 = vpop.permute.xlu0 %990
          %992 = vrot.lane.b32.xlu0 %v735, 96
          %v993 = vpop.permute.xlu0 %992
          %994 = vrot.lane.b32.xlu0 %v739, 96
          %v995 = vpop.permute.xlu0 %994
          %996 = vrot.lane.b32.xlu0 %v741, 96
          %v997 = vpop.permute.xlu0 %996
          %v1006 = vrot.slane %v991, 4
          %v1007 = vsel %vm745, %v1006, %v983
          %v1008 = vrot.slane %v983, 4
          %v1009 = vsel %vm745, %v991, %v1008
          %v1011 = vunpack.c.l.s4 1983009808
          %v1012 = vunpack.c.0.s8 %v1011
          %v1013 = vperm.slane %v1007, %v1012
          %v1015 = vunpack.c.l.s4 1983009808
          %v1016 = vunpack.c.0.s8 %v1015
          %v1017 = vperm.slane %v1009, %v1016
          %v1018 = vrot.slane %v995, 4
          %v1019 = vsel %vm745, %v1018, %v987
          %v1020 = vrot.slane %v987, 4
          %v1021 = vsel %vm745, %v995, %v1020
          %v1023 = vunpack.c.l.s4 1983009808
          %v1024 = vunpack.c.0.s8 %v1023
          %v1025 = vperm.slane %v1019, %v1024
          %v1027 = vunpack.c.l.s4 1983009808
          %v1028 = vunpack.c.0.s8 %v1027
          %v1029 = vperm.slane %v1021, %v1028
          %v1030 = vrot.slane %v1025, 4
          %v1031 = vsel %vm745, %v1030, %v1013
          %v1032 = vrot.slane %v1013, 4
          %v1033 = vsel %vm745, %v1025, %v1032
          %v1035 = vunpack.c.l.s4 1934713408
          %v1036 = vunpack.c.0.s8 %v1035
          %v1037 = vperm.slane %v1031, %v1036
          %v1039 = vunpack.c.l.s4 1934713408
          %v1040 = vunpack.c.0.s8 %v1039
          %v1041 = vperm.slane %v1033, %v1040
          %v1042 = vrot.slane %v1029, 4
          %v1043 = vsel %vm745, %v1042, %v1017
          %v1044 = vrot.slane %v1017, 4
          %v1045 = vsel %vm745, %v1029, %v1044
          %v1047 = vunpack.c.l.s4 1934713408
          %v1048 = vunpack.c.0.s8 %v1047
          %v1049 = vperm.slane %v1043, %v1048
          %v1051 = vunpack.c.l.s4 1934713408
          %v1052 = vunpack.c.0.s8 %v1051
          %v1053 = vperm.slane %v1045, %v1052
          %v1054 = vrot.slane %v1037, 4
          %v1055 = vsel %vm745, 0.0, %v1054
          %v1056 = vrot.slane %v1041, 4
          %v1057 = vsel %vm745, 0.0, %v1056
          %v1058 = vrot.slane %v1049, 4
          %v1059 = vsel %vm745, 0.0, %v1058
          %v1060 = vrot.slane %v1053, 4
          %v1061 = vsel %vm745, 0.0, %v1060
          %v1062 = vrot.slane %v993, 4
          %v1063 = vsel %vm745, %v1062, %v985
          %v1064 = vrot.slane %v985, 4
          %v1065 = vsel %vm745, %v993, %v1064
          %v1067 = vunpack.c.l.s4 1983009808
          %v1068 = vunpack.c.0.s8 %v1067
          %v1069 = vperm.slane %v1063, %v1068
          %v1071 = vunpack.c.l.s4 1983009808
          %v1072 = vunpack.c.0.s8 %v1071
          %v1073 = vperm.slane %v1065, %v1072
          %v1074 = vrot.slane %v997, 4
          %v1075 = vsel %vm745, %v1074, %v989
          %v1076 = vrot.slane %v989, 4
          %v1077 = vsel %vm745, %v997, %v1076
          %v1079 = vunpack.c.l.s4 1983009808
          %v1080 = vunpack.c.0.s8 %v1079
          %v1081 = vperm.slane %v1075, %v1080
          %v1083 = vunpack.c.l.s4 1983009808
          %v1084 = vunpack.c.0.s8 %v1083
          %v1085 = vperm.slane %v1077, %v1084
          %v1086 = vrot.slane %v1081, 4
          %v1087 = vsel %vm745, %v1086, %v1069
          %v1088 = vrot.slane %v1069, 4
          %v1089 = vsel %vm745, %v1081, %v1088
          %v1091 = vunpack.c.l.s4 1934713408
          %v1092 = vunpack.c.0.s8 %v1091
          %v1093 = vperm.slane %v1087, %v1092
          %v1095 = vunpack.c.l.s4 1934713408
          %v1096 = vunpack.c.0.s8 %v1095
          %v1097 = vperm.slane %v1089, %v1096
          %v1098 = vrot.slane %v1085, 4
          %v1099 = vsel %vm745, %v1098, %v1073
          %v1100 = vrot.slane %v1073, 4
          %v1101 = vsel %vm745, %v1085, %v1100
          %v1103 = vunpack.c.l.s4 1934713408
          %v1104 = vunpack.c.0.s8 %v1103
          %v1105 = vperm.slane %v1099, %v1104
          %v1107 = vunpack.c.l.s4 1934713408
          %v1108 = vunpack.c.0.s8 %v1107
          %v1109 = vperm.slane %v1101, %v1108
          %v1110 = vrot.slane %v1093, 4
          %v1111 = vsel %vm745, 0.0, %v1110
          %v1112 = vrot.slane %v1097, 4
          %v1113 = vsel %vm745, 0.0, %v1112
          %v1114 = vrot.slane %v1105, 4
          %v1115 = vsel %vm745, 0.0, %v1114
          %v1116 = vrot.slane %v1109, 4
          %v1117 = vsel %vm745, 0.0, %v1116
          %v1118 = vsel %vm745, %v1056, %v1037
          %v1120 = vunpack.c.l.s4 1983009808
          %v1121 = vunpack.c.0.s8 %v1120
          %v1122 = vperm.slane %v1118, %v1121
          %v1123 = vrot.slane %v1057, 4
          %v1124 = vsel %vm745, %v1123, %v1055
          %v1126 = vunpack.c.l.s4 1983009808
          %v1127 = vunpack.c.0.s8 %v1126
          %v1128 = vperm.slane %v1124, %v1127
          %v1129 = vsel %vm745, %v1060, %v1049
          %v1131 = vunpack.c.l.s4 1983009808
          %v1132 = vunpack.c.0.s8 %v1131
          %v1133 = vperm.slane %v1129, %v1132
          %v1134 = vrot.slane %v1061, 4
          %v1135 = vsel %vm745, %v1134, %v1059
          %v1137 = vunpack.c.l.s4 1983009808
          %v1138 = vunpack.c.0.s8 %v1137
          %v1139 = vperm.slane %v1135, %v1138
          %v1140 = vrot.slane %v1128, 4
          %v1141 = vsel %vm745, %v1140, %v1122
          %v1142 = vrot.slane %v1122, 4
          %v1143 = vsel %vm745, %v1128, %v1142
          %v1145 = vunpack.c.l.s4 1934713408
          %v1146 = vunpack.c.0.s8 %v1145
          %v1147 = vperm.slane %v1141, %v1146
          %v1149 = vunpack.c.l.s4 1934713408
          %v1150 = vunpack.c.0.s8 %v1149
          %v1151 = vperm.slane %v1143, %v1150
          %v1152 = vrot.slane %v1139, 4
          %v1153 = vsel %vm745, %v1152, %v1133
          %v1154 = vrot.slane %v1133, 4
          %v1155 = vsel %vm745, %v1139, %v1154
          %v1157 = vunpack.c.l.s4 1934713408
          %v1158 = vunpack.c.0.s8 %v1157
          %v1159 = vperm.slane %v1153, %v1158
          %v1161 = vunpack.c.l.s4 1934713408
          %v1162 = vunpack.c.0.s8 %v1161
          %v1163 = vperm.slane %v1155, %v1162
          %v1164 = vrot.slane %v1159, 4
          %v1165 = vsel %vm745, %v1164, %v1147
          %v1166 = vrot.slane %v1147, 4
          %v1167 = vsel %vm745, %v1159, %v1166
          %v1168 = vrot.slane %v1163, 4
          %v1169 = vsel %vm745, %v1168, %v1151
          %v1170 = vrot.slane %v1151, 4
          %v1171 = vsel %vm745, %v1163, %v1170
          %v1172 = vsel %vm745, %v1112, %v1093
          %v1174 = vunpack.c.l.s4 1983009808
          %v1175 = vunpack.c.0.s8 %v1174
          %v1176 = vperm.slane %v1172, %v1175
          %v1177 = vrot.slane %v1113, 4
          %v1178 = vsel %vm745, %v1177, %v1111
          %v1180 = vunpack.c.l.s4 1983009808
          %v1181 = vunpack.c.0.s8 %v1180
          %v1182 = vperm.slane %v1178, %v1181
          %v1183 = vsel %vm745, %v1116, %v1105
          %v1185 = vunpack.c.l.s4 1983009808
          %v1186 = vunpack.c.0.s8 %v1185
          %v1187 = vperm.slane %v1183, %v1186
          %v1188 = vrot.slane %v1117, 4
          %v1189 = vsel %vm745, %v1188, %v1115
          %v1191 = vunpack.c.l.s4 1983009808
          %v1192 = vunpack.c.0.s8 %v1191
          %v1193 = vperm.slane %v1189, %v1192
          %v1194 = vrot.slane %v1182, 4
          %v1195 = vsel %vm745, %v1194, %v1176
          %v1196 = vrot.slane %v1176, 4
          %v1197 = vsel %vm745, %v1182, %v1196
          %v1199 = vunpack.c.l.s4 1934713408
          %v1200 = vunpack.c.0.s8 %v1199
          %v1201 = vperm.slane %v1195, %v1200
          %v1203 = vunpack.c.l.s4 1934713408
          %v1204 = vunpack.c.0.s8 %v1203
          %v1205 = vperm.slane %v1197, %v1204
          %v1206 = vrot.slane %v1193, 4
          %v1207 = vsel %vm745, %v1206, %v1187
          %v1208 = vrot.slane %v1187, 4
          %v1209 = vsel %vm745, %v1193, %v1208
          %v1211 = vunpack.c.l.s4 1934713408
          %v1212 = vunpack.c.0.s8 %v1211
          %v1213 = vperm.slane %v1207, %v1212
          %v1215 = vunpack.c.l.s4 1934713408
          %v1216 = vunpack.c.0.s8 %v1215
          %v1217 = vperm.slane %v1209, %v1216
          %v1218 = vrot.slane %v1213, 4
          %v1219 = vsel %vm745, %v1218, %v1201
          %v1220 = vrot.slane %v1201, 4
          %v1221 = vsel %vm745, %v1213, %v1220
          %v1222 = vrot.slane %v1217, 4
          %v1223 = vsel %vm745, %v1222, %v1205
          %v1224 = vrot.slane %v1205, 4
          %v1225 = vsel %vm745, %v1217, %v1224
          %v1226 = vpack.c.bf16 %v1165, %v1165
          %v1227 = vpack.c.bf16 %v1167, %v1167
          %v1228 = vpack.c.bf16 %v1169, %v1169
          %v1229 = vpack.c.bf16 %v1171, %v1171
          %v1230 = vpack.c.bf16 %v1219, %v1219
          %v1231 = vpack.c.bf16 %v1221, %v1221
          %v1232 = vpack.c.bf16 %v1223, %v1223
          %v1233 = vpack.c.bf16 %v1225, %v1225
          %1234 = vst.msk [vmem:[#allocation3] sm:$0xf] %vm973, %v1226
          %1235 = vst.msk [vmem:[#allocation3 + $0x4] sm:$0xf] %vm973, %v1227
          %1236 = vst.msk [vmem:[#allocation3 + $0x8] sm:$0xf] %vm973, %v1228
          %1237 = vst.msk [vmem:[#allocation3 + $0xc] sm:$0xf] %vm973, %v1229
          %1238 = vst.msk [vmem:[#allocation3 + $0x10] sm:$0xf] %vm973, %v1230
          %1239 = vst.msk [vmem:[#allocation3 + $0x14] sm:$0xf] %vm973, %v1231
          %1240 = vst.msk [vmem:[#allocation3 + $0x18] sm:$0xf] %vm973, %v1232
          %1241 = vst.msk [vmem:[#allocation3 + $0x1c] sm:$0xf] %vm973, %v1233
        $region104: #{tpu_custom_call.1} parent=83 // pred_fallthru
          _
        %s1242 = smul.u32 %s43, 8
        %s1243 = scalar_lea.vmem %s674, %s1242
        %v1244 = vld [vmem:[%s1243] sm:$0xff]
        %v1245 = vld [vmem:[%s1243 + $0x8] sm:$0xff]
        %v1246 = vpack.c.bf16 %v1245, %v1244
        %v1247 = vld [vmem:[#allocation4] sm:$0xf]
        %v1248 = vld [vmem:[#allocation4 + $0x4] sm:$0xf]
        %v1249 = vld [vmem:[#allocation4 + $0x8] sm:$0xf]
        %v1250 = vld [vmem:[#allocation4 + $0xc] sm:$0xf]
        %v1251 = vld [vmem:[%s3] sm:$0x1]
        %v1253 = vperm.slane %v1251, 0
        %v1259 = vunpack.c.l.b16 %v1247
        %v1260 = vunpack.c.l.b16 %v1248
        %v1261 = vunpack.c.l.b16 %v1249
        %v1262 = vunpack.c.l.b16 %v1250
        %v1263 = vpack.c.b16 %v1260, %v1259
        %v1264 = vpack.c.b16 %v1262, %v1261
        %vm1267 = vcmask 261120
        %v1269 = vsel %vm1267, %v1246, 0
        %1271 = vmatpush.bf16.msra.mxu0 0
        %1272 = vmatpush.bf16.msra.mxu0 0
        %1273 = vmatpush.bf16.msra.mxu0 0
        %1274 = vmatpush.bf16.msra.mxu0 0
        %1275 = vmatpush.bf16.msra.mxu0 0
        %1276 = vmatpush.bf16.msra.mxu0 0
        %1277 = vmatpush.bf16.msra.mxu0 %v1264
        %1278 = vmatpush.bf16.msra.mxu0 %v1263
        %1279 = vmatmul.bf16.gmra.mxu0 %v1269
        %v1280 = vpop.f32.mrf.mxu0
        %v1281 = vadd.f32 %v1253, %v1280
        %v1282 = vpop.f32.mrf.mxu0
        %v1283 = vadd.f32 %v1253, %v1282
        %1284 = vdwg.mxu0
        %1287 = vrot.lane.b32.xlu0 %v1281, 120
        %v1288 = vpop.permute.xlu0 %1287
        %1289 = vrot.lane.b32.xlu0 %v1283, 120
        %v1290 = vpop.permute.xlu0 %1289
        %1293 = vrot.lane.b32.xlu0 %v1281, 112
        %v1294 = vpop.permute.xlu0 %1293
        %1295 = vrot.lane.b32.xlu0 %v1283, 112
        %v1296 = vpop.permute.xlu0 %1295
        %1299 = vrot.lane.b32.xlu0 %v1281, 104
        %v1300 = vpop.permute.xlu0 %1299
        %1301 = vrot.lane.b32.xlu0 %v1283, 104
        %v1302 = vpop.permute.xlu0 %1301
        %v1305 = vrot.slane %v1294, 4
        %vm1306 = vcmask 1047556
        %v1307 = vsel %vm1306, %v1305, %v1281
        %v1308 = vrot.slane %v1281, 4
        %v1309 = vsel %vm1306, %v1294, %v1308
        %v1311 = vunpack.c.l.s4 1983009808
        %v1312 = vunpack.c.0.s8 %v1311
        %v1313 = vperm.slane %v1307, %v1312
        %v1315 = vunpack.c.l.s4 1983009808
        %v1316 = vunpack.c.0.s8 %v1315
        %v1317 = vperm.slane %v1309, %v1316
        %v1318 = vrot.slane %v1300, 4
        %v1319 = vsel %vm1306, %v1318, %v1288
        %v1320 = vrot.slane %v1288, 4
        %v1321 = vsel %vm1306, %v1300, %v1320
        %v1323 = vunpack.c.l.s4 1983009808
        %v1324 = vunpack.c.0.s8 %v1323
        %v1325 = vperm.slane %v1319, %v1324
        %v1327 = vunpack.c.l.s4 1983009808
        %v1328 = vunpack.c.0.s8 %v1327
        %v1329 = vperm.slane %v1321, %v1328
        %v1330 = vrot.slane %v1325, 4
        %v1331 = vsel %vm1306, %v1330, %v1313
        %v1332 = vrot.slane %v1313, 4
        %v1333 = vsel %vm1306, %v1325, %v1332
        %v1335 = vunpack.c.l.s4 1934713408
        %v1336 = vunpack.c.0.s8 %v1335
        %v1337 = vperm.slane %v1331, %v1336
        %v1339 = vunpack.c.l.s4 1934713408
        %v1340 = vunpack.c.0.s8 %v1339
        %v1341 = vperm.slane %v1333, %v1340
        %v1342 = vrot.slane %v1329, 4
        %v1343 = vsel %vm1306, %v1342, %v1317
        %v1344 = vrot.slane %v1317, 4
        %v1345 = vsel %vm1306, %v1329, %v1344
        %v1347 = vunpack.c.l.s4 1934713408
        %v1348 = vunpack.c.0.s8 %v1347
        %v1349 = vperm.slane %v1343, %v1348
        %v1351 = vunpack.c.l.s4 1934713408
        %v1352 = vunpack.c.0.s8 %v1351
        %v1353 = vperm.slane %v1345, %v1352
        %v1354 = vrot.slane %v1337, 4
        %v1355 = vsel %vm1306, 0.0, %v1354
        %v1356 = vrot.slane %v1341, 4
        %v1357 = vsel %vm1306, 0.0, %v1356
        %v1358 = vrot.slane %v1349, 4
        %v1359 = vsel %vm1306, 0.0, %v1358
        %v1360 = vrot.slane %v1353, 4
        %v1361 = vsel %vm1306, 0.0, %v1360
        %v1362 = vrot.slane %v1296, 4
        %v1363 = vsel %vm1306, %v1362, %v1283
        %v1364 = vrot.slane %v1283, 4
        %v1365 = vsel %vm1306, %v1296, %v1364
        %v1367 = vunpack.c.l.s4 1983009808
        %v1368 = vunpack.c.0.s8 %v1367
        %v1369 = vperm.slane %v1363, %v1368
        %v1371 = vunpack.c.l.s4 1983009808
        %v1372 = vunpack.c.0.s8 %v1371
        %v1373 = vperm.slane %v1365, %v1372
        %v1374 = vrot.slane %v1302, 4
        %v1375 = vsel %vm1306, %v1374, %v1290
        %v1376 = vrot.slane %v1290, 4
        %v1377 = vsel %vm1306, %v1302, %v1376
        %v1379 = vunpack.c.l.s4 1983009808
        %v1380 = vunpack.c.0.s8 %v1379
        %v1381 = vperm.slane %v1375, %v1380
        %v1383 = vunpack.c.l.s4 1983009808
        %v1384 = vunpack.c.0.s8 %v1383
        %v1385 = vperm.slane %v1377, %v1384
        %v1386 = vrot.slane %v1381, 4
        %v1387 = vsel %vm1306, %v1386, %v1369
        %v1388 = vrot.slane %v1369, 4
        %v1389 = vsel %vm1306, %v1381, %v1388
        %v1391 = vunpack.c.l.s4 1934713408
        %v1392 = vunpack.c.0.s8 %v1391
        %v1393 = vperm.slane %v1387, %v1392
        %v1395 = vunpack.c.l.s4 1934713408
        %v1396 = vunpack.c.0.s8 %v1395
        %v1397 = vperm.slane %v1389, %v1396
        %v1398 = vrot.slane %v1385, 4
        %v1399 = vsel %vm1306, %v1398, %v1373
        %v1400 = vrot.slane %v1373, 4
        %v1401 = vsel %vm1306, %v1385, %v1400
        %v1403 = vunpack.c.l.s4 1934713408
        %v1404 = vunpack.c.0.s8 %v1403
        %v1405 = vperm.slane %v1399, %v1404
        %v1407 = vunpack.c.l.s4 1934713408
        %v1408 = vunpack.c.0.s8 %v1407
        %v1409 = vperm.slane %v1401, %v1408
        %v1410 = vrot.slane %v1393, 4
        %v1411 = vsel %vm1306, 0.0, %v1410
        %v1412 = vrot.slane %v1397, 4
        %v1413 = vsel %vm1306, 0.0, %v1412
        %v1414 = vrot.slane %v1405, 4
        %v1415 = vsel %vm1306, 0.0, %v1414
        %v1416 = vrot.slane %v1409, 4
        %v1417 = vsel %vm1306, 0.0, %v1416
        %v1418 = vsel %vm1306, %v1356, %v1337
        %v1420 = vunpack.c.l.s4 1983009808
        %v1421 = vunpack.c.0.s8 %v1420
        %v1422 = vperm.slane %v1418, %v1421
        %v1423 = vrot.slane %v1357, 4
        %v1424 = vsel %vm1306, %v1423, %v1355
        %v1426 = vunpack.c.l.s4 1983009808
        %v1427 = vunpack.c.0.s8 %v1426
        %v1428 = vperm.slane %v1424, %v1427
        %v1429 = vsel %vm1306, %v1360, %v1349
        %v1431 = vunpack.c.l.s4 1983009808
        %v1432 = vunpack.c.0.s8 %v1431
        %v1433 = vperm.slane %v1429, %v1432
        %v1434 = vrot.slane %v1361, 4
        %v1435 = vsel %vm1306, %v1434, %v1359
        %v1437 = vunpack.c.l.s4 1983009808
        %v1438 = vunpack.c.0.s8 %v1437
        %v1439 = vperm.slane %v1435, %v1438
        %v1440 = vrot.slane %v1428, 4
        %v1441 = vsel %vm1306, %v1440, %v1422
        %v1442 = vrot.slane %v1422, 4
        %v1443 = vsel %vm1306, %v1428, %v1442
        %v1445 = vunpack.c.l.s4 1934713408
        %v1446 = vunpack.c.0.s8 %v1445
        %v1447 = vperm.slane %v1441, %v1446
        %v1449 = vunpack.c.l.s4 1934713408
        %v1450 = vunpack.c.0.s8 %v1449
        %v1451 = vperm.slane %v1443, %v1450
        %v1452 = vrot.slane %v1439, 4
        %v1453 = vsel %vm1306, %v1452, %v1433
        %v1454 = vrot.slane %v1433, 4
        %v1455 = vsel %vm1306, %v1439, %v1454
        %v1457 = vunpack.c.l.s4 1934713408
        %v1458 = vunpack.c.0.s8 %v1457
        %v1459 = vperm.slane %v1453, %v1458
        %v1461 = vunpack.c.l.s4 1934713408
        %v1462 = vunpack.c.0.s8 %v1461
        %v1463 = vperm.slane %v1455, %v1462
        %v1464 = vrot.slane %v1459, 4
        %v1465 = vsel %vm1306, %v1464, %v1447
        %v1466 = vrot.slane %v1447, 4
        %v1467 = vsel %vm1306, %v1459, %v1466
        %v1468 = vrot.slane %v1463, 4
        %v1469 = vsel %vm1306, %v1468, %v1451
        %v1470 = vrot.slane %v1451, 4
        %v1471 = vsel %vm1306, %v1463, %v1470
        %v1472 = vsel %vm1306, %v1412, %v1393
        %v1474 = vunpack.c.l.s4 1983009808
        %v1475 = vunpack.c.0.s8 %v1474
        %v1476 = vperm.slane %v1472, %v1475
        %v1477 = vrot.slane %v1413, 4
        %v1478 = vsel %vm1306, %v1477, %v1411
        %v1480 = vunpack.c.l.s4 1983009808
        %v1481 = vunpack.c.0.s8 %v1480
        %v1482 = vperm.slane %v1478, %v1481
        %v1483 = vsel %vm1306, %v1416, %v1405
        %v1485 = vunpack.c.l.s4 1983009808
        %v1486 = vunpack.c.0.s8 %v1485
        %v1487 = vperm.slane %v1483, %v1486
        %v1488 = vrot.slane %v1417, 4
        %v1489 = vsel %vm1306, %v1488, %v1415
        %v1491 = vunpack.c.l.s4 1983009808
        %v1492 = vunpack.c.0.s8 %v1491
        %v1493 = vperm.slane %v1489, %v1492
        %v1494 = vrot.slane %v1482, 4
        %v1495 = vsel %vm1306, %v1494, %v1476
        %v1496 = vrot.slane %v1476, 4
        %v1497 = vsel %vm1306, %v1482, %v1496
        %v1499 = vunpack.c.l.s4 1934713408
        %v1500 = vunpack.c.0.s8 %v1499
        %v1501 = vperm.slane %v1495, %v1500
        %v1503 = vunpack.c.l.s4 1934713408
        %v1504 = vunpack.c.0.s8 %v1503
        %v1505 = vperm.slane %v1497, %v1504
        %v1506 = vrot.slane %v1493, 4
        %v1507 = vsel %vm1306, %v1506, %v1487
        %v1508 = vrot.slane %v1487, 4
        %v1509 = vsel %vm1306, %v1493, %v1508
        %v1511 = vunpack.c.l.s4 1934713408
        %v1512 = vunpack.c.0.s8 %v1511
        %v1513 = vperm.slane %v1507, %v1512
        %v1515 = vunpack.c.l.s4 1934713408
        %v1516 = vunpack.c.0.s8 %v1515
        %v1517 = vperm.slane %v1509, %v1516
        %v1518 = vrot.slane %v1513, 4
        %v1519 = vsel %vm1306, %v1518, %v1501
        %v1520 = vrot.slane %v1501, 4
        %v1521 = vsel %vm1306, %v1513, %v1520
        %v1522 = vrot.slane %v1517, 4
        %v1523 = vsel %vm1306, %v1522, %v1505
        %v1524 = vrot.slane %v1505, 4
        %v1525 = vsel %vm1306, %v1517, %v1524
        %v1526 = vpack.c.bf16 %v1465, %v1465
        %v1527 = vpack.c.bf16 %v1467, %v1467
        %v1528 = vpack.c.bf16 %v1469, %v1469
        %v1529 = vpack.c.bf16 %v1471, %v1471
        %v1530 = vpack.c.bf16 %v1519, %v1519
        %v1531 = vpack.c.bf16 %v1521, %v1521
        %v1532 = vpack.c.bf16 %v1523, %v1523
        %v1533 = vpack.c.bf16 %v1525, %v1525
        %v1534 = vld [vmem:[#allocation2] sm:$0xf]
        %v1535 = vld [vmem:[#allocation2 + $0x4] sm:$0xf]
        %v1536 = vld [vmem:[#allocation2 + $0x8] sm:$0xf]
        %v1537 = vld [vmem:[#allocation2 + $0xc] sm:$0xf]
        %v1538 = vld [vmem:[#allocation2 + $0x10] sm:$0xf]
        %v1539 = vld [vmem:[#allocation2 + $0x14] sm:$0xf]
        %v1540 = vld [vmem:[#allocation2 + $0x18] sm:$0xf]
        %v1541 = vld [vmem:[#allocation2 + $0x1c] sm:$0xf]
        %vm1542 = vcmask 64512
        %v1544 = vsel %vm1542, %v1526, 0
        %v1547 = vsel %vm1542, %v1534, 0
        %1549 = vmatpush.bf16.xpose.msra.mxu0 0
        %1550 = vmatpush.bf16.xpose.msra.mxu0 0
        %1551 = vmatpush.bf16.xpose.msra.mxu0 0
        %1552 = vmatpush.bf16.xpose.msra.mxu0 0
        %1553 = vmatpush.bf16.xpose.msra.mxu0 0
        %1554 = vmatpush.bf16.xpose.msra.mxu0 0
        %1555 = vmatpush.bf16.xpose.msra.mxu0 0
        %1556 = vmatpush.bf16.xpose.msra.mxu0 %v1547
        %1557 = vmatmul.bf16.gmra.mxu0 %v1544
        %v1558 = vpop.f32.mrf.mxu0
        %v1559 = vadd.f32 0.0, %v1558
        %v1560 = vpop.f32.mrf.mxu0
        %1561 = vdwg.mxu0
        %v1563 = vsel %vm1542, %v1527, 0
        %v1566 = vsel %vm1542, %v1535, 0
        %1568 = vmatpush.bf16.xpose.msra.mxu0 0
        %1569 = vmatpush.bf16.xpose.msra.mxu0 0
        %1570 = vmatpush.bf16.xpose.msra.mxu0 0
        %1571 = vmatpush.bf16.xpose.msra.mxu0 0
        %1572 = vmatpush.bf16.xpose.msra.mxu0 0
        %1573 = vmatpush.bf16.xpose.msra.mxu0 0
        %1574 = vmatpush.bf16.xpose.msra.mxu0 0
        %1575 = vmatpush.bf16.xpose.msra.mxu0 %v1566
        %1576 = vmatmul.bf16.gmra.mxu0 %v1563
        %v1577 = vpop.f32.mrf.mxu0
        %v1578 = vadd.f32 0.0, %v1577
        %v1579 = vpop.f32.mrf.mxu0
        %1580 = vdwg.mxu0
        %v1582 = vsel %vm1542, %v1528, 0
        %v1585 = vsel %vm1542, %v1536, 0
        %1587 = vmatpush.bf16.xpose.msra.mxu0 0
        %1588 = vmatpush.bf16.xpose.msra.mxu0 0
        %1589 = vmatpush.bf16.xpose.msra.mxu0 0
        %1590 = vmatpush.bf16.xpose.msra.mxu0 0
        %1591 = vmatpush.bf16.xpose.msra.mxu0 0
        %1592 = vmatpush.bf16.xpose.msra.mxu0 0
        %1593 = vmatpush.bf16.xpose.msra.mxu0 0
        %1594 = vmatpush.bf16.xpose.msra.mxu0 %v1585
        %1595 = vmatmul.bf16.gmra.mxu0 %v1582
        %v1596 = vpop.f32.mrf.mxu0
        %v1597 = vadd.f32 0.0, %v1596
        %v1598 = vpop.f32.mrf.mxu0
        %1599 = vdwg.mxu0
        %v1601 = vsel %vm1542, %v1529, 0
        %v1604 = vsel %vm1542, %v1537, 0
        %1606 = vmatpush.bf16.xpose.msra.mxu0 0
        %1607 = vmatpush.bf16.xpose.msra.mxu0 0
        %1608 = vmatpush.bf16.xpose.msra.mxu0 0
        %1609 = vmatpush.bf16.xpose.msra.mxu0 0
        %1610 = vmatpush.bf16.xpose.msra.mxu0 0
        %1611 = vmatpush.bf16.xpose.msra.mxu0 0
        %1612 = vmatpush.bf16.xpose.msra.mxu0 0
        %1613 = vmatpush.bf16.xpose.msra.mxu0 %v1604
        %1614 = vmatmul.bf16.gmra.mxu0 %v1601
        %v1615 = vpop.f32.mrf.mxu0
        %v1616 = vadd.f32 0.0, %v1615
        %v1617 = vpop.f32.mrf.mxu0
        %1618 = vdwg.mxu0
        %v1620 = vsel %vm1542, %v1530, 0
        %v1623 = vsel %vm1542, %v1538, 0
        %1625 = vmatpush.bf16.xpose.msra.mxu0 0
        %1626 = vmatpush.bf16.xpose.msra.mxu0 0
        %1627 = vmatpush.bf16.xpose.msra.mxu0 0
        %1628 = vmatpush.bf16.xpose.msra.mxu0 0
        %1629 = vmatpush.bf16.xpose.msra.mxu0 0
        %1630 = vmatpush.bf16.xpose.msra.mxu0 0
        %1631 = vmatpush.bf16.xpose.msra.mxu0 0
        %1632 = vmatpush.bf16.xpose.msra.mxu0 %v1623
        %1633 = vmatmul.bf16.gmra.mxu0 %v1620
        %v1634 = vpop.f32.mrf.mxu0
        %v1635 = vadd.f32 0.0, %v1634
        %v1636 = vpop.f32.mrf.mxu0
        %1637 = vdwg.mxu0
        %v1639 = vsel %vm1542, %v1531, 0
        %v1642 = vsel %vm1542, %v1539, 0
        %1644 = vmatpush.bf16.xpose.msra.mxu0 0
        %1645 = vmatpush.bf16.xpose.msra.mxu0 0
        %1646 = vmatpush.bf16.xpose.msra.mxu0 0
        %1647 = vmatpush.bf16.xpose.msra.mxu0 0
        %1648 = vmatpush.bf16.xpose.msra.mxu0 0
        %1649 = vmatpush.bf16.xpose.msra.mxu0 0
        %1650 = vmatpush.bf16.xpose.msra.mxu0 0
        %1651 = vmatpush.bf16.xpose.msra.mxu0 %v1642
        %1652 = vmatmul.bf16.gmra.mxu0 %v1639
        %v1653 = vpop.f32.mrf.mxu0
        %v1654 = vadd.f32 0.0, %v1653
        %v1655 = vpop.f32.mrf.mxu0
        %1656 = vdwg.mxu0
        %v1658 = vsel %vm1542, %v1532, 0
        %v1661 = vsel %vm1542, %v1540, 0
        %1663 = vmatpush.bf16.xpose.msra.mxu0 0
        %1664 = vmatpush.bf16.xpose.msra.mxu0 0
        %1665 = vmatpush.bf16.xpose.msra.mxu0 0
        %1666 = vmatpush.bf16.xpose.msra.mxu0 0
        %1667 = vmatpush.bf16.xpose.msra.mxu0 0
        %1668 = vmatpush.bf16.xpose.msra.mxu0 0
        %1669 = vmatpush.bf16.xpose.msra.mxu0 0
        %1670 = vmatpush.bf16.xpose.msra.mxu0 %v1661
        %1671 = vmatmul.bf16.gmra.mxu0 %v1658
        %v1672 = vpop.f32.mrf.mxu0
        %v1673 = vadd.f32 0.0, %v1672
        %v1674 = vpop.f32.mrf.mxu0
        %1675 = vdwg.mxu0
        %v1677 = vsel %vm1542, %v1533, 0
        %v1680 = vsel %vm1542, %v1541, 0
        %1682 = vmatpush.bf16.xpose.msra.mxu0 0
        %1683 = vmatpush.bf16.xpose.msra.mxu0 0
        %1684 = vmatpush.bf16.xpose.msra.mxu0 0
        %1685 = vmatpush.bf16.xpose.msra.mxu0 0
        %1686 = vmatpush.bf16.xpose.msra.mxu0 0
        %1687 = vmatpush.bf16.xpose.msra.mxu0 0
        %1688 = vmatpush.bf16.xpose.msra.mxu0 0
        %1689 = vmatpush.bf16.xpose.msra.mxu0 %v1680
        %1690 = vmatmul.bf16.gmra.mxu0 %v1677
        %v1691 = vpop.f32.mrf.mxu0
        %v1692 = vadd.f32 0.0, %v1691
        %v1693 = vpop.f32.mrf.mxu0
        %1694 = vdwg.mxu0
        %v1695 = vld [vmem:[%s668] sm:$0xf]
        %v1696 = vld [vmem:[%s668 + $0x4] sm:$0xf]
        %v1697 = vunpack.c.l.bf16 %v1695
        %v1698 = vunpack.c.l.bf16 %v1696
        %v1699 = vadd.f32 %v1559, %v1697
        %v1700 = vadd.f32 %v1578, %v1697
        %v1701 = vadd.f32 %v1597, %v1697
        %v1702 = vadd.f32 %v1616, %v1697
        %v1703 = vadd.f32 %v1635, %v1698
        %v1704 = vadd.f32 %v1654, %v1698
        %v1705 = vadd.f32 %v1673, %v1698
        %v1706 = vadd.f32 %v1692, %v1698
        %v1707 = vsel %vm1542, %v1699, -inf
        %1708 = vmax.xlane.f32.xlu0 %v1707
        %v1709 = vpop.xlane.xlu0 %1708
        %v1710 = vsel %vm1542, %v1700, -inf
        %1711 = vmax.xlane.f32.xlu0 %v1710
        %v1712 = vpop.xlane.xlu0 %1711
        %v1713 = vsel %vm1542, %v1701, -inf
        %1714 = vmax.xlane.f32.xlu0 %v1713
        %v1715 = vpop.xlane.xlu0 %1714
        %v1716 = vsel %vm1542, %v1702, -inf
        %1717 = vmax.xlane.f32.xlu0 %v1716
        %v1718 = vpop.xlane.xlu0 %1717
        %v1719 = vsel %vm1542, %v1703, -inf
        %1720 = vmax.xlane.f32.xlu0 %v1719
        %v1721 = vpop.xlane.xlu0 %1720
        %v1722 = vsel %vm1542, %v1704, -inf
        %1723 = vmax.xlane.f32.xlu0 %v1722
        %v1724 = vpop.xlane.xlu0 %1723
        %v1725 = vsel %vm1542, %v1705, -inf
        %1726 = vmax.xlane.f32.xlu0 %v1725
        %v1727 = vpop.xlane.xlu0 %1726
        %v1728 = vsel %vm1542, %v1706, -inf
        %1729 = vmax.xlane.f32.xlu0 %v1728
        %v1730 = vpop.xlane.xlu0 %1729
        %v1731 = vsub.f32 %v1699, %v1709
        %v1732 = vsub.f32 %v1700, %v1712
        %v1733 = vsub.f32 %v1701, %v1715
        %v1734 = vsub.f32 %v1702, %v1718
        %v1735 = vsub.f32 %v1703, %v1721
        %v1736 = vsub.f32 %v1704, %v1724
        %v1737 = vsub.f32 %v1705, %v1727
        %v1738 = vsub.f32 %v1706, %v1730
        %v1739 = vmul.f32 %v1731, 1.442695
        %v1740 = vpow.pop %v1739
        %v1741 = vmul.f32 %v1732, 1.442695
        %v1742 = vpow.pop %v1741
        %v1743 = vmul.f32 %v1733, 1.442695
        %v1744 = vpow.pop %v1743
        %v1745 = vmul.f32 %v1734, 1.442695
        %v1746 = vpow.pop %v1745
        %v1747 = vmul.f32 %v1735, 1.442695
        %v1748 = vpow.pop %v1747
        %v1749 = vmul.f32 %v1736, 1.442695
        %v1750 = vpow.pop %v1749
        %v1751 = vmul.f32 %v1737, 1.442695
        %v1752 = vpow.pop %v1751
        %v1753 = vmul.f32 %v1738, 1.442695
        %v1754 = vpow.pop %v1753
        %v1755 = vsel %vm1542, %v1740, 0.0
        %1756 = vadd.xlane.f32.xlu0 %v1755
        %v1757 = vpop.xlane.xlu0 %1756
        %v1758 = vsel %vm1542, %v1742, 0.0
        %1759 = vadd.xlane.f32.xlu0 %v1758
        %v1760 = vpop.xlane.xlu0 %1759
        %v1761 = vsel %vm1542, %v1744, 0.0
        %1762 = vadd.xlane.f32.xlu0 %v1761
        %v1763 = vpop.xlane.xlu0 %1762
        %v1764 = vsel %vm1542, %v1746, 0.0
        %1765 = vadd.xlane.f32.xlu0 %v1764
        %v1766 = vpop.xlane.xlu0 %1765
        %v1767 = vsel %vm1542, %v1748, 0.0
        %1768 = vadd.xlane.f32.xlu0 %v1767
        %v1769 = vpop.xlane.xlu0 %1768
        %v1770 = vsel %vm1542, %v1750, 0.0
        %1771 = vadd.xlane.f32.xlu0 %v1770
        %v1772 = vpop.xlane.xlu0 %1771
        %v1773 = vsel %vm1542, %v1752, 0.0
        %1774 = vadd.xlane.f32.xlu0 %v1773
        %v1775 = vpop.xlane.xlu0 %1774
        %v1776 = vsel %vm1542, %v1754, 0.0
        %1777 = vadd.xlane.f32.xlu0 %v1776
        %v1778 = vpop.xlane.xlu0 %1777
        %v1779 = vrcp.pop %v1757
        %v1780 = vrcp.pop %v1760
        %v1781 = vrcp.pop %v1763
        %v1782 = vrcp.pop %v1766
        %v1783 = vrcp.pop %v1769
        %v1784 = vrcp.pop %v1772
        %v1785 = vrcp.pop %v1775
        %v1786 = vrcp.pop %v1778
        %v1787 = vmul.f32 %v1757, %v1779
        %v1788 = vmul.f32 %v1760, %v1780
        %v1789 = vmul.f32 %v1763, %v1781
        %v1790 = vmul.f32 %v1766, %v1782
        %v1791 = vmul.f32 %v1769, %v1783
        %v1792 = vmul.f32 %v1772, %v1784
        %v1793 = vmul.f32 %v1775, %v1785
        %v1794 = vmul.f32 %v1778, %v1786
        %v1795 = vsub.f32 2.0, %v1787
        %v1796 = vsub.f32 2.0, %v1788
        %v1797 = vsub.f32 2.0, %v1789
        %v1798 = vsub.f32 2.0, %v1790
        %v1799 = vsub.f32 2.0, %v1791
        %v1800 = vsub.f32 2.0, %v1792
        %v1801 = vsub.f32 2.0, %v1793
        %v1802 = vsub.f32 2.0, %v1794
        %v1803 = vmul.f32 %v1779, %v1795
        %v1804 = vmul.f32 %v1780, %v1796
        %v1805 = vmul.f32 %v1781, %v1797
        %v1806 = vmul.f32 %v1782, %v1798
        %v1807 = vmul.f32 %v1783, %v1799
        %v1808 = vmul.f32 %v1784, %v1800
        %v1809 = vmul.f32 %v1785, %v1801
        %v1810 = vmul.f32 %v1786, %v1802
        %v1811 = vmul.f32 %v1740, %v1803
        %v1812 = vmul.f32 %v1742, %v1804
        %v1813 = vmul.f32 %v1744, %v1805
        %v1814 = vmul.f32 %v1746, %v1806
        %v1815 = vmul.f32 %v1748, %v1807
        %v1816 = vmul.f32 %v1750, %v1808
        %v1817 = vmul.f32 %v1752, %v1809
        %v1818 = vmul.f32 %v1754, %v1810
        %v1819 = vpack.c.bf16 %v1811, %v1811
        %v1820 = vpack.c.bf16 %v1812, %v1812
        %v1821 = vpack.c.bf16 %v1813, %v1813
        %v1822 = vpack.c.bf16 %v1814, %v1814
        %v1823 = vpack.c.bf16 %v1815, %v1815
        %v1824 = vpack.c.bf16 %v1816, %v1816
        %v1825 = vpack.c.bf16 %v1817, %v1817
        %v1826 = vpack.c.bf16 %v1818, %v1818
        %vm1827 = vcmask 60416
        %1828 = vst.msk [vmem:[%s660] sm:$0xf] %vm1827, %v1819
        %1829 = vst.msk [vmem:[%s660 + $0x4] sm:$0xf] %vm1827, %v1820
        %1830 = vst.msk [vmem:[%s660 + $0x8] sm:$0xf] %vm1827, %v1821
        %1831 = vst.msk [vmem:[%s660 + $0xc] sm:$0xf] %vm1827, %v1822
        %1832 = vst.msk [vmem:[%s660 + $0x10] sm:$0xf] %vm1827, %v1823
        %1833 = vst.msk [vmem:[%s660 + $0x14] sm:$0xf] %vm1827, %v1824
        %1834 = vst.msk [vmem:[%s660 + $0x18] sm:$0xf] %vm1827, %v1825
        %1835 = vst.msk [vmem:[%s660 + $0x1c] sm:$0xf] %vm1827, %v1826
        %v1836 = vld [vmem:[#allocation3] sm:$0xf]
        %v1837 = vld [vmem:[#allocation3 + $0x4] sm:$0xf]
        %v1838 = vld [vmem:[#allocation3 + $0x8] sm:$0xf]
        %v1839 = vld [vmem:[#allocation3 + $0xc] sm:$0xf]
        %v1840 = vld [vmem:[#allocation3 + $0x10] sm:$0xf]
        %v1841 = vld [vmem:[#allocation3 + $0x14] sm:$0xf]
        %v1842 = vld [vmem:[#allocation3 + $0x18] sm:$0xf]
        %v1843 = vld [vmem:[#allocation3 + $0x1c] sm:$0xf]
        %v1845 = vsel %vm1542, %v1819, 0
        %vm1847 = vcmask 1043456
        %v1849 = vsel %vm1847, %v1836, 0
        %1851 = vmatpush.bf16.msra.mxu0 0
        %1852 = vmatpush.bf16.msra.mxu0 0
        %1853 = vmatpush.bf16.msra.mxu0 0
        %1854 = vmatpush.bf16.msra.mxu0 0
        %1855 = vmatpush.bf16.msra.mxu0 0
        %1856 = vmatpush.bf16.msra.mxu0 0
        %1857 = vmatpush.bf16.msra.mxu0 0
        %1858 = vmatpush.bf16.msra.mxu0 %v1849
        %1859 = vmatmul.bf16.gmra.mxu0 %v1845
        %v1860 = vpop.f32.mrf.mxu0
        %v1861 = vadd.f32 0.0, %v1860
        %v1862 = vpop.f32.mrf.mxu0
        %1863 = vdwg.mxu0
        %v1865 = vsel %vm1542, %v1820, 0
        %v1868 = vsel %vm1847, %v1837, 0
        %1870 = vmatpush.bf16.msra.mxu0 0
        %1871 = vmatpush.bf16.msra.mxu0 0
        %1872 = vmatpush.bf16.msra.mxu0 0
        %1873 = vmatpush.bf16.msra.mxu0 0
        %1874 = vmatpush.bf16.msra.mxu0 0
        %1875 = vmatpush.bf16.msra.mxu0 0
        %1876 = vmatpush.bf16.msra.mxu0 0
        %1877 = vmatpush.bf16.msra.mxu0 %v1868
        %1878 = vmatmul.bf16.gmra.mxu0 %v1865
        %v1879 = vpop.f32.mrf.mxu0
        %v1880 = vadd.f32 0.0, %v1879
        %v1881 = vpop.f32.mrf.mxu0
        %1882 = vdwg.mxu0
        %v1884 = vsel %vm1542, %v1821, 0
        %v1887 = vsel %vm1847, %v1838, 0
        %1889 = vmatpush.bf16.msra.mxu0 0
        %1890 = vmatpush.bf16.msra.mxu0 0
        %1891 = vmatpush.bf16.msra.mxu0 0
        %1892 = vmatpush.bf16.msra.mxu0 0
        %1893 = vmatpush.bf16.msra.mxu0 0
        %1894 = vmatpush.bf16.msra.mxu0 0
        %1895 = vmatpush.bf16.msra.mxu0 0
        %1896 = vmatpush.bf16.msra.mxu0 %v1887
        %1897 = vmatmul.bf16.gmra.mxu0 %v1884
        %v1898 = vpop.f32.mrf.mxu0
        %v1899 = vadd.f32 0.0, %v1898
        %v1900 = vpop.f32.mrf.mxu0
        %1901 = vdwg.mxu0
        %v1903 = vsel %vm1542, %v1822, 0
        %v1906 = vsel %vm1847, %v1839, 0
        %1908 = vmatpush.bf16.msra.mxu0 0
        %1909 = vmatpush.bf16.msra.mxu0 0
        %1910 = vmatpush.bf16.msra.mxu0 0
        %1911 = vmatpush.bf16.msra.mxu0 0
        %1912 = vmatpush.bf16.msra.mxu0 0
        %1913 = vmatpush.bf16.msra.mxu0 0
        %1914 = vmatpush.bf16.msra.mxu0 0
        %1915 = vmatpush.bf16.msra.mxu0 %v1906
        %1916 = vmatmul.bf16.gmra.mxu0 %v1903
        %v1917 = vpop.f32.mrf.mxu0
        %v1918 = vadd.f32 0.0, %v1917
        %v1919 = vpop.f32.mrf.mxu0
        %1920 = vdwg.mxu0
        %v1922 = vsel %vm1542, %v1823, 0
        %v1925 = vsel %vm1847, %v1840, 0
        %1927 = vmatpush.bf16.msra.mxu0 0
        %1928 = vmatpush.bf16.msra.mxu0 0
        %1929 = vmatpush.bf16.msra.mxu0 0
        %1930 = vmatpush.bf16.msra.mxu0 0
        %1931 = vmatpush.bf16.msra.mxu0 0
        %1932 = vmatpush.bf16.msra.mxu0 0
        %1933 = vmatpush.bf16.msra.mxu0 0
        %1934 = vmatpush.bf16.msra.mxu0 %v1925
        %1935 = vmatmul.bf16.gmra.mxu0 %v1922
        %v1936 = vpop.f32.mrf.mxu0
        %v1937 = vadd.f32 0.0, %v1936
        %v1938 = vpop.f32.mrf.mxu0
        %1939 = vdwg.mxu0
        %v1941 = vsel %vm1542, %v1824, 0
        %v1944 = vsel %vm1847, %v1841, 0
        %1946 = vmatpush.bf16.msra.mxu0 0
        %1947 = vmatpush.bf16.msra.mxu0 0
        %1948 = vmatpush.bf16.msra.mxu0 0
        %1949 = vmatpush.bf16.msra.mxu0 0
        %1950 = vmatpush.bf16.msra.mxu0 0
        %1951 = vmatpush.bf16.msra.mxu0 0
        %1952 = vmatpush.bf16.msra.mxu0 0
        %1953 = vmatpush.bf16.msra.mxu0 %v1944
        %1954 = vmatmul.bf16.gmra.mxu0 %v1941
        %v1955 = vpop.f32.mrf.mxu0
        %v1956 = vadd.f32 0.0, %v1955
        %v1957 = vpop.f32.mrf.mxu0
        %1958 = vdwg.mxu0
        %v1960 = vsel %vm1542, %v1825, 0
        %v1963 = vsel %vm1847, %v1842, 0
        %1965 = vmatpush.bf16.msra.mxu0 0
        %1966 = vmatpush.bf16.msra.mxu0 0
        %1967 = vmatpush.bf16.msra.mxu0 0
        %1968 = vmatpush.bf16.msra.mxu0 0
        %1969 = vmatpush.bf16.msra.mxu0 0
        %1970 = vmatpush.bf16.msra.mxu0 0
        %1971 = vmatpush.bf16.msra.mxu0 0
        %1972 = vmatpush.bf16.msra.mxu0 %v1963
        %1973 = vmatmul.bf16.gmra.mxu0 %v1960
        %v1974 = vpop.f32.mrf.mxu0
        %v1975 = vadd.f32 0.0, %v1974
        %v1976 = vpop.f32.mrf.mxu0
        %1977 = vdwg.mxu0
        %v1979 = vsel %vm1542, %v1826, 0
        %v1982 = vsel %vm1847, %v1843, 0
        %1984 = vmatpush.bf16.msra.mxu0 0
        %1985 = vmatpush.bf16.msra.mxu0 0
        %1986 = vmatpush.bf16.msra.mxu0 0
        %1987 = vmatpush.bf16.msra.mxu0 0
        %1988 = vmatpush.bf16.msra.mxu0 0
        %1989 = vmatpush.bf16.msra.mxu0 0
        %1990 = vmatpush.bf16.msra.mxu0 0
        %1991 = vmatpush.bf16.msra.mxu0 %v1982
        %1992 = vmatmul.bf16.gmra.mxu0 %v1979
        %v1993 = vpop.f32.mrf.mxu0
        %v1994 = vadd.f32 0.0, %v1993
        %v1995 = vpop.f32.mrf.mxu0
        %1996 = vdwg.mxu0
        %v1997 = vrot.slane %v1899, 4
        %v1998 = vsel %vm1306, %v1997, %v1861
        %v1999 = vrot.slane %v1861, 4
        %v2000 = vsel %vm1306, %v1899, %v1999
        %v2002 = vunpack.c.l.s4 1983009808
        %v2003 = vunpack.c.0.s8 %v2002
        %v2004 = vperm.slane %v1998, %v2003
        %v2006 = vunpack.c.l.s4 1983009808
        %v2007 = vunpack.c.0.s8 %v2006
        %v2008 = vperm.slane %v2000, %v2007
        %v2009 = vrot.slane %v1918, 4
        %v2010 = vsel %vm1306, %v2009, %v1880
        %v2011 = vrot.slane %v1880, 4
        %v2012 = vsel %vm1306, %v1918, %v2011
        %v2014 = vunpack.c.l.s4 1983009808
        %v2015 = vunpack.c.0.s8 %v2014
        %v2016 = vperm.slane %v2010, %v2015
        %v2018 = vunpack.c.l.s4 1983009808
        %v2019 = vunpack.c.0.s8 %v2018
        %v2020 = vperm.slane %v2012, %v2019
        %v2021 = vrot.slane %v2016, 4
        %v2022 = vsel %vm1306, %v2021, %v2004
        %v2023 = vrot.slane %v2004, 4
        %v2024 = vsel %vm1306, %v2016, %v2023
        %v2026 = vunpack.c.l.s4 1934713408
        %v2027 = vunpack.c.0.s8 %v2026
        %v2028 = vperm.slane %v2022, %v2027
        %v2030 = vunpack.c.l.s4 1934713408
        %v2031 = vunpack.c.0.s8 %v2030
        %v2032 = vperm.slane %v2024, %v2031
        %v2033 = vrot.slane %v2020, 4
        %v2034 = vsel %vm1306, %v2033, %v2008
        %v2035 = vrot.slane %v2008, 4
        %v2036 = vsel %vm1306, %v2020, %v2035
        %v2038 = vunpack.c.l.s4 1934713408
        %v2039 = vunpack.c.0.s8 %v2038
        %v2040 = vperm.slane %v2034, %v2039
        %v2042 = vunpack.c.l.s4 1934713408
        %v2043 = vunpack.c.0.s8 %v2042
        %v2044 = vperm.slane %v2036, %v2043
        %v2045 = vrot.slane %v2028, 4
        %v2046 = vsel %vm1306, 0.0, %v2045
        %v2047 = vrot.slane %v2032, 4
        %v2048 = vsel %vm1306, 0.0, %v2047
        %v2049 = vrot.slane %v2040, 4
        %v2050 = vsel %vm1306, 0.0, %v2049
        %v2051 = vrot.slane %v2044, 4
        %v2052 = vsel %vm1306, 0.0, %v2051
        %v2053 = vrot.slane %v1975, 4
        %v2054 = vsel %vm1306, %v2053, %v1937
        %v2055 = vrot.slane %v1937, 4
        %v2056 = vsel %vm1306, %v1975, %v2055
        %v2058 = vunpack.c.l.s4 1983009808
        %v2059 = vunpack.c.0.s8 %v2058
        %v2060 = vperm.slane %v2054, %v2059
        %v2062 = vunpack.c.l.s4 1983009808
        %v2063 = vunpack.c.0.s8 %v2062
        %v2064 = vperm.slane %v2056, %v2063
        %v2065 = vrot.slane %v1994, 4
        %v2066 = vsel %vm1306, %v2065, %v1956
        %v2067 = vrot.slane %v1956, 4
        %v2068 = vsel %vm1306, %v1994, %v2067
        %v2070 = vunpack.c.l.s4 1983009808
        %v2071 = vunpack.c.0.s8 %v2070
        %v2072 = vperm.slane %v2066, %v2071
        %v2074 = vunpack.c.l.s4 1983009808
        %v2075 = vunpack.c.0.s8 %v2074
        %v2076 = vperm.slane %v2068, %v2075
        %v2077 = vrot.slane %v2072, 4
        %v2078 = vsel %vm1306, %v2077, %v2060
        %v2079 = vrot.slane %v2060, 4
        %v2080 = vsel %vm1306, %v2072, %v2079
        %v2082 = vunpack.c.l.s4 1934713408
        %v2083 = vunpack.c.0.s8 %v2082
        %v2084 = vperm.slane %v2078, %v2083
        %v2086 = vunpack.c.l.s4 1934713408
        %v2087 = vunpack.c.0.s8 %v2086
        %v2088 = vperm.slane %v2080, %v2087
        %v2089 = vrot.slane %v2076, 4
        %v2090 = vsel %vm1306, %v2089, %v2064
        %v2091 = vrot.slane %v2064, 4
        %v2092 = vsel %vm1306, %v2076, %v2091
        %v2094 = vunpack.c.l.s4 1934713408
        %v2095 = vunpack.c.0.s8 %v2094
        %v2096 = vperm.slane %v2090, %v2095
        %v2098 = vunpack.c.l.s4 1934713408
        %v2099 = vunpack.c.0.s8 %v2098
        %v2100 = vperm.slane %v2092, %v2099
        %v2101 = vrot.slane %v2084, 4
        %v2102 = vsel %vm1306, 0.0, %v2101
        %v2103 = vrot.slane %v2088, 4
        %v2104 = vsel %vm1306, 0.0, %v2103
        %v2105 = vrot.slane %v2096, 4
        %v2106 = vsel %vm1306, 0.0, %v2105
        %v2107 = vrot.slane %v2100, 4
        %v2108 = vsel %vm1306, 0.0, %v2107
        %v2109 = vsel %vm1306, %v2047, %v2028
        %v2111 = vunpack.c.l.s4 1983009808
        %v2112 = vunpack.c.0.s8 %v2111
        %v2113 = vperm.slane %v2109, %v2112
        %v2114 = vrot.slane %v2048, 4
        %v2115 = vsel %vm1306, %v2114, %v2046
        %v2117 = vunpack.c.l.s4 1983009808
        %v2118 = vunpack.c.0.s8 %v2117
        %v2119 = vperm.slane %v2115, %v2118
        %v2120 = vsel %vm1306, %v2051, %v2040
        %v2122 = vunpack.c.l.s4 1983009808
        %v2123 = vunpack.c.0.s8 %v2122
        %v2124 = vperm.slane %v2120, %v2123
        %v2125 = vrot.slane %v2052, 4
        %v2126 = vsel %vm1306, %v2125, %v2050
        %v2128 = vunpack.c.l.s4 1983009808
        %v2129 = vunpack.c.0.s8 %v2128
        %v2130 = vperm.slane %v2126, %v2129
        %v2131 = vrot.slane %v2119, 4
        %v2132 = vsel %vm1306, %v2131, %v2113
        %v2133 = vrot.slane %v2113, 4
        %v2134 = vsel %vm1306, %v2119, %v2133
        %v2136 = vunpack.c.l.s4 1934713408
        %v2137 = vunpack.c.0.s8 %v2136
        %v2138 = vperm.slane %v2132, %v2137
        %v2140 = vunpack.c.l.s4 1934713408
        %v2141 = vunpack.c.0.s8 %v2140
        %v2142 = vperm.slane %v2134, %v2141
        %v2143 = vrot.slane %v2130, 4
        %v2144 = vsel %vm1306, %v2143, %v2124
        %v2145 = vrot.slane %v2124, 4
        %v2146 = vsel %vm1306, %v2130, %v2145
        %v2148 = vunpack.c.l.s4 1934713408
        %v2149 = vunpack.c.0.s8 %v2148
        %v2150 = vperm.slane %v2144, %v2149
        %v2152 = vunpack.c.l.s4 1934713408
        %v2153 = vunpack.c.0.s8 %v2152
        %v2154 = vperm.slane %v2146, %v2153
        %v2155 = vrot.slane %v2150, 4
        %v2156 = vsel %vm1306, %v2155, %v2138
        %v2157 = vrot.slane %v2138, 4
        %v2158 = vsel %vm1306, %v2150, %v2157
        %v2159 = vrot.slane %v2154, 4
        %v2160 = vsel %vm1306, %v2159, %v2142
        %v2161 = vrot.slane %v2142, 4
        %v2162 = vsel %vm1306, %v2154, %v2161
        %v2163 = vsel %vm1306, %v2103, %v2084
        %v2165 = vunpack.c.l.s4 1983009808
        %v2166 = vunpack.c.0.s8 %v2165
        %v2167 = vperm.slane %v2163, %v2166
        %v2168 = vrot.slane %v2104, 4
        %v2169 = vsel %vm1306, %v2168, %v2102
        %v2171 = vunpack.c.l.s4 1983009808
        %v2172 = vunpack.c.0.s8 %v2171
        %v2173 = vperm.slane %v2169, %v2172
        %v2174 = vsel %vm1306, %v2107, %v2096
        %v2176 = vunpack.c.l.s4 1983009808
        %v2177 = vunpack.c.0.s8 %v2176
        %v2178 = vperm.slane %v2174, %v2177
        %v2179 = vrot.slane %v2108, 4
        %v2180 = vsel %vm1306, %v2179, %v2106
        %v2182 = vunpack.c.l.s4 1983009808
        %v2183 = vunpack.c.0.s8 %v2182
        %v2184 = vperm.slane %v2180, %v2183
        %v2185 = vrot.slane %v2173, 4
        %v2186 = vsel %vm1306, %v2185, %v2167
        %v2187 = vrot.slane %v2167, 4
        %v2188 = vsel %vm1306, %v2173, %v2187
        %v2190 = vunpack.c.l.s4 1934713408
        %v2191 = vunpack.c.0.s8 %v2190
        %v2192 = vperm.slane %v2186, %v2191
        %v2194 = vunpack.c.l.s4 1934713408
        %v2195 = vunpack.c.0.s8 %v2194
        %v2196 = vperm.slane %v2188, %v2195
        %v2197 = vrot.slane %v2184, 4
        %v2198 = vsel %vm1306, %v2197, %v2178
        %v2199 = vrot.slane %v2178, 4
        %v2200 = vsel %vm1306, %v2184, %v2199
        %v2202 = vunpack.c.l.s4 1934713408
        %v2203 = vunpack.c.0.s8 %v2202
        %v2204 = vperm.slane %v2198, %v2203
        %v2206 = vunpack.c.l.s4 1934713408
        %v2207 = vunpack.c.0.s8 %v2206
        %v2208 = vperm.slane %v2200, %v2207
        %v2209 = vrot.slane %v2204, 4
        %v2210 = vsel %vm1306, %v2209, %v2192
        %v2211 = vrot.slane %v2192, 4
        %v2212 = vsel %vm1306, %v2204, %v2211
        %v2213 = vrot.slane %v2208, 4
        %v2214 = vsel %vm1306, %v2213, %v2196
        %v2215 = vrot.slane %v2196, 4
        %v2216 = vsel %vm1306, %v2208, %v2215
        %2219 = vrot.lane.b32.xlu0 %v2158, 8
        %v2220 = vpop.permute.xlu0 %2219
        %2221 = vrot.lane.b32.xlu0 %v2212, 8
        %v2222 = vpop.permute.xlu0 %2221
        %2227 = vrot.lane.b32.xlu0 %v2160, 16
        %v2228 = vpop.permute.xlu0 %2227
        %2229 = vrot.lane.b32.xlu0 %v2214, 16
        %v2230 = vpop.permute.xlu0 %2229
        %2235 = vrot.lane.b32.xlu0 %v2162, 24
        %v2236 = vpop.permute.xlu0 %2235
        %2237 = vrot.lane.b32.xlu0 %v2216, 24
        %v2238 = vpop.permute.xlu0 %2237
        %v2241 = vsel %vm1542, %v2156, %v2220
        %v2242 = vsel %vm1542, %v2210, %v2222
        %vm2243 = vcmask 130048
        %v2244 = vsel %vm2243, %v2241, %v2228
        %v2245 = vsel %vm2243, %v2242, %v2230
        %vm2246 = vcmask 195584
        %v2247 = vsel %vm2246, %v2244, %v2236
        %v2248 = vsel %vm2246, %v2245, %v2238
        %v2249 = vpack.c.bf16 %v2248, %v2247
        %v2250 = vld [vmem:[#allocation9] sm:$0xf]
        %v2251 = vld [vmem:[#allocation9 + $0x4] sm:$0xf]
        %v2252 = vld [vmem:[#allocation9 + $0x8] sm:$0xf]
        %v2253 = vld [vmem:[#allocation9 + $0xc] sm:$0xf]
        %v2254 = vld [vmem:[%s7] sm:$0x1]
        %v2256 = vperm.slane %v2254, 0
        %v2262 = vunpack.c.l.b16 %v2250
        %v2263 = vunpack.c.l.b16 %v2251
        %v2264 = vunpack.c.l.b16 %v2252
        %v2265 = vunpack.c.l.b16 %v2253
        %v2266 = vpack.c.b16 %v2263, %v2262
        %v2267 = vpack.c.b16 %v2265, %v2264
        %v2271 = vsel %vm1267, %v2249, 0
        %2273 = vmatpush.bf16.msra.mxu0 0
        %2274 = vmatpush.bf16.msra.mxu0 0
        %2275 = vmatpush.bf16.msra.mxu0 0
        %2276 = vmatpush.bf16.msra.mxu0 0
        %2277 = vmatpush.bf16.msra.mxu0 0
        %2278 = vmatpush.bf16.msra.mxu0 0
        %2279 = vmatpush.bf16.msra.mxu0 %v2267
        %2280 = vmatpush.bf16.msra.mxu0 %v2266
        %2281 = vmatmul.bf16.gmra.mxu0 %v2271
        %v2282 = vpop.f32.mrf.mxu0
        %v2283 = vadd.f32 %v2256, %v2282
        %v2284 = vpop.f32.mrf.mxu0
        %v2285 = vadd.f32 %v2256, %v2284
        %2286 = vdwg.mxu0
        %v2287 = vadd.f32 %v2283, %v1244
        %v2288 = vadd.f32 %v2285, %v1245
        %v2289 = vadd.f32 %v1244, %v2287
        %v2290 = vadd.f32 %v1245, %v2288
        %v2291 = vsel %vm1267, %v2289, 0.0
        %2292 = vadd.xlane.f32.xlu0 %v2291
        %v2293 = vpop.xlane.xlu0 %2292
        %v2294 = vsel %vm1267, %v2290, 0.0
        %2295 = vadd.xlane.f32.xlu0 %v2294
        %v2296 = vpop.xlane.xlu0 %2295
        %v2297 = vrcp.pop 32.0
        %v2298 = vmul.f32 32.0, %v2297
        %v2299 = vsub.f32 1.0, %v2298
        %v2300 = vmul.f32 %v2297, %v2299
        %v2301 = vadd.f32 %v2297, %v2300
        %vm2302 = vweird.f32 %v2297
        %v2303 = vsel %vm2302, %v2297, %v2301
        %v2304 = vmul.f32 %v2293, %v2303
        %v2305 = vmul.f32 %v2296, %v2303
        %v2306 = vsub.f32 %v2289, %v2304
        %v2307 = vsub.f32 %v2290, %v2305
        %v2308 = vmul.f32 %v2306, %v2306
        %v2309 = vmul.f32 %v2307, %v2307
        %v2310 = vsel %vm1267, %v2308, 0.0
        %2311 = vadd.xlane.f32.xlu0 %v2310
        %v2312 = vpop.xlane.xlu0 %2311
        %v2313 = vsel %vm1267, %v2309, 0.0
        %2314 = vadd.xlane.f32.xlu0 %v2313
        %v2315 = vpop.xlane.xlu0 %2314
        %v2316 = vmul.f32 %v2312, %v2303
        %v2317 = vmul.f32 %v2315, %v2303
        %v2318 = vadd.f32 %v2316, 1e-06
        %v2319 = vadd.f32 %v2317, 1e-06
        %v2320 = vrsqrt.pop %v2318
        %v2321 = vmul.f32 %v2320, %v2318
        %v2322 = vmul.f32 %v2321, %v2320
        %v2323 = vmul.f32 0.5, %v2322
        %v2324 = vsub.f32 1.5, %v2323
        %v2325 = vmul.f32 %v2320, %v2324
        %vm2326 = vweird.f32 %v2318
        %vm2327 = vweird.f32 %v2320
        %vm2328 = vmor %vm2326, %vm2327
        %v2329 = vsel %vm2328, %v2320, %v2325
        %v2330 = vrsqrt.pop %v2319
        %v2331 = vmul.f32 %v2330, %v2319
        %v2332 = vmul.f32 %v2331, %v2330
        %v2333 = vmul.f32 0.5, %v2332
        %v2334 = vsub.f32 1.5, %v2333
        %v2335 = vmul.f32 %v2330, %v2334
        %vm2336 = vweird.f32 %v2319
        %vm2337 = vweird.f32 %v2330
        %vm2338 = vmor %vm2336, %vm2337
        %v2339 = vsel %vm2338, %v2330, %v2335
        %v2340 = vmul.f32 %v2306, %v2329
        %v2341 = vmul.f32 %v2307, %v2339
        %v2342 = vld [vmem:[%s8] sm:$0x1]
        %v2344 = vperm.slane %v2342, 0
        %v2346 = vmul.f32 %v2340, %v2344
        %v2347 = vmul.f32 %v2341, %v2344
        %v2348 = vld [vmem:[%s9] sm:$0x1]
        %v2350 = vperm.slane %v2348, 0
        %v2352 = vadd.f32 %v2346, %v2350
        %v2353 = vadd.f32 %v2347, %v2350
        %v2354 = vpack.c.bf16 %v2353, %v2352
        %v2355 = vld [vmem:[#allocation10] sm:$0xf]
        %v2356 = vld [vmem:[#allocation10 + $0x4] sm:$0xf]
        %v2357 = vld [vmem:[#allocation10 + $0x8] sm:$0xf]
        %v2358 = vld [vmem:[#allocation10 + $0xc] sm:$0xf]
        %v2359 = vld [vmem:[%s11] sm:$0x1]
        %v2361 = vperm.slane %v2359, 0
        %v2367 = vunpack.c.l.b16 %v2355
        %v2368 = vunpack.c.l.b16 %v2356
        %v2369 = vunpack.c.l.b16 %v2357
        %v2370 = vunpack.c.l.b16 %v2358
        %v2371 = vpack.c.b16 %v2368, %v2367
        %v2372 = vpack.c.b16 %v2370, %v2369
        %v2376 = vsel %vm1267, %v2354, 0
        %2378 = vmatpush.bf16.msra.mxu0 0
        %2379 = vmatpush.bf16.msra.mxu0 0
        %2380 = vmatpush.bf16.msra.mxu0 0
        %2381 = vmatpush.bf16.msra.mxu0 0
        %2382 = vmatpush.bf16.msra.mxu0 0
        %2383 = vmatpush.bf16.msra.mxu0 0
        %2384 = vmatpush.bf16.msra.mxu0 %v2372
        %2385 = vmatpush.bf16.msra.mxu0 %v2371
        %2386 = vmatmul.bf16.gmra.mxu0 %v2376
        %v2387 = vpop.f32.mrf.mxu0
        %v2388 = vadd.f32 %v2361, %v2387
        %v2389 = vpop.f32.mrf.mxu0
        %v2390 = vadd.f32 %v2361, %v2389
        %2391 = vdwg.mxu0
        %v2392 = vmax.f32 %v2388, 0.0
        %v2393 = vmax.f32 %v2390, 0.0
        %v2394 = vpack.c.bf16 %v2393, %v2392
        %v2395 = vld [vmem:[%s12] sm:$0xf]
        %v2396 = vld [vmem:[%s12 + $0x4] sm:$0xf]
        %v2397 = vld [vmem:[%s12 + $0x8] sm:$0xf]
        %v2398 = vld [vmem:[%s12 + $0xc] sm:$0xf]
        %v2399 = vld [vmem:[%s12 + $0x10] sm:$0xf]
        %v2400 = vld [vmem:[%s12 + $0x14] sm:$0xf]
        %v2401 = vld [vmem:[%s12 + $0x18] sm:$0xf]
        %v2402 = vld [vmem:[%s12 + $0x1c] sm:$0xf]
        %v2403 = vld [vmem:[%s13] sm:$0x1]
        %v2405 = vperm.slane %v2403, 0
        %v2415 = vunpack.c.l.b16 %v2395
        %v2416 = vunpack.c.l.b16 %v2396
        %v2417 = vunpack.c.l.b16 %v2397
        %v2418 = vunpack.c.l.b16 %v2398
        %v2419 = vunpack.c.l.b16 %v2399
        %v2420 = vunpack.c.l.b16 %v2400
        %v2421 = vunpack.c.l.b16 %v2401
        %v2422 = vunpack.c.l.b16 %v2402
        %v2423 = vpack.c.b16 %v2416, %v2415
        %v2424 = vpack.c.b16 %v2418, %v2417
        %v2425 = vpack.c.b16 %v2420, %v2419
        %v2426 = vpack.c.b16 %v2422, %v2421
        %vm2431 = vcmask 523264
        %v2433 = vsel %vm2431, %v2394, 0
        %2435 = vmatpush.bf16.msra.mxu0 0
        %2436 = vmatpush.bf16.msra.mxu0 0
        %2437 = vmatpush.bf16.msra.mxu0 0
        %2438 = vmatpush.bf16.msra.mxu0 0
        %2439 = vmatpush.bf16.msra.mxu0 %v2426
        %2440 = vmatpush.bf16.msra.mxu0 %v2425
        %2441 = vmatpush.bf16.msra.mxu0 %v2424
        %2442 = vmatpush.bf16.msra.mxu0 %v2423
        %2443 = vmatmul.bf16.gmra.mxu0 %v2433
        %v2444 = vpop.f32.mrf.mxu0
        %v2445 = vadd.f32 %v2405, %v2444
        %v2446 = vpop.f32.mrf.mxu0
        %v2447 = vadd.f32 %v2405, %v2446
        %2448 = vdwg.mxu0
        %v2449 = vadd.f32 %v2352, %v2445
        %v2450 = vadd.f32 %v2353, %v2447
        %v2451 = vsel %vm1267, %v2449, 0.0
        %2452 = vadd.xlane.f32.xlu0 %v2451
        %v2453 = vpop.xlane.xlu0 %2452
        %v2454 = vsel %vm1267, %v2450, 0.0
        %2455 = vadd.xlane.f32.xlu0 %v2454
        %v2456 = vpop.xlane.xlu0 %2455
        %v2457 = vmul.f32 %v2453, %v2303
        %v2458 = vmul.f32 %v2456, %v2303
        %v2459 = vsub.f32 %v2449, %v2457
        %v2460 = vsub.f32 %v2450, %v2458
        %v2461 = vmul.f32 %v2459, %v2459
        %v2462 = vmul.f32 %v2460, %v2460
        %v2463 = vsel %vm1267, %v2461, 0.0
        %2464 = vadd.xlane.f32.xlu0 %v2463
        %v2465 = vpop.xlane.xlu0 %2464
        %v2466 = vsel %vm1267, %v2462, 0.0
        %2467 = vadd.xlane.f32.xlu0 %v2466
        %v2468 = vpop.xlane.xlu0 %2467
        %v2469 = vmul.f32 %v2465, %v2303
        %v2470 = vmul.f32 %v2468, %v2303
        %v2471 = vadd.f32 %v2469, 1e-06
        %v2472 = vadd.f32 %v2470, 1e-06
        %v2473 = vrsqrt.pop %v2471
        %v2474 = vmul.f32 %v2473, %v2471
        %v2475 = vmul.f32 %v2474, %v2473
        %v2476 = vmul.f32 0.5, %v2475
        %v2477 = vsub.f32 1.5, %v2476
        %v2478 = vmul.f32 %v2473, %v2477
        %vm2479 = vweird.f32 %v2471
        %vm2480 = vweird.f32 %v2473
        %vm2481 = vmor %vm2479, %vm2480
        %v2482 = vsel %vm2481, %v2473, %v2478
        %v2483 = vrsqrt.pop %v2472
        %v2484 = vmul.f32 %v2483, %v2472
        %v2485 = vmul.f32 %v2484, %v2483
        %v2486 = vmul.f32 0.5, %v2485
        %v2487 = vsub.f32 1.5, %v2486
        %v2488 = vmul.f32 %v2483, %v2487
        %vm2489 = vweird.f32 %v2472
        %vm2490 = vweird.f32 %v2483
        %vm2491 = vmor %vm2489, %vm2490
        %v2492 = vsel %vm2491, %v2483, %v2488
        %v2493 = vmul.f32 %v2459, %v2482
        %v2494 = vmul.f32 %v2460, %v2492
        %v2495 = vld [vmem:[%s14] sm:$0x1]
        %v2497 = vperm.slane %v2495, 0
        %v2499 = vmul.f32 %v2493, %v2497
        %v2500 = vmul.f32 %v2494, %v2497
        %v2501 = vld [vmem:[%s15] sm:$0x1]
        %v2503 = vperm.slane %v2501, 0
        %v2505 = vadd.f32 %v2499, %v2503
        %v2506 = vadd.f32 %v2500, %v2503
        %2507 = vst.msk [vmem:[%s653] sm:$0xff] %vm1267, %v2505
        %2508 = vst.msk [vmem:[%s653 + $0x8] sm:$0xff] %vm1267, %v2506
        %s2509 = sand.u32 %s408, 1
        %s2510 = scalar_lea.sflag [#allocation6], %s2509
        %s2511 = sand.u32 %s408, 1
        %s2512 = smul.addr %s2511, 16
        %s2513 = scalar_lea.vmem [#allocation12], %s2512
        %s2514 = sand.u32 %s436, 1
        %s2515 = scalar_lea.sflag [#allocation14], %s2514
        %s2516 = sand.u32 %s436, 1
        %s2517 = smul.addr %s2516, 32
        %s2518 = scalar_lea.vmem [#allocation13], %s2517
        // Predicated region
        $region105: #{tpu_custom_call.1} parent=83 // pred_check
          %p2519 = pneg %p418
        $region106: #{tpu_custom_call.1} parent=83 // pred_check_branch
          %2521 = sbr.rel (%p2519) target = $region108
        $region107: #{tpu_custom_call.1} parent=83 // pred_region
          %s2522 = smul.u32 2, %s42
          %2524 = vsyncadd %s2510, 0
          %s2525 = sadd.s32 %s43, %s2522
          %s2526 = smul.addr %s2525, 8
          %s2527 = scalar_lea.hbm %s16, %s2526
          %s2528 = sshll.u32 %s2513, 4
          %s2529 = int_to_ptr.vmem [resolvable:$true] %s2528
          %s2530 = sshll.u32 %s2527, 4
          %s2531 = int_to_ptr.hbm [resolvable:$true] %s2530
          %2536 = dma.vmem_to_hbm [thread:$0]  %s2529, 256, %s2531, %s2510, 128, 128, 8
        $region108: #{tpu_custom_call.1} parent=83 // pred_fallthru
          _
        // Predicated region
        $region109: #{tpu_custom_call.1} parent=83 // pred_check
          %p2537 = pneg %p446
        $region110: #{tpu_custom_call.1} parent=83 // pred_check_branch
          %2539 = sbr.rel (%p2537) target = $region112
        $region111: #{tpu_custom_call.1} parent=83 // pred_region
          %s2540 = smul.u32 2, %s42
          %2542 = vsyncadd %s2515, 0
          %s2543 = smul.addr %s2540, 4
          %s2544 = sadd.s32 %s43, %s2543
          %s2545 = smul.addr %s2544, 4
          %s2546 = scalar_lea.hbm %s17, %s2545
          %s2547 = sshll.u32 %s2518, 4
          %s2548 = int_to_ptr.vmem [resolvable:$true] %s2547
          %s2549 = sshll.u32 %s2546, 4
          %s2550 = int_to_ptr.hbm [resolvable:$true] %s2549
          %2555 = dma.vmem_to_hbm [thread:$0]  %s2548, 512, %s2550, %s2515, 64, 64, 4
        $region112: #{tpu_custom_call.1} parent=83 // pred_fallthru
          _
      $region84: #{tpu_custom_call.1} parent=5 // pred_fallthru
        _
      %p2556 = scmp.le.s32.totalorder 2, %s33
      // Predicated region
      $region113: #{tpu_custom_call.1} parent=5 // pred_check
        %p2557 = pneg %p2556
      $region114: #{tpu_custom_call.1} parent=5 // pred_check_branch
        %2559 = sbr.rel (%p2557) target = $region116
      $region115: #{tpu_custom_call.1} parent=5 // pred_region
        %s2560 = ssub.s32 %s33, 2
        // Predicated region
        $region117: #{tpu_custom_call.1} parent=115 // pred_check
          %p2561 = pneg %p424
        $region118: #{tpu_custom_call.1} parent=115 // pred_check_branch
          %2563 = sbr.rel (%p2561) target = $region120
        $region119: #{tpu_custom_call.1} parent=115 // pred_region
          %s2564 = sand.u32 %s409, 1
          %s2565 = scalar_lea.sflag [#allocation6], %s2564
          %s2566 = sand.u32 %s409, 1
          %s2567 = smul.addr %s2566, 16
          %s2568 = scalar_lea.vmem [#allocation12], %s2567
          %2570 = dma.done %s2565, 256
        $region120: #{tpu_custom_call.1} parent=115 // pred_fallthru
          _
        // Predicated region
        $region121: #{tpu_custom_call.1} parent=115 // pred_check
          %p2571 = pneg %p452
        $region122: #{tpu_custom_call.1} parent=115 // pred_check_branch
          %2573 = sbr.rel (%p2571) target = $region124
        $region123: #{tpu_custom_call.1} parent=115 // pred_region
          %s2574 = sand.u32 %s437, 1
          %s2575 = scalar_lea.sflag [#allocation14], %s2574
          %s2576 = sand.u32 %s437, 1
          %s2577 = smul.addr %s2576, 32
          %s2578 = scalar_lea.vmem [#allocation13], %s2577
          %2580 = dma.done %s2575, 512
        $region124: #{tpu_custom_call.1} parent=115 // pred_fallthru
          _
      $region116: #{tpu_custom_call.1} parent=5 // pred_fallthru
        _
    $region6: #{tpu_custom_call.1} parent=1 // loop_footer
      %s37 = sadd.s32 1, %s33
    $region7: #{tpu_custom_call.1} parent=1 // loop_footer_branch
      %32 = sbr.rel target = $region3
    $region8: #{tpu_custom_call.1} parent=1 // loop_exit
      _
    %2581 = vsyncpa [#allocation5], 1
    %s2582 = scalar_lea.sflag [#allocation5], 1
    %2583 = vsyncpa %s2582, 1
    %2584 = vsyncpa [#allocation8], 1
    %2585 = vsyncpa [#allocation11], 1
    %2586 = vsyncpa [#allocation6], 1
    %s2587 = scalar_lea.sflag [#allocation6], 1
    %2588 = vsyncpa %s2587, 1
    %2589 = vsyncpa [#allocation14], 1
    %s2590 = scalar_lea.sflag [#allocation14], 1
    %2591 = vsyncpa %s2590, 1

</llo_original>
